<compile_context>
chip_gen: v6e
topology: v6e:2x2x1
jax: 0.10.0
libtpu: 0.0.40
codegen_flags: <defaults>
</compile_context>

<pallas_src>
import functools

import jax
import jax.numpy as jnp
from jax.experimental import pallas as pl
from jax.experimental.pallas import tpu as pltpu

BN_EPS = 1e-5
VMEM_LIMIT_BYTES = 48 * 1024 * 1024   # safe on v7x (64 MiB) and v5e/v6e (128 MiB)


def _round_up(x, m):
    return ((x + m - 1) // m) * m


# ----------------------------------------------------------------------------
# Pallas kernels
# ----------------------------------------------------------------------------
def _conv_bn_kernel(p_ref, w_ref, b_ref, *rest, relu, has_res):
    """im2col matmul with K-reduction accumulator, folded-BN bias,
    optional residual add and ReLU fused in the epilogue."""
    if has_res:
        r_ref, o_ref, acc_ref = rest
    else:
        o_ref, acc_ref = rest

    k = pl.program_id(1)

    @pl.when(k == 0)
    def _():
        acc_ref[...] = jnp.zeros_like(acc_ref)

    # bf16 x bf16 -> f32 accumulation on the MXU.
    acc_ref[...] += jnp.dot(p_ref[...], w_ref[...],
                            preferred_element_type=jnp.float32)

    @pl.when(k == pl.num_programs(1) - 1)
    def _():
        y = acc_ref[...] + b_ref[...]
        if has_res:
            y = y + r_ref[...].astype(jnp.float32)
        if relu:
            y = jnp.maximum(y, 0.0)
        o_ref[...] = y.astype(o_ref.dtype)


def _conv_bn_single_kernel(p_ref, w_ref, b_ref, *rest, relu, has_res):
    """Specialization for a single K step: no scratch accumulator round-trip."""
    if has_res:
        r_ref, o_ref = rest
    else:
        (o_ref,) = rest
    y = jnp.dot(p_ref[...], w_ref[...], preferred_element_type=jnp.float32)
    y = y + b_ref[...]
    if has_res:
        y = y + r_ref[...].astype(jnp.float32)
    if relu:
        y = jnp.maximum(y, 0.0)
    o_ref[...] = y.astype(o_ref.dtype)


def _maxpool_kernel(p_ref, o_ref):
    # p_ref: (9, TM, C) window taps -> max over the window axis.
    o_ref[...] = jnp.max(p_ref[...], axis=0)


# ----------------------------------------------------------------------------
# Conv + folded-BN (+ residual) (+ ReLU) via im2col + Pallas matmul
# ----------------------------------------------------------------------------
def _fold_bn_into_weights(w, gamma, beta, mean, var):
    inv_std = 1.0 / jnp.sqrt(var + BN_EPS)
    scale = gamma * inv_std                              # (cout,)
    bias = beta - mean * scale                           # (cout,)
    w_folded = w * scale[None, None, None, :]            # fold scale into weights
    return w_folded, bias


def conv2d_bn(x, w, *, gamma, beta, mean, var, stride, pad, relu, residual=None):
    """x: (N,H,W,Cin) bf16/f32.  w: (kh,kw,Cin,Cout) f32.  Returns (N,Ho,Wo,Cout) bf16."""
    kh, kw, cin, cout = w.shape
    N, H, W, C = x.shape
    assert C == cin
    x = x.astype(jnp.bfloat16)

    xp = jnp.pad(x, ((0, 0), (pad, pad), (pad, pad), (0, 0)))
    Ho = (H + 2 * pad - kh) // stride + 1
    Wo = (W + 2 * pad - kw) // stride + 1

    cols = []
    for i in range(kh):
        for j in range(kw):
            cols.append(xp[:, i:i + stride * (Ho - 1) + 1:stride,
                           j:j + stride * (Wo - 1) + 1:stride, :])
    patches = jnp.stack(cols, axis=3)                 # (N,Ho,Wo,kh*kw,Cin) bf16
    M = N * Ho * Wo
    K = kh * kw * cin
    patches = patches.reshape(M, K)

    w_folded, bias = _fold_bn_into_weights(w, gamma, beta, mean, var)
    w2d = w_folded.reshape(K, cout)

    # Lane-dense padding of K and Cout to multiples of 128, M-tile up to 512.
    K_p = _round_up(K, 128)
    Cout_p = _round_up(cout, 128)
    TM = min(512, _round_up(M, 8))
    Mp = _round_up(M, TM)

    patches_p = jnp.pad(patches, ((0, Mp - M), (0, K_p - K))).astype(jnp.bfloat16)
    w2d_p = jnp.pad(w2d, ((0, K_p - K), (0, Cout_p - cout))).astype(jnp.bfloat16)
    bias_p = jnp.pad(bias, (0, Cout_p - cout)).reshape(1, Cout_p).astype(jnp.float32)

    # K reduction tile: largest multiple of 128 dividing K_p, capped at 1152.
    if K_p <= 1152:
        TK = K_p
    else:
        TK = max(c for c in range(128, 1153, 128) if K_p % c == 0)
    k_steps = K_p // TK

    has_res = residual is not None
    inputs = [patches_p, w2d_p, bias_p]
    if has_res:
        res2d = residual.astype(jnp.bfloat16).reshape(M, cout)
        res_p = jnp.pad(res2d, ((0, Mp - M), (0, Cout_p - cout)))
        inputs.append(res_p)

    flops = int(2 * Mp * K_p * Cout_p)
    bytes_accessed = int(
        Mp * K_p * 2                       # patches (bf16)
        + (Mp // TM) * K_p * Cout_p * 2    # weights re-read per M tile (bf16)
        + Mp * Cout_p * 2                  # output (bf16)
        + (Mp * Cout_p * 2 if has_res else 0)
        + Cout_p * 4)
    cost = pl.CostEstimate(flops=flops, transcendentals=0,
                           bytes_accessed=bytes_accessed)

    if k_steps == 1:
        # Whole reduction fits one tile: skip the scratch accumulator entirely.
        in_specs = [
            pl.BlockSpec((TM, K_p), lambda i: (i, 0)),
            pl.BlockSpec((K_p, Cout_p), lambda i: (0, 0)),
            pl.BlockSpec((1, Cout_p), lambda i: (0, 0)),
        ]
        if has_res:
            in_specs.append(pl.BlockSpec((TM, Cout_p), lambda i: (i, 0)))
        out = pl.pallas_call(
            functools.partial(_conv_bn_single_kernel, relu=relu, has_res=has_res),
            grid=(Mp // TM,),
            in_specs=in_specs,
            out_specs=pl.BlockSpec((TM, Cout_p), lambda i: (i, 0)),
            out_shape=jax.ShapeDtypeStruct((Mp, Cout_p), jnp.bfloat16),
            compiler_params=pltpu.CompilerParams(
                dimension_semantics=("parallel",),
                vmem_limit_bytes=VMEM_LIMIT_BYTES),
            cost_estimate=cost,
        )(*inputs)
    else:
        in_specs = [
            pl.BlockSpec((TM, TK), lambda i, k: (i, k)),
            pl.BlockSpec((TK, Cout_p), lambda i, k: (k, 0)),
            pl.BlockSpec((1, Cout_p), lambda i, k: (0, 0)),
        ]
        if has_res:
            in_specs.append(pl.BlockSpec((TM, Cout_p), lambda i, k: (i, 0)))
        out = pl.pallas_call(
            functools.partial(_conv_bn_kernel, relu=relu, has_res=has_res),
            grid=(Mp // TM, k_steps),
            in_specs=in_specs,
            out_specs=pl.BlockSpec((TM, Cout_p), lambda i, k: (i, 0)),
            out_shape=jax.ShapeDtypeStruct((Mp, Cout_p), jnp.bfloat16),
            scratch_shapes=[pltpu.VMEM((TM, Cout_p), jnp.float32)],
            compiler_params=pltpu.CompilerParams(
                dimension_semantics=("parallel", "arbitrary"),
                vmem_limit_bytes=VMEM_LIMIT_BYTES),
            cost_estimate=cost,
        )(*inputs)
    return out[:M, :cout].reshape(N, Ho, Wo, cout)


# ----------------------------------------------------------------------------
# MaxPool2d(kernel_size=3, stride=2, padding=1), tiled over rows
# ----------------------------------------------------------------------------
def maxpool_3x3_s2_p1(x):
    N, H, W, C = x.shape
    x = x.astype(jnp.bfloat16)
    xp = jnp.pad(x, ((0, 0), (1, 1), (1, 1), (0, 0)),
                 constant_values=-jnp.inf)
    Ho = (H + 2 - 3) // 2 + 1
    Wo = (W + 2 - 3) // 2 + 1
    cols = []
    for i in range(3):
        for j in range(3):
            cols.append(xp[:, i:i + 2 * (Ho - 1) + 1:2,
                           j:j + 2 * (Wo - 1) + 1:2, :])
    M = N * Ho * Wo
    stacked = jnp.stack(cols, axis=0).reshape(9, M, C)

    TM = min(512, _round_up(M, 8))
    Mp = _round_up(M, TM)
    stacked = jnp.pad(stacked, ((0, 0), (0, Mp - M), (0, 0)),
                      constant_values=-jnp.inf)

    out = pl.pallas_call(
        _maxpool_kernel,
        grid=(Mp // TM,),
        in_specs=[pl.BlockSpec((9, TM, C), lambda i: (0, i, 0))],
        out_specs=pl.BlockSpec((TM, C), lambda i: (i, 0)),
        out_shape=jax.ShapeDtypeStruct((Mp, C), jnp.bfloat16),
        compiler_params=pltpu.CompilerParams(
            dimension_semantics=("parallel",),
            vmem_limit_bytes=VMEM_LIMIT_BYTES),
    )(stacked)
    return out[:M].reshape(N, Ho, Wo, C)


# ----------------------------------------------------------------------------
# Parameter initialization (deterministic, in-script)
# ----------------------------------------------------------------------------
def _init_conv(key, kh, kw, cin, cout):
    fan_in = kh * kw * cin
    return jax.random.normal(key, (kh, kw, cin, cout), jnp.float32) * (2.0 / fan_in) ** 0.5


def _init_bn(key, c):
    k1, k2, k3, k4 = jax.random.split(key, 4)
    return dict(
        gamma=1.0 + 0.1 * jax.random.normal(k1, (c,), jnp.float32),
        beta=0.1 * jax.random.normal(k2, (c,), jnp.float32),
        mean=0.1 * jax.random.normal(k3, (c,), jnp.float32),
        var=jax.random.uniform(k4, (c,), jnp.float32, 0.5, 1.5),
    )


def _init_block(key, cin, cout, stride):
    ks = jax.random.split(key, 6)
    p = dict(
        stride=stride,
        w1=_init_conv(ks[0], 3, 3, cin, cout), bn1=_init_bn(ks[1], cout),
        w2=_init_conv(ks[2], 3, 3, cout, cout), bn2=_init_bn(ks[3], cout),
    )
    if stride != 1 or cin != cout:
        p["w_sc"] = _init_conv(ks[4], 1, 1, cin, cout)
        p["bn_sc"] = _init_bn(ks[5], cout)
    return p


def init_resnet_encoder(key, in_channels, layers):
    ks = jax.random.split(key, 2 + sum(layers))
    params = dict(
        conv1_w=_init_conv(ks[0], 7, 7, in_channels, 64),
        bn1=_init_bn(ks[1], 64),
        layers=[],
    )
    kidx = 2
    in_c = 64
    for planes, nblocks, stride in ((64, layers[0], 1),
                                    (128, layers[1], 2),
                                    (256, layers[2], 2)):
        blocks = []
        for b in range(nblocks):
            s = stride if b == 0 else 1
            blocks.append(_init_block(ks[kidx], in_c, planes, s))
            in_c = planes
            kidx += 1
        params["layers"].append(blocks)
    return params


# ----------------------------------------------------------------------------
# Forward pass
# ----------------------------------------------------------------------------
def basic_block_forward(x, p):
    stride = p["stride"]
    if "w_sc" in p:
        shortcut = conv2d_bn(x, p["w_sc"], **p["bn_sc"],
                             stride=stride, pad=0, relu=False)
    else:
        shortcut = x
    h = conv2d_bn(x, p["w1"], **p["bn1"], stride=stride, pad=1, relu=True)
    # second conv: BN + residual add + final ReLU fused inside the kernel
    return conv2d_bn(h, p["w2"], **p["bn2"], stride=1, pad=1, relu=True,
                     residual=shortcut)


def resnet_encoder_forward(x_nchw, params):
    # NCHW -> NHWC, bf16 activations between layers (f32 accumulation inside kernels)
    x = jnp.transpose(x_nchw, (0, 2, 3, 1)).astype(jnp.bfloat16)
    x = conv2d_bn(x, params["conv1_w"], **params["bn1"],
                  stride=2, pad=3, relu=True)                      # conv1+bn1+relu
    x = maxpool_3x3_s2_p1(x)                                       # maxpool
    for layer in params["layers"]:                                 # layer1..3
        for block in layer:
            x = basic_block_forward(x, block)
    return jnp.transpose(x, (0, 3, 1, 2)).astype(jnp.float32)      # NHWC -> NCHW


# ----------------------------------------------------------------------------
if __name__ == "__main__":
    key = jax.random.PRNGKey(0)
    k_x, k_p = jax.random.split(key)

    # Small shapes consistent with the module: N=2, in_channels=4, 16x16 spatial,
    # layers=[1,1,1] (one BasicBlock per stage).
    x = jax.random.normal(k_x, (2, 4, 16, 16), jnp.float32)        # NCHW
    params = init_resnet_encoder(k_p, in_channels=4, layers=[1, 1, 1])

    # Whole forward under one jit so the im2col / padding glue fuses around
    # the Pallas calls (params are closed over; strides stay Python ints).
    fwd = jax.jit(lambda inp: resnet_encoder_forward(inp, params))
    out = fwd(x)
    out = jax.block_until_ready(out)

    # Expected: conv1 s2 -> 8x8, maxpool -> 4x4, layer2 s2 -> 2x2, layer3 s2 -> 1x1
    assert out.shape == (2, 256, 1, 1), out.shape
    assert bool(jnp.all(jnp.isfinite(out)))
    print("KERNEL_OK")
</pallas_src>

<mosaic_0001>
module attributes {stable_mosaic.version = 11 : i64} {
  func.func @_conv_bn_single_kernel(%arg0: i32, %arg1: memref<128x256xbf16, #tpu.memory_space<vmem>>, %arg2: memref<256x128xbf16, #tpu.memory_space<vmem>>, %arg3: memref<1x128xf32, #tpu.memory_space<vmem>>, %arg4: memref<128x128xbf16, #tpu.memory_space<vmem>>) attributes {dimension_semantics = [#tpu.dimension_semantics<parallel>], iteration_bounds = array<i64: 1>, scalar_prefetch = 0 : i64, scratch_operands = 0 : i64, tpu.core_type = #tpu.core_type<tc>, window_params = [{transform_indices = @transform_0, window_bounds = array<i64: 128, 256>}, {pipeline_mode = #tpu.pipeline_mode<synchronous>, transform_indices = @transform_1, window_bounds = array<i64: 256, 128>}, {pipeline_mode = #tpu.pipeline_mode<synchronous>, transform_indices = @transform_2, window_bounds = array<i64: 1, 128>}, {transform_indices = @transform_3, window_bounds = array<i64: 128, 128>}]} {
    %c0 = arith.constant 0 : index
    %c0_0 = arith.constant 0 : index
    %0 = vector.load %arg1[%c0, %c0_0] : memref<128x256xbf16, #tpu.memory_space<vmem>>, vector<128x256xbf16>
    %c0_1 = arith.constant 0 : index
    %c0_2 = arith.constant 0 : index
    %1 = vector.load %arg2[%c0_1, %c0_2] : memref<256x128xbf16, #tpu.memory_space<vmem>>, vector<256x128xbf16>
    %cst = arith.constant dense<0.000000e+00> : vector<128x128xf32>
    %2 = tpu.matmul %0, %1, %cst {dimension_numbers = #tpu.dot_dimension_numbers<[1], [0], [0], [1], [0, 0, 1, 1], [], []>} : vector<128x256xbf16>, vector<256x128xbf16>, vector<128x128xf32> -> vector<128x128xf32>
    %c0_3 = arith.constant 0 : index
    %c0_4 = arith.constant 0 : index
    %3 = vector.load %arg3[%c0_3, %c0_4] : memref<1x128xf32, #tpu.memory_space<vmem>>, vector<1x128xf32>
    %4 = vector.broadcast %3 : vector<1x128xf32> to vector<128x128xf32>
    %5 = arith.addf %2, %4 : vector<128x128xf32>
    %cst_5 = arith.constant 0.000000e+00 : f32
    %6 = vector.broadcast %cst_5 : f32 to vector<128x128xf32>
    %7 = arith.maximumf %5, %6 : vector<128x128xf32>
    %8 = arith.truncf %7 : vector<128x128xf32> to vector<128x128xbf16>
    %c0_6 = arith.constant 0 : index
    %c0_7 = arith.constant 0 : index
    %9 = vector.load %arg4[%c0_6, %c0_7] : memref<128x128xbf16, #tpu.memory_space<vmem>>, vector<128x128xbf16>
    tpu.vector_store %arg4[%c0_6, %c0_7], %8 {strides = array<i32>} : memref<128x128xbf16, #tpu.memory_space<vmem>>, vector<128x128xbf16>,
    return
  }
  func.func @transform_0(%arg0: i32) -> (i32, i32) {
    %c0_i32 = arith.constant 0 : i32
    %c0_i32_0 = arith.constant 0 : i32
    return %arg0, %c0_i32 : i32, i32
  }
  func.func @transform_1(%arg0: i32) -> (i32, i32) {
    %c0_i32 = arith.constant 0 : i32
    %c0_i32_0 = arith.constant 0 : i32
    %c0_i32_1 = arith.constant 0 : i32
    return %c0_i32, %c0_i32_0 : i32, i32
  }
  func.func @transform_2(%arg0: i32) -> (i32, i32) {
    %c0_i32 = arith.constant 0 : i32
    %c0_i32_0 = arith.constant 0 : i32
    %c0_i32_1 = arith.constant 0 : i32
    return %c0_i32, %c0_i32_0 : i32, i32
  }
  func.func @transform_3(%arg0: i32) -> (i32, i32) {
    %c0_i32 = arith.constant 0 : i32
    %c0_i32_0 = arith.constant 0 : i32
    return %arg0, %c0_i32 : i32, i32
  }
}

module attributes {stable_mosaic.version = 11 : i64} {
  func.func @_maxpool_kernel(%arg0: i32, %arg1: memref<9x32x64xbf16, #tpu.memory_space<vmem>>, %arg2: memref<32x64xbf16, #tpu.memory_space<vmem>>) attributes {dimension_semantics = [#tpu.dimension_semantics<parallel>], iteration_bounds = array<i64: 1>, scalar_prefetch = 0 : i64, scratch_operands = 0 : i64, tpu.core_type = #tpu.core_type<tc>, window_params = [{transform_indices = @transform_0, window_bounds = array<i64: 9, 32, 64>}, {transform_indices = @transform_1, window_bounds = array<i64: 32, 64>}]} {
    %c0 = arith.constant 0 : index
    %c0_0 = arith.constant 0 : index
    %c0_1 = arith.constant 0 : index
    %0 = vector.load %arg1[%c0, %c0_0, %c0_1] : memref<9x32x64xbf16, #tpu.memory_space<vmem>>, vector<9x32x64xbf16>
    %cst = arith.constant dense<0xFF80> : vector<32x64xbf16>
    %1 = vector.multi_reduction <maximumf>, %0, %cst [0] : vector<9x32x64xbf16> to vector<32x64xbf16>
    %c0_2 = arith.constant 0 : index
    %c0_3 = arith.constant 0 : index
    %2 = vector.load %arg2[%c0_2, %c0_3] : memref<32x64xbf16, #tpu.memory_space<vmem>>, vector<32x64xbf16>
    tpu.vector_store %arg2[%c0_2, %c0_3], %1 {strides = array<i32>} : memref<32x64xbf16, #tpu.memory_space<vmem>>, vector<32x64xbf16>,
    return
  }
  func.func @transform_0(%arg0: i32) -> (i32, i32, i32) {
    %c0_i32 = arith.constant 0 : i32
    %c0_i32_0 = arith.constant 0 : i32
    %c0_i32_1 = arith.constant 0 : i32
    return %c0_i32, %arg0, %c0_i32_0 : i32, i32, i32
  }
  func.func @transform_1(%arg0: i32) -> (i32, i32) {
    %c0_i32 = arith.constant 0 : i32
    %c0_i32_0 = arith.constant 0 : i32
    return %arg0, %c0_i32 : i32, i32
  }
}

module attributes {stable_mosaic.version = 11 : i64} {
  func.func @_conv_bn_single_kernel(%arg0: i32, %arg1: memref<32x640xbf16, #tpu.memory_space<vmem>>, %arg2: memref<640x128xbf16, #tpu.memory_space<vmem>>, %arg3: memref<1x128xf32, #tpu.memory_space<vmem>>, %arg4: memref<32x128xbf16, #tpu.memory_space<vmem>>) attributes {dimension_semantics = [#tpu.dimension_semantics<parallel>], iteration_bounds = array<i64: 1>, scalar_prefetch = 0 : i64, scratch_operands = 0 : i64, tpu.core_type = #tpu.core_type<tc>, window_params = [{transform_indices = @transform_0, window_bounds = array<i64: 32, 640>}, {pipeline_mode = #tpu.pipeline_mode<synchronous>, transform_indices = @transform_1, window_bounds = array<i64: 640, 128>}, {pipeline_mode = #tpu.pipeline_mode<synchronous>, transform_indices = @transform_2, window_bounds = array<i64: 1, 128>}, {transform_indices = @transform_3, window_bounds = array<i64: 32, 128>}]} {
    %c0 = arith.constant 0 : index
    %c0_0 = arith.constant 0 : index
    %0 = vector.load %arg1[%c0, %c0_0] : memref<32x640xbf16, #tpu.memory_space<vmem>>, vector<32x640xbf16>
    %c0_1 = arith.constant 0 : index
    %c0_2 = arith.constant 0 : index
    %1 = vector.load %arg2[%c0_1, %c0_2] : memref<640x128xbf16, #tpu.memory_space<vmem>>, vector<640x128xbf16>
    %cst = arith.constant dense<0.000000e+00> : vector<32x128xf32>
    %2 = tpu.matmul %0, %1, %cst {dimension_numbers = #tpu.dot_dimension_numbers<[1], [0], [0], [1], [0, 0, 1, 1], [], []>} : vector<32x640xbf16>, vector<640x128xbf16>, vector<32x128xf32> -> vector<32x128xf32>
    %c0_3 = arith.constant 0 : index
    %c0_4 = arith.constant 0 : index
    %3 = vector.load %arg3[%c0_3, %c0_4] : memref<1x128xf32, #tpu.memory_space<vmem>>, vector<1x128xf32>
    %4 = vector.broadcast %3 : vector<1x128xf32> to vector<32x128xf32>
    %5 = arith.addf %2, %4 : vector<32x128xf32>
    %cst_5 = arith.constant 0.000000e+00 : f32
    %6 = vector.broadcast %cst_5 : f32 to vector<32x128xf32>
    %7 = arith.maximumf %5, %6 : vector<32x128xf32>
    %8 = arith.truncf %7 : vector<32x128xf32> to vector<32x128xbf16>
    %c0_6 = arith.constant 0 : index
    %c0_7 = arith.constant 0 : index
    %9 = vector.load %arg4[%c0_6, %c0_7] : memref<32x128xbf16, #tpu.memory_space<vmem>>, vector<32x128xbf16>
    tpu.vector_store %arg4[%c0_6, %c0_7], %8 {strides = array<i32>} : memref<32x128xbf16, #tpu.memory_space<vmem>>, vector<32x128xbf16>,
    return
  }
  func.func @transform_0(%arg0: i32) -> (i32, i32) {
    %c0_i32 = arith.constant 0 : i32
    %c0_i32_0 = arith.constant 0 : i32
    return %arg0, %c0_i32 : i32, i32
  }
  func.func @transform_1(%arg0: i32) -> (i32, i32) {
    %c0_i32 = arith.constant 0 : i32
    %c0_i32_0 = arith.constant 0 : i32
    %c0_i32_1 = arith.constant 0 : i32
    return %c0_i32, %c0_i32_0 : i32, i32
  }
  func.func @transform_2(%arg0: i32) -> (i32, i32) {
    %c0_i32 = arith.constant 0 : i32
    %c0_i32_0 = arith.constant 0 : i32
    %c0_i32_1 = arith.constant 0 : i32
    return %c0_i32, %c0_i32_0 : i32, i32
  }
  func.func @transform_3(%arg0: i32) -> (i32, i32) {
    %c0_i32 = arith.constant 0 : i32
    %c0_i32_0 = arith.constant 0 : i32
    return %arg0, %c0_i32 : i32, i32
  }
}

module attributes {stable_mosaic.version = 11 : i64} {
  func.func @_conv_bn_single_kernel(%arg0: i32, %arg1: memref<32x640xbf16, #tpu.memory_space<vmem>>, %arg2: memref<640x128xbf16, #tpu.memory_space<vmem>>, %arg3: memref<1x128xf32, #tpu.memory_space<vmem>>, %arg4: memref<32x128xbf16, #tpu.memory_space<vmem>>, %arg5: memref<32x128xbf16, #tpu.memory_space<vmem>>) attributes {dimension_semantics = [#tpu.dimension_semantics<parallel>], iteration_bounds = array<i64: 1>, scalar_prefetch = 0 : i64, scratch_operands = 0 : i64, tpu.core_type = #tpu.core_type<tc>, window_params = [{transform_indices = @transform_0, window_bounds = array<i64: 32, 640>}, {pipeline_mode = #tpu.pipeline_mode<synchronous>, transform_indices = @transform_1, window_bounds = array<i64: 640, 128>}, {pipeline_mode = #tpu.pipeline_mode<synchronous>, transform_indices = @transform_2, window_bounds = array<i64: 1, 128>}, {transform_indices = @transform_3, window_bounds = array<i64: 32, 128>}, {transform_indices = @transform_4, window_bounds = array<i64: 32, 128>}]} {
    %c0 = arith.constant 0 : index
    %c0_0 = arith.constant 0 : index
    %0 = vector.load %arg1[%c0, %c0_0] : memref<32x640xbf16, #tpu.memory_space<vmem>>, vector<32x640xbf16>
    %c0_1 = arith.constant 0 : index
    %c0_2 = arith.constant 0 : index
    %1 = vector.load %arg2[%c0_1, %c0_2] : memref<640x128xbf16, #tpu.memory_space<vmem>>, vector<640x128xbf16>
    %cst = arith.constant dense<0.000000e+00> : vector<32x128xf32>
    %2 = tpu.matmul %0, %1, %cst {dimension_numbers = #tpu.dot_dimension_numbers<[1], [0], [0], [1], [0, 0, 1, 1], [], []>} : vector<32x640xbf16>, vector<640x128xbf16>, vector<32x128xf32> -> vector<32x128xf32>
    %c0_3 = arith.constant 0 : index
    %c0_4 = arith.constant 0 : index
    %3 = vector.load %arg3[%c0_3, %c0_4] : memref<1x128xf32, #tpu.memory_space<vmem>>, vector<1x128xf32>
    %4 = vector.broadcast %3 : vector<1x128xf32> to vector<32x128xf32>
    %5 = arith.addf %2, %4 : vector<32x128xf32>
    %c0_5 = arith.constant 0 : index
    %c0_6 = arith.constant 0 : index
    %6 = vector.load %arg4[%c0_5, %c0_6] : memref<32x128xbf16, #tpu.memory_space<vmem>>, vector<32x128xbf16>
    %7 = arith.extf %6 : vector<32x128xbf16> to vector<32x128xf32>
    %8 = arith.addf %5, %7 : vector<32x128xf32>
    %cst_7 = arith.constant 0.000000e+00 : f32
    %9 = vector.broadcast %cst_7 : f32 to vector<32x128xf32>
    %10 = arith.maximumf %8, %9 : vector<32x128xf32>
    %11 = arith.truncf %10 : vector<32x128xf32> to vector<32x128xbf16>
    %c0_8 = arith.constant 0 : index
    %c0_9 = arith.constant 0 : index
    %12 = vector.load %arg5[%c0_8, %c0_9] : memref<32x128xbf16, #tpu.memory_space<vmem>>, vector<32x128xbf16>
    tpu.vector_store %arg5[%c0_8, %c0_9], %11 {strides = array<i32>} : memref<32x128xbf16, #tpu.memory_space<vmem>>, vector<32x128xbf16>,
    return
  }
  func.func @transform_0(%arg0: i32) -> (i32, i32) {
    %c0_i32 = arith.constant 0 : i32
    %c0_i32_0 = arith.constant 0 : i32
    return %arg0, %c0_i32 : i32, i32
  }
  func.func @transform_1(%arg0: i32) -> (i32, i32) {
    %c0_i32 = arith.constant 0 : i32
    %c0_i32_0 = arith.constant 0 : i32
    %c0_i32_1 = arith.constant 0 : i32
    return %c0_i32, %c0_i32_0 : i32, i32
  }
  func.func @transform_2(%arg0: i32) -> (i32, i32) {
    %c0_i32 = arith.constant 0 : i32
    %c0_i32_0 = arith.constant 0 : i32
    %c0_i32_1 = arith.constant 0 : i32
    return %c0_i32, %c0_i32_0 : i32, i32
  }
  func.func @transform_3(%arg0: i32) -> (i32, i32) {
    %c0_i32 = arith.constant 0 : i32
    %c0_i32_0 = arith.constant 0 : i32
    return %arg0, %c0_i32 : i32, i32
  }
  func.func @transform_4(%arg0: i32) -> (i32, i32) {
    %c0_i32 = arith.constant 0 : i32
    %c0_i32_0 = arith.constant 0 : i32
    return %arg0, %c0_i32 : i32, i32
  }
}

module attributes {stable_mosaic.version = 11 : i64} {
  func.func @_conv_bn_single_kernel(%arg0: i32, %arg1: memref<8x640xbf16, #tpu.memory_space<vmem>>, %arg2: memref<640x128xbf16, #tpu.memory_space<vmem>>, %arg3: memref<1x128xf32, #tpu.memory_space<vmem>>, %arg4: memref<8x128xbf16, #tpu.memory_space<vmem>>) attributes {dimension_semantics = [#tpu.dimension_semantics<parallel>], iteration_bounds = array<i64: 1>, scalar_prefetch = 0 : i64, scratch_operands = 0 : i64, tpu.core_type = #tpu.core_type<tc>, window_params = [{transform_indices = @transform_0, window_bounds = array<i64: 8, 640>}, {pipeline_mode = #tpu.pipeline_mode<synchronous>, transform_indices = @transform_1, window_bounds = array<i64: 640, 128>}, {pipeline_mode = #tpu.pipeline_mode<synchronous>, transform_indices = @transform_2, window_bounds = array<i64: 1, 128>}, {transform_indices = @transform_3, window_bounds = array<i64: 8, 128>}]} {
    %c0 = arith.constant 0 : index
    %c0_0 = arith.constant 0 : index
    %0 = vector.load %arg1[%c0, %c0_0] : memref<8x640xbf16, #tpu.memory_space<vmem>>, vector<8x640xbf16>
    %c0_1 = arith.constant 0 : index
    %c0_2 = arith.constant 0 : index
    %1 = vector.load %arg2[%c0_1, %c0_2] : memref<640x128xbf16, #tpu.memory_space<vmem>>, vector<640x128xbf16>
    %cst = arith.constant dense<0.000000e+00> : vector<8x128xf32>
    %2 = tpu.matmul %0, %1, %cst {dimension_numbers = #tpu.dot_dimension_numbers<[1], [0], [0], [1], [0, 0, 1, 1], [], []>} : vector<8x640xbf16>, vector<640x128xbf16>, vector<8x128xf32> -> vector<8x128xf32>
    %c0_3 = arith.constant 0 : index
    %c0_4 = arith.constant 0 : index
    %3 = vector.load %arg3[%c0_3, %c0_4] : memref<1x128xf32, #tpu.memory_space<vmem>>, vector<1x128xf32>
    %4 = vector.broadcast %3 : vector<1x128xf32> to vector<8x128xf32>
    %5 = arith.addf %2, %4 : vector<8x128xf32>
    %cst_5 = arith.constant 0.000000e+00 : f32
    %6 = vector.broadcast %cst_5 : f32 to vector<8x128xf32>
    %7 = arith.maximumf %5, %6 : vector<8x128xf32>
    %8 = arith.truncf %7 : vector<8x128xf32> to vector<8x128xbf16>
    %c0_6 = arith.constant 0 : index
    %c0_7 = arith.constant 0 : index
    %9 = vector.load %arg4[%c0_6, %c0_7] : memref<8x128xbf16, #tpu.memory_space<vmem>>, vector<8x128xbf16>
    tpu.vector_store %arg4[%c0_6, %c0_7], %8 {strides = array<i32>} : memref<8x128xbf16, #tpu.memory_space<vmem>>, vector<8x128xbf16>,
    return
  }
  func.func @transform_0(%arg0: i32) -> (i32, i32) {
    %c0_i32 = arith.constant 0 : i32
    %c0_i32_0 = arith.constant 0 : i32
    return %arg0, %c0_i32 : i32, i32
  }
  func.func @transform_1(%arg0: i32) -> (i32, i32) {
    %c0_i32 = arith.constant 0 : i32
    %c0_i32_0 = arith.constant 0 : i32
    %c0_i32_1 = arith.constant 0 : i32
    return %c0_i32, %c0_i32_0 : i32, i32
  }
  func.func @transform_2(%arg0: i32) -> (i32, i32) {
    %c0_i32 = arith.constant 0 : i32
    %c0_i32_0 = arith.constant 0 : i32
    %c0_i32_1 = arith.constant 0 : i32
    return %c0_i32, %c0_i32_0 : i32, i32
  }
  func.func @transform_3(%arg0: i32) -> (i32, i32) {
    %c0_i32 = arith.constant 0 : i32
    %c0_i32_0 = arith.constant 0 : i32
    return %arg0, %c0_i32 : i32, i32
  }
}

module attributes {stable_mosaic.version = 11 : i64} {
  func.func @_conv_bn_single_kernel(%arg0: i32, %arg1: memref<8x1152xbf16, #tpu.memory_space<vmem>>, %arg2: memref<1152x128xbf16, #tpu.memory_space<vmem>>, %arg3: memref<1x128xf32, #tpu.memory_space<vmem>>, %arg4: memref<8x128xbf16, #tpu.memory_space<vmem>>, %arg5: memref<8x128xbf16, #tpu.memory_space<vmem>>) attributes {dimension_semantics = [#tpu.dimension_semantics<parallel>], iteration_bounds = array<i64: 1>, scalar_prefetch = 0 : i64, scratch_operands = 0 : i64, tpu.core_type = #tpu.core_type<tc>, window_params = [{transform_indices = @transform_0, window_bounds = array<i64: 8, 1152>}, {pipeline_mode = #tpu.pipeline_mode<synchronous>, transform_indices = @transform_1, window_bounds = array<i64: 1152, 128>}, {pipeline_mode = #tpu.pipeline_mode<synchronous>, transform_indices = @transform_2, window_bounds = array<i64: 1, 128>}, {transform_indices = @transform_3, window_bounds = array<i64: 8, 128>}, {transform_indices = @transform_4, window_bounds = array<i64: 8, 128>}]} {
    %c0 = arith.constant 0 : index
    %c0_0 = arith.constant 0 : index
    %0 = vector.load %arg1[%c0, %c0_0] : memref<8x1152xbf16, #tpu.memory_space<vmem>>, vector<8x1152xbf16>
    %c0_1 = arith.constant 0 : index
    %c0_2 = arith.constant 0 : index
    %1 = vector.load %arg2[%c0_1, %c0_2] : memref<1152x128xbf16, #tpu.memory_space<vmem>>, vector<1152x128xbf16>
    %cst = arith.constant dense<0.000000e+00> : vector<8x128xf32>
    %2 = tpu.matmul %0, %1, %cst {dimension_numbers = #tpu.dot_dimension_numbers<[1], [0], [0], [1], [0, 0, 1, 1], [], []>} : vector<8x1152xbf16>, vector<1152x128xbf16>, vector<8x128xf32> -> vector<8x128xf32>
    %c0_3 = arith.constant 0 : index
    %c0_4 = arith.constant 0 : index
    %3 = vector.load %arg3[%c0_3, %c0_4] : memref<1x128xf32, #tpu.memory_space<vmem>>, vector<1x128xf32>
    %4 = vector.broadcast %3 : vector<1x128xf32> to vector<8x128xf32>
    %5 = arith.addf %2, %4 : vector<8x128xf32>
    %c0_5 = arith.constant 0 : index
    %c0_6 = arith.constant 0 : index
    %6 = vector.load %arg4[%c0_5, %c0_6] : memref<8x128xbf16, #tpu.memory_space<vmem>>, vector<8x128xbf16>
    %7 = arith.extf %6 : vector<8x128xbf16> to vector<8x128xf32>
    %8 = arith.addf %5, %7 : vector<8x128xf32>
    %cst_7 = arith.constant 0.000000e+00 : f32
    %9 = vector.broadcast %cst_7 : f32 to vector<8x128xf32>
    %10 = arith.maximumf %8, %9 : vector<8x128xf32>
    %11 = arith.truncf %10 : vector<8x128xf32> to vector<8x128xbf16>
    %c0_8 = arith.constant 0 : index
    %c0_9 = arith.constant 0 : index
    %12 = vector.load %arg5[%c0_8, %c0_9] : memref<8x128xbf16, #tpu.memory_space<vmem>>, vector<8x128xbf16>
    tpu.vector_store %arg5[%c0_8, %c0_9], %11 {strides = array<i32>} : memref<8x128xbf16, #tpu.memory_space<vmem>>, vector<8x128xbf16>,
    return
  }
  func.func @transform_0(%arg0: i32) -> (i32, i32) {
    %c0_i32 = arith.constant 0 : i32
    %c0_i32_0 = arith.constant 0 : i32
    return %arg0, %c0_i32 : i32, i32
  }
  func.func @transform_1(%arg0: i32) -> (i32, i32) {
    %c0_i32 = arith.constant 0 : i32
    %c0_i32_0 = arith.constant 0 : i32
    %c0_i32_1 = arith.constant 0 : i32
    return %c0_i32, %c0_i32_0 : i32, i32
  }
  func.func @transform_2(%arg0: i32) -> (i32, i32) {
    %c0_i32 = arith.constant 0 : i32
    %c0_i32_0 = arith.constant 0 : i32
    %c0_i32_1 = arith.constant 0 : i32
    return %c0_i32, %c0_i32_0 : i32, i32
  }
  func.func @transform_3(%arg0: i32) -> (i32, i32) {
    %c0_i32 = arith.constant 0 : i32
    %c0_i32_0 = arith.constant 0 : i32
    return %arg0, %c0_i32 : i32, i32
  }
  func.func @transform_4(%arg0: i32) -> (i32, i32) {
    %c0_i32 = arith.constant 0 : i32
    %c0_i32_0 = arith.constant 0 : i32
    return %arg0, %c0_i32 : i32, i32
  }
}

module attributes {stable_mosaic.version = 11 : i64} {
  func.func @_conv_bn_single_kernel(%arg0: i32, %arg1: memref<8x128xbf16, #tpu.memory_space<vmem>>, %arg2: memref<128x128xbf16, #tpu.memory_space<vmem>>, %arg3: memref<1x128xf32, #tpu.memory_space<vmem>>, %arg4: memref<8x128xbf16, #tpu.memory_space<vmem>>) attributes {dimension_semantics = [#tpu.dimension_semantics<parallel>], iteration_bounds = array<i64: 1>, scalar_prefetch = 0 : i64, scratch_operands = 0 : i64, tpu.core_type = #tpu.core_type<tc>, window_params = [{transform_indices = @transform_0, window_bounds = array<i64: 8, 128>}, {pipeline_mode = #tpu.pipeline_mode<synchronous>, transform_indices = @transform_1, window_bounds = array<i64: 128, 128>}, {pipeline_mode = #tpu.pipeline_mode<synchronous>, transform_indices = @transform_2, window_bounds = array<i64: 1, 128>}, {transform_indices = @transform_3, window_bounds = array<i64: 8, 128>}]} {
    %c0 = arith.constant 0 : index
    %c0_0 = arith.constant 0 : index
    %0 = vector.load %arg1[%c0, %c0_0] : memref<8x128xbf16, #tpu.memory_space<vmem>>, vector<8x128xbf16>
    %c0_1 = arith.constant 0 : index
    %c0_2 = arith.constant 0 : index
    %1 = vector.load %arg2[%c0_1, %c0_2] : memref<128x128xbf16, #tpu.memory_space<vmem>>, vector<128x128xbf16>
    %cst = arith.constant dense<0.000000e+00> : vector<8x128xf32>
    %2 = tpu.matmul %0, %1, %cst {dimension_numbers = #tpu.dot_dimension_numbers<[1], [0], [0], [1], [0, 0, 1, 1], [], []>} : vector<8x128xbf16>, vector<128x128xbf16>, vector<8x128xf32> -> vector<8x128xf32>
    %c0_3 = arith.constant 0 : index
    %c0_4 = arith.constant 0 : index
    %3 = vector.load %arg3[%c0_3, %c0_4] : memref<1x128xf32, #tpu.memory_space<vmem>>, vector<1x128xf32>
    %4 = vector.broadcast %3 : vector<1x128xf32> to vector<8x128xf32>
    %5 = arith.addf %2, %4 : vector<8x128xf32>
    %6 = arith.truncf %5 : vector<8x128xf32> to vector<8x128xbf16>
    %c0_5 = arith.constant 0 : index
    %c0_6 = arith.constant 0 : index
    %7 = vector.load %arg4[%c0_5, %c0_6] : memref<8x128xbf16, #tpu.memory_space<vmem>>, vector<8x128xbf16>
    tpu.vector_store %arg4[%c0_5, %c0_6], %6 {strides = array<i32>} : memref<8x128xbf16, #tpu.memory_space<vmem>>, vector<8x128xbf16>,
    return
  }
  func.func @transform_0(%arg0: i32) -> (i32, i32) {
    %c0_i32 = arith.constant 0 : i32
    %c0_i32_0 = arith.constant 0 : i32
    return %arg0, %c0_i32 : i32, i32
  }
  func.func @transform_1(%arg0: i32) -> (i32, i32) {
    %c0_i32 = arith.constant 0 : i32
    %c0_i32_0 = arith.constant 0 : i32
    %c0_i32_1 = arith.constant 0 : i32
    return %c0_i32, %c0_i32_0 : i32, i32
  }
  func.func @transform_2(%arg0: i32) -> (i32, i32) {
    %c0_i32 = arith.constant 0 : i32
    %c0_i32_0 = arith.constant 0 : i32
    %c0_i32_1 = arith.constant 0 : i32
    return %c0_i32, %c0_i32_0 : i32, i32
  }
  func.func @transform_3(%arg0: i32) -> (i32, i32) {
    %c0_i32 = arith.constant 0 : i32
    %c0_i32_0 = arith.constant 0 : i32
    return %arg0, %c0_i32 : i32, i32
  }
}

module attributes {stable_mosaic.version = 11 : i64} {
  func.func @_conv_bn_single_kernel(%arg0: i32, %arg1: memref<8x1152xbf16, #tpu.memory_space<vmem>>, %arg2: memref<1152x256xbf16, #tpu.memory_space<vmem>>, %arg3: memref<1x256xf32, #tpu.memory_space<vmem>>, %arg4: memref<8x256xbf16, #tpu.memory_space<vmem>>) attributes {dimension_semantics = [#tpu.dimension_semantics<parallel>], iteration_bounds = array<i64: 1>, scalar_prefetch = 0 : i64, scratch_operands = 0 : i64, tpu.core_type = #tpu.core_type<tc>, window_params = [{transform_indices = @transform_0, window_bounds = array<i64: 8, 1152>}, {pipeline_mode = #tpu.pipeline_mode<synchronous>, transform_indices = @transform_1, window_bounds = array<i64: 1152, 256>}, {pipeline_mode = #tpu.pipeline_mode<synchronous>, transform_indices = @transform_2, window_bounds = array<i64: 1, 256>}, {transform_indices = @transform_3, window_bounds = array<i64: 8, 256>}]} {
    %c0 = arith.constant 0 : index
    %c0_0 = arith.constant 0 : index
    %0 = vector.load %arg1[%c0, %c0_0] : memref<8x1152xbf16, #tpu.memory_space<vmem>>, vector<8x1152xbf16>
    %c0_1 = arith.constant 0 : index
    %c0_2 = arith.constant 0 : index
    %1 = vector.load %arg2[%c0_1, %c0_2] : memref<1152x256xbf16, #tpu.memory_space<vmem>>, vector<1152x256xbf16>
    %cst = arith.constant dense<0.000000e+00> : vector<8x256xf32>
    %2 = tpu.matmul %0, %1, %cst {dimension_numbers = #tpu.dot_dimension_numbers<[1], [0], [0], [1], [0, 0, 1, 1], [], []>} : vector<8x1152xbf16>, vector<1152x256xbf16>, vector<8x256xf32> -> vector<8x256xf32>
    %c0_3 = arith.constant 0 : index
    %c0_4 = arith.constant 0 : index
    %3 = vector.load %arg3[%c0_3, %c0_4] : memref<1x256xf32, #tpu.memory_space<vmem>>, vector<1x256xf32>
    %4 = vector.broadcast %3 : vector<1x256xf32> to vector<8x256xf32>
    %5 = arith.addf %2, %4 : vector<8x256xf32>
    %cst_5 = arith.constant 0.000000e+00 : f32
    %6 = vector.broadcast %cst_5 : f32 to vector<8x256xf32>
    %7 = arith.maximumf %5, %6 : vector<8x256xf32>
    %8 = arith.truncf %7 : vector<8x256xf32> to vector<8x256xbf16>
    %c0_6 = arith.constant 0 : index
    %c0_7 = arith.constant 0 : index
    %9 = vector.load %arg4[%c0_6, %c0_7] : memref<8x256xbf16, #tpu.memory_space<vmem>>, vector<8x256xbf16>
    tpu.vector_store %arg4[%c0_6, %c0_7], %8 {strides = array<i32>} : memref<8x256xbf16, #tpu.memory_space<vmem>>, vector<8x256xbf16>,
    return
  }
  func.func @transform_0(%arg0: i32) -> (i32, i32) {
    %c0_i32 = arith.constant 0 : i32
    %c0_i32_0 = arith.constant 0 : i32
    return %arg0, %c0_i32 : i32, i32
  }
  func.func @transform_1(%arg0: i32) -> (i32, i32) {
    %c0_i32 = arith.constant 0 : i32
    %c0_i32_0 = arith.constant 0 : i32
    %c0_i32_1 = arith.constant 0 : i32
    return %c0_i32, %c0_i32_0 : i32, i32
  }
  func.func @transform_2(%arg0: i32) -> (i32, i32) {
    %c0_i32 = arith.constant 0 : i32
    %c0_i32_0 = arith.constant 0 : i32
    %c0_i32_1 = arith.constant 0 : i32
    return %c0_i32, %c0_i32_0 : i32, i32
  }
  func.func @transform_3(%arg0: i32) -> (i32, i32) {
    %c0_i32 = arith.constant 0 : i32
    %c0_i32_0 = arith.constant 0 : i32
    return %arg0, %c0_i32 : i32, i32
  }
}

module attributes {stable_mosaic.version = 11 : i64} {
  func.func @_conv_bn_single_kernel(%arg0: i32, %arg1: memref<8x128xbf16, #tpu.memory_space<vmem>>, %arg2: memref<128x256xbf16, #tpu.memory_space<vmem>>, %arg3: memref<1x256xf32, #tpu.memory_space<vmem>>, %arg4: memref<8x256xbf16, #tpu.memory_space<vmem>>) attributes {dimension_semantics = [#tpu.dimension_semantics<parallel>], iteration_bounds = array<i64: 1>, scalar_prefetch = 0 : i64, scratch_operands = 0 : i64, tpu.core_type = #tpu.core_type<tc>, window_params = [{transform_indices = @transform_0, window_bounds = array<i64: 8, 128>}, {pipeline_mode = #tpu.pipeline_mode<synchronous>, transform_indices = @transform_1, window_bounds = array<i64: 128, 256>}, {pipeline_mode = #tpu.pipeline_mode<synchronous>, transform_indices = @transform_2, window_bounds = array<i64: 1, 256>}, {transform_indices = @transform_3, window_bounds = array<i64: 8, 256>}]} {
    %c0 = arith.constant 0 : index
    %c0_0 = arith.constant 0 : index
    %0 = vector.load %arg1[%c0, %c0_0] : memref<8x128xbf16, #tpu.memory_space<vmem>>, vector<8x128xbf16>
    %c0_1 = arith.constant 0 : index
    %c0_2 = arith.constant 0 : index
    %1 = vector.load %arg2[%c0_1, %c0_2] : memref<128x256xbf16, #tpu.memory_space<vmem>>, vector<128x256xbf16>
    %cst = arith.constant dense<0.000000e+00> : vector<8x256xf32>
    %2 = tpu.matmul %0, %1, %cst {dimension_numbers = #tpu.dot_dimension_numbers<[1], [0], [0], [1], [0, 0, 1, 1], [], []>} : vector<8x128xbf16>, vector<128x256xbf16>, vector<8x256xf32> -> vector<8x256xf32>
    %c0_3 = arith.constant 0 : index
    %c0_4 = arith.constant 0 : index
    %3 = vector.load %arg3[%c0_3, %c0_4] : memref<1x256xf32, #tpu.memory_space<vmem>>, vector<1x256xf32>
    %4 = vector.broadcast %3 : vector<1x256xf32> to vector<8x256xf32>
    %5 = arith.addf %2, %4 : vector<8x256xf32>
    %6 = arith.truncf %5 : vector<8x256xf32> to vector<8x256xbf16>
    %c0_5 = arith.constant 0 : index
    %c0_6 = arith.constant 0 : index
    %7 = vector.load %arg4[%c0_5, %c0_6] : memref<8x256xbf16, #tpu.memory_space<vmem>>, vector<8x256xbf16>
    tpu.vector_store %arg4[%c0_5, %c0_6], %6 {strides = array<i32>} : memref<8x256xbf16, #tpu.memory_space<vmem>>, vector<8x256xbf16>,
    return
  }
  func.func @transform_0(%arg0: i32) -> (i32, i32) {
    %c0_i32 = arith.constant 0 : i32
    %c0_i32_0 = arith.constant 0 : i32
    return %arg0, %c0_i32 : i32, i32
  }
  func.func @transform_1(%arg0: i32) -> (i32, i32) {
    %c0_i32 = arith.constant 0 : i32
    %c0_i32_0 = arith.constant 0 : i32
    %c0_i32_1 = arith.constant 0 : i32
    return %c0_i32, %c0_i32_0 : i32, i32
  }
  func.func @transform_2(%arg0: i32) -> (i32, i32) {
    %c0_i32 = arith.constant 0 : i32
    %c0_i32_0 = arith.constant 0 : i32
    %c0_i32_1 = arith.constant 0 : i32
    return %c0_i32, %c0_i32_0 : i32, i32
  }
  func.func @transform_3(%arg0: i32) -> (i32, i32) {
    %c0_i32 = arith.constant 0 : i32
    %c0_i32_0 = arith.constant 0 : i32
    return %arg0, %c0_i32 : i32, i32
  }
}

module attributes {stable_mosaic.version = 11 : i64} {
  func.func @_conv_bn_kernel(%arg0: i32, %arg1: i32, %arg2: memref<8x1152xbf16, #tpu.memory_space<vmem>>, %arg3: memref<1152x256xbf16, #tpu.memory_space<vmem>>, %arg4: memref<1x256xf32, #tpu.memory_space<vmem>>, %arg5: memref<8x256xbf16, #tpu.memory_space<vmem>>, %arg6: memref<8x256xbf16, #tpu.memory_space<vmem>>, %arg7: memref<8x256xf32, #tpu.memory_space<vmem>>) attributes {dimension_semantics = [#tpu.dimension_semantics<parallel>, #tpu.dimension_semantics<arbitrary>], iteration_bounds = array<i64: 1, 2>, scalar_prefetch = 0 : i64, scratch_operands = 1 : i64, tpu.core_type = #tpu.core_type<tc>, window_params = [{transform_indices = @transform_0, window_bounds = array<i64: 8, 1152>}, {transform_indices = @transform_1, window_bounds = array<i64: 1152, 256>}, {pipeline_mode = #tpu.pipeline_mode<synchronous>, transform_indices = @transform_2, window_bounds = array<i64: 1, 256>}, {transform_indices = @transform_3, window_bounds = array<i64: 8, 256>}, {transform_indices = @transform_4, window_bounds = array<i64: 8, 256>}]} {
    %c0_i32 = arith.constant 0 : i32
    %0 = arith.cmpi eq, %arg1, %c0_i32 : i32
    %1 = arith.extui %0 : i1 to i32
    %c0_i32_0 = arith.constant 0 : i32
    %2 = arith.cmpi ne, %1, %c0_i32_0 : i32
    scf.if %2 {
      %cst_9 = arith.constant 0.000000e+00 : f32
      %12 = vector.broadcast %cst_9 : f32 to vector<8x256xf32>
      %c0_10 = arith.constant 0 : index
      %c0_11 = arith.constant 0 : index
      %13 = vector.load %arg7[%c0_10, %c0_11] : memref<8x256xf32, #tpu.memory_space<vmem>>, vector<8x256xf32>
      tpu.vector_store %arg7[%c0_10, %c0_11], %12 {strides = array<i32>} : memref<8x256xf32, #tpu.memory_space<vmem>>, vector<8x256xf32>,
    } else {
    }
    %c0 = arith.constant 0 : index
    %c0_1 = arith.constant 0 : index
    %3 = vector.load %arg7[%c0, %c0_1] : memref<8x256xf32, #tpu.memory_space<vmem>>, vector<8x256xf32>
    %c0_2 = arith.constant 0 : index
    %c0_3 = arith.constant 0 : index
    %4 = vector.load %arg2[%c0_2, %c0_3] : memref<8x1152xbf16, #tpu.memory_space<vmem>>, vector<8x1152xbf16>
    %c0_4 = arith.constant 0 : index
    %c0_5 = arith.constant 0 : index
    %5 = vector.load %arg3[%c0_4, %c0_5] : memref<1152x256xbf16, #tpu.memory_space<vmem>>, vector<1152x256xbf16>
    %cst = arith.constant dense<0.000000e+00> : vector<8x256xf32>
    %6 = tpu.matmul %4, %5, %cst {dimension_numbers = #tpu.dot_dimension_numbers<[1], [0], [0], [1], [0, 0, 1, 1], [], []>} : vector<8x1152xbf16>, vector<1152x256xbf16>, vector<8x256xf32> -> vector<8x256xf32>
    %7 = arith.addf %3, %6 : vector<8x256xf32>
    %c0_6 = arith.constant 0 : index
    %c0_7 = arith.constant 0 : index
    %8 = vector.load %arg7[%c0_6, %c0_7] : memref<8x256xf32, #tpu.memory_space<vmem>>, vector<8x256xf32>
    tpu.vector_store %arg7[%c0_6, %c0_7], %7 {strides = array<i32>} : memref<8x256xf32, #tpu.memory_space<vmem>>, vector<8x256xf32>,
    %c1_i32 = arith.constant 1 : i32
    %9 = arith.cmpi eq, %arg1, %c1_i32 : i32
    %10 = arith.extui %9 : i1 to i32
    %c0_i32_8 = arith.constant 0 : i32
    %11 = arith.cmpi ne, %10, %c0_i32_8 : i32
    scf.if %11 {
      %c0_9 = arith.constant 0 : index
      %c0_10 = arith.constant 0 : index
      %12 = vector.load %arg7[%c0_9, %c0_10] : memref<8x256xf32, #tpu.memory_space<vmem>>, vector<8x256xf32>
      %c0_11 = arith.constant 0 : index
      %c0_12 = arith.constant 0 : index
      %13 = vector.load %arg4[%c0_11, %c0_12] : memref<1x256xf32, #tpu.memory_space<vmem>>, vector<1x256xf32>
      %14 = vector.broadcast %13 : vector<1x256xf32> to vector<8x256xf32>
      %15 = arith.addf %12, %14 : vector<8x256xf32>
      %c0_13 = arith.constant 0 : index
      %c0_14 = arith.constant 0 : index
      %16 = vector.load %arg5[%c0_13, %c0_14] : memref<8x256xbf16, #tpu.memory_space<vmem>>, vector<8x256xbf16>
      %17 = arith.extf %16 : vector<8x256xbf16> to vector<8x256xf32>
      %18 = arith.addf %15, %17 : vector<8x256xf32>
      %cst_15 = arith.constant 0.000000e+00 : f32
      %19 = vector.broadcast %cst_15 : f32 to vector<8x256xf32>
      %20 = arith.maximumf %18, %19 : vector<8x256xf32>
      %21 = arith.truncf %20 : vector<8x256xf32> to vector<8x256xbf16>
      %c0_16 = arith.constant 0 : index
      %c0_17 = arith.constant 0 : index
      %22 = vector.load %arg6[%c0_16, %c0_17] : memref<8x256xbf16, #tpu.memory_space<vmem>>, vector<8x256xbf16>
      tpu.vector_store %arg6[%c0_16, %c0_17], %21 {strides = array<i32>} : memref<8x256xbf16, #tpu.memory_space<vmem>>, vector<8x256xbf16>,
    } else {
    }
    return
  }
  func.func @transform_0(%arg0: i32, %arg1: i32) -> (i32, i32) {
    %c0_i32 = arith.constant 0 : i32
    return %arg0, %arg1 : i32, i32
  }
  func.func @transform_1(%arg0: i32, %arg1: i32) -> (i32, i32) {
    %c0_i32 = arith.constant 0 : i32
    %c0_i32_0 = arith.constant 0 : i32
    return %arg1, %c0_i32 : i32, i32
  }
  func.func @transform_2(%arg0: i32, %arg1: i32) -> (i32, i32) {
    %c0_i32 = arith.constant 0 : i32
    %c0_i32_0 = arith.constant 0 : i32
    %c0_i32_1 = arith.constant 0 : i32
    return %c0_i32, %c0_i32_0 : i32, i32
  }
  func.func @transform_3(%arg0: i32, %arg1: i32) -> (i32, i32) {
    %c0_i32 = arith.constant 0 : i32
    %c0_i32_0 = arith.constant 0 : i32
    return %arg0, %c0_i32 : i32, i32
  }
  func.func @transform_4(%arg0: i32, %arg1: i32) -> (i32, i32) {
    %c0_i32 = arith.constant 0 : i32
    %c0_i32_0 = arith.constant 0 : i32
    return %arg0, %c0_i32 : i32, i32
  }
}

</mosaic_0001>

<llo_original>
// kernel: _lambda_.10
$region0: #{_lambda_.10}
  #allocation0 [shape = 'u32[]', space=smem, size = 0x4, offset = 0x4, fixed_abs, tag = 'smem constant byte address 0x4 - core index']
  #allocation1 [shape = 'u32[144,128]{1,0:T(1,128)}', space=vmem, size = 0x12000, scoped, tag = 'internal scratch']
  %s0 = inlined_call_operand.vmem [shape: bf16[128,256], index: 0, kind: input, shape index: {}]
  %s1 = inlined_call_operand.vmem [shape: bf16[256,128], index: 1, kind: input, shape index: {}]
  %s2 = inlined_call_operand.vmem [shape: f32[1,128], index: 2, kind: input, shape index: {}]
  %s3 = inlined_call_operand.vmem [shape: bf16[128,128], index: 3, kind: output, shape index: {}]
  %s4 = sld [smem:[#allocation0]]
  $region22: #{_lambda_.10} parent=0
    _
  %s6 = ssub.s32 1, %s4
  %s7 = scalar_select 0, %s6, %s4
  // Predicated region
  $region2: #{_lambda_.10} parent=0 // pred_check
    _
  $region3: #{_lambda_.10} parent=0 // pred_check_branch
    %9 = sbr.rel (0) target = $region5
  $region4: #{_lambda_.10} parent=0 // pred_region
    _
  $region5: #{_lambda_.10} parent=0 // pred_fallthru
    _
  // Predicated region
  $region6: #{_lambda_.10} parent=0 // pred_check
    _
  $region7: #{_lambda_.10} parent=0 // pred_check_branch
    %11 = sbr.rel (0) target = $region9
  $region8: #{_lambda_.10} parent=0 // pred_region
    _
  $region9: #{_lambda_.10} parent=0 // pred_fallthru
    _
  // Predicated region
  $region10: #{_lambda_.10} parent=0 // pred_check
    _
  $region11: #{_lambda_.10} parent=0 // pred_check_branch
    %13 = sbr.rel (0) target = $region13
  $region12: #{_lambda_.10} parent=0 // pred_region
    _
  $region13: #{_lambda_.10} parent=0 // pred_fallthru
    _
  %v15 = vld [vmem:[%s0] sm:$0xff]
  %v16 = vld [vmem:[%s0 + $0x8] sm:$0xff]
  %v17 = vld [vmem:[%s0 + $0x10] sm:$0xff]
  %v18 = vld [vmem:[%s0 + $0x18] sm:$0xff]
  %v19 = vld [vmem:[%s0 + $0x20] sm:$0xff]
  %v20 = vld [vmem:[%s0 + $0x28] sm:$0xff]
  %v21 = vld [vmem:[%s0 + $0x30] sm:$0xff]
  %v22 = vld [vmem:[%s0 + $0x38] sm:$0xff]
  %v23 = vld [vmem:[%s0 + $0x40] sm:$0xff]
  %v24 = vld [vmem:[%s0 + $0x48] sm:$0xff]
  %v25 = vld [vmem:[%s0 + $0x50] sm:$0xff]
  %v26 = vld [vmem:[%s0 + $0x58] sm:$0xff]
  %v27 = vld [vmem:[%s0 + $0x60] sm:$0xff]
  %v28 = vld [vmem:[%s0 + $0x68] sm:$0xff]
  %v29 = vld [vmem:[%s0 + $0x70] sm:$0xff]
  %v30 = vld [vmem:[%s0 + $0x78] sm:$0xff]
  %v31 = vld [vmem:[%s1] sm:$0xf]
  %v32 = vld [vmem:[%s1 + $0x4] sm:$0xf]
  %v33 = vld [vmem:[%s1 + $0x8] sm:$0xf]
  %v34 = vld [vmem:[%s1 + $0xc] sm:$0xf]
  %v35 = vld [vmem:[%s1 + $0x10] sm:$0xf]
  %v36 = vld [vmem:[%s1 + $0x14] sm:$0xf]
  %v37 = vld [vmem:[%s1 + $0x18] sm:$0xf]
  %v38 = vld [vmem:[%s1 + $0x1c] sm:$0xf]
  %v39 = vld [vmem:[%s1 + $0x20] sm:$0xf]
  %v40 = vld [vmem:[%s1 + $0x24] sm:$0xf]
  %v41 = vld [vmem:[%s1 + $0x28] sm:$0xf]
  %v42 = vld [vmem:[%s1 + $0x2c] sm:$0xf]
  %v43 = vld [vmem:[%s1 + $0x30] sm:$0xf]
  %v44 = vld [vmem:[%s1 + $0x34] sm:$0xf]
  %v45 = vld [vmem:[%s1 + $0x38] sm:$0xf]
  %v46 = vld [vmem:[%s1 + $0x3c] sm:$0xf]
  %v47 = vld [vmem:[%s1 + $0x40] sm:$0xf]
  %v48 = vld [vmem:[%s1 + $0x44] sm:$0xf]
  %v49 = vld [vmem:[%s1 + $0x48] sm:$0xf]
  %v50 = vld [vmem:[%s1 + $0x4c] sm:$0xf]
  %v51 = vld [vmem:[%s1 + $0x50] sm:$0xf]
  %v52 = vld [vmem:[%s1 + $0x54] sm:$0xf]
  %v53 = vld [vmem:[%s1 + $0x58] sm:$0xf]
  %v54 = vld [vmem:[%s1 + $0x5c] sm:$0xf]
  %v55 = vld [vmem:[%s1 + $0x60] sm:$0xf]
  %v56 = vld [vmem:[%s1 + $0x64] sm:$0xf]
  %v57 = vld [vmem:[%s1 + $0x68] sm:$0xf]
  %v58 = vld [vmem:[%s1 + $0x6c] sm:$0xf]
  %v59 = vld [vmem:[%s1 + $0x70] sm:$0xf]
  %v60 = vld [vmem:[%s1 + $0x74] sm:$0xf]
  %v61 = vld [vmem:[%s1 + $0x78] sm:$0xf]
  %v62 = vld [vmem:[%s1 + $0x7c] sm:$0xf]
  %v63 = vld [vmem:[%s2] sm:$0x1]
  %v65 = vlaneseq
  %v66 = vshrl.u32 %v65, 7
  %v67 = vsub.s32 0, %v66
  %v68 = vrot.slane %v63, %v67
  %v86 = vunpack.c.l.b16 %v15
  %v87 = vunpack.c.h.b16 %v15
  %v88 = vunpack.c.l.b16 %v16
  %v89 = vunpack.c.h.b16 %v16
  %v90 = vunpack.c.l.b16 %v17
  %v91 = vunpack.c.h.b16 %v17
  %v92 = vunpack.c.l.b16 %v18
  %v93 = vunpack.c.h.b16 %v18
  %v94 = vunpack.c.l.b16 %v19
  %v95 = vunpack.c.h.b16 %v19
  %v96 = vunpack.c.l.b16 %v20
  %v97 = vunpack.c.h.b16 %v20
  %v98 = vunpack.c.l.b16 %v21
  %v99 = vunpack.c.h.b16 %v21
  %v100 = vunpack.c.l.b16 %v22
  %v101 = vunpack.c.h.b16 %v22
  %v102 = vunpack.c.l.b16 %v23
  %v103 = vunpack.c.h.b16 %v23
  %v104 = vunpack.c.l.b16 %v24
  %v105 = vunpack.c.h.b16 %v24
  %v106 = vunpack.c.l.b16 %v25
  %v107 = vunpack.c.h.b16 %v25
  %v108 = vunpack.c.l.b16 %v26
  %v109 = vunpack.c.h.b16 %v26
  %v110 = vunpack.c.l.b16 %v27
  %v111 = vunpack.c.h.b16 %v27
  %v112 = vunpack.c.l.b16 %v28
  %v113 = vunpack.c.h.b16 %v28
  %v114 = vunpack.c.l.b16 %v29
  %v115 = vunpack.c.h.b16 %v29
  %v116 = vunpack.c.l.b16 %v30
  %v117 = vunpack.c.h.b16 %v30
  %v118 = vpack.c.b16 %v88, %v86
  %v119 = vpack.c.b16 %v89, %v87
  %v120 = vpack.c.b16 %v92, %v90
  %v121 = vpack.c.b16 %v93, %v91
  %v122 = vpack.c.b16 %v96, %v94
  %v123 = vpack.c.b16 %v97, %v95
  %v124 = vpack.c.b16 %v100, %v98
  %v125 = vpack.c.b16 %v101, %v99
  %v126 = vpack.c.b16 %v104, %v102
  %v127 = vpack.c.b16 %v105, %v103
  %v128 = vpack.c.b16 %v108, %v106
  %v129 = vpack.c.b16 %v109, %v107
  %v130 = vpack.c.b16 %v112, %v110
  %v131 = vpack.c.b16 %v113, %v111
  %v132 = vpack.c.b16 %v116, %v114
  %v133 = vpack.c.b16 %v117, %v115
  %v182 = vunpack.c.l.b16 %v31
  %v183 = vunpack.c.l.b16 %v32
  %v184 = vunpack.c.l.b16 %v33
  %v185 = vunpack.c.l.b16 %v34
  %v186 = vunpack.c.l.b16 %v35
  %v187 = vunpack.c.l.b16 %v36
  %v188 = vunpack.c.l.b16 %v37
  %v189 = vunpack.c.l.b16 %v38
  %v190 = vunpack.c.l.b16 %v39
  %v191 = vunpack.c.l.b16 %v40
  %v192 = vunpack.c.l.b16 %v41
  %v193 = vunpack.c.l.b16 %v42
  %v194 = vunpack.c.l.b16 %v43
  %v195 = vunpack.c.l.b16 %v44
  %v196 = vunpack.c.l.b16 %v45
  %v197 = vunpack.c.l.b16 %v46
  %v198 = vunpack.c.l.b16 %v47
  %v199 = vunpack.c.l.b16 %v48
  %v200 = vunpack.c.l.b16 %v49
  %v201 = vunpack.c.l.b16 %v50
  %v202 = vunpack.c.l.b16 %v51
  %v203 = vunpack.c.l.b16 %v52
  %v204 = vunpack.c.l.b16 %v53
  %v205 = vunpack.c.l.b16 %v54
  %v206 = vunpack.c.l.b16 %v55
  %v207 = vunpack.c.l.b16 %v56
  %v208 = vunpack.c.l.b16 %v57
  %v209 = vunpack.c.l.b16 %v58
  %v210 = vunpack.c.l.b16 %v59
  %v211 = vunpack.c.l.b16 %v60
  %v212 = vunpack.c.l.b16 %v61
  %v213 = vunpack.c.l.b16 %v62
  %v214 = vpack.c.b16 %v183, %v182
  %v215 = vpack.c.b16 %v185, %v184
  %v216 = vpack.c.b16 %v187, %v186
  %v217 = vpack.c.b16 %v189, %v188
  %v218 = vpack.c.b16 %v191, %v190
  %v219 = vpack.c.b16 %v193, %v192
  %v220 = vpack.c.b16 %v195, %v194
  %v221 = vpack.c.b16 %v197, %v196
  %v222 = vpack.c.b16 %v199, %v198
  %v223 = vpack.c.b16 %v201, %v200
  %v224 = vpack.c.b16 %v203, %v202
  %v225 = vpack.c.b16 %v205, %v204
  %v226 = vpack.c.b16 %v207, %v206
  %v227 = vpack.c.b16 %v209, %v208
  %v228 = vpack.c.b16 %v211, %v210
  %v229 = vpack.c.b16 %v213, %v212
  %246 = vmatprep.subr.bf16.mxu0 0
  %247 = vmatpush1.bf16.msra.mxu0 %v221
  %248 = vmatprep.subr.bf16.mxu0 0
  %249 = vmatpush1.bf16.msra.mxu0 %v220
  %250 = vmatprep.subr.bf16.mxu0 0
  %251 = vmatpush1.bf16.msra.mxu0 %v219
  %252 = vmatprep.subr.bf16.mxu0 0
  %253 = vmatpush1.bf16.msra.mxu0 %v218
  %254 = vmatprep.subr.bf16.mxu0 0
  %255 = vmatpush1.bf16.msra.mxu0 %v217
  %256 = vmatprep.subr.bf16.mxu0 0
  %257 = vmatpush1.bf16.msra.mxu0 %v216
  %258 = vmatprep.subr.bf16.mxu0 0
  %259 = vmatpush1.bf16.msra.mxu0 %v215
  %260 = vmatprep.subr.bf16.mxu0 0
  %261 = vmatpush1.bf16.msra.mxu0 %v214
  %262 = vmatprep.subr.bf16.mxu0 0
  %263 = vmatpush2.bf16.msra.mxu0 %v229
  %264 = vmatprep.subr.bf16.mxu0 0
  %265 = vmatpush2.bf16.msra.mxu0 %v228
  %266 = vmatprep.subr.bf16.mxu0 0
  %267 = vmatpush2.bf16.msra.mxu0 %v227
  %268 = vmatprep.subr.bf16.mxu0 0
  %269 = vmatpush2.bf16.msra.mxu0 %v226
  %270 = vmatprep.subr.bf16.mxu0 0
  %271 = vmatpush2.bf16.msra.mxu0 %v225
  %272 = vmatprep.subr.bf16.mxu0 0
  %273 = vmatpush2.bf16.msra.mxu0 %v224
  %274 = vmatprep.subr.bf16.mxu0 0
  %275 = vmatpush2.bf16.msra.mxu0 %v223
  %276 = vmatprep.subr.bf16.mxu0 0
  %277 = vmatpush2.bf16.msra.mxu0 %v222
  %278 = vmatprep.mubr.bf16.mxu0 %v119
  %279 = vmatmul.mubr.bf16.gmra.mxu0 %v118
  %v280 = vpop.f32.mrf.mxu0
  %v281 = vadd.f32 %v68, %v280
  %v282 = vpop.f32.mrf.mxu0
  %v283 = vpop.f32.mrf.mxu0
  %v284 = vadd.f32 %v68, %v283
  %v285 = vpop.f32.mrf.mxu0
  %286 = vmatprep.mubr.bf16.mxu0 %v121
  %287 = vmatmul.mubr.bf16.gmra.mxu0 %v120
  %v288 = vpop.f32.mrf.mxu0
  %v289 = vadd.f32 %v68, %v288
  %v290 = vpop.f32.mrf.mxu0
  %v291 = vpop.f32.mrf.mxu0
  %v292 = vadd.f32 %v68, %v291
  %v293 = vpop.f32.mrf.mxu0
  %294 = vmatprep.mubr.bf16.mxu0 %v123
  %295 = vmatmul.mubr.bf16.gmra.mxu0 %v122
  %v296 = vpop.f32.mrf.mxu0
  %v297 = vadd.f32 %v68, %v296
  %v298 = vpop.f32.mrf.mxu0
  %v299 = vpop.f32.mrf.mxu0
  %v300 = vadd.f32 %v68, %v299
  %v301 = vpop.f32.mrf.mxu0
  %302 = vmatprep.mubr.bf16.mxu0 %v125
  %303 = vmatmul.mubr.bf16.gmra.mxu0 %v124
  %v304 = vpop.f32.mrf.mxu0
  %v305 = vadd.f32 %v68, %v304
  %v306 = vpop.f32.mrf.mxu0
  %v307 = vpop.f32.mrf.mxu0
  %v308 = vadd.f32 %v68, %v307
  %v309 = vpop.f32.mrf.mxu0
  %310 = vmatprep.mubr.bf16.mxu0 %v127
  %311 = vmatmul.mubr.bf16.gmra.mxu0 %v126
  %v312 = vpop.f32.mrf.mxu0
  %v313 = vadd.f32 %v68, %v312
  %v314 = vpop.f32.mrf.mxu0
  %v315 = vpop.f32.mrf.mxu0
  %v316 = vadd.f32 %v68, %v315
  %v317 = vpop.f32.mrf.mxu0
  %318 = vmatprep.mubr.bf16.mxu0 %v129
  %319 = vmatmul.mubr.bf16.gmra.mxu0 %v128
  %v320 = vpop.f32.mrf.mxu0
  %v321 = vadd.f32 %v68, %v320
  %v322 = vpop.f32.mrf.mxu0
  %v323 = vpop.f32.mrf.mxu0
  %v324 = vadd.f32 %v68, %v323
  %v325 = vpop.f32.mrf.mxu0
  %326 = vmatprep.mubr.bf16.mxu0 %v131
  %327 = vmatmul.mubr.bf16.gmra.mxu0 %v130
  %v328 = vpop.f32.mrf.mxu0
  %v329 = vadd.f32 %v68, %v328
  %v330 = vpop.f32.mrf.mxu0
  %v331 = vpop.f32.mrf.mxu0
  %v332 = vadd.f32 %v68, %v331
  %v333 = vpop.f32.mrf.mxu0
  %334 = vmatprep.mubr.bf16.mxu0 %v133
  %335 = vmatmul.mubr.bf16.gmra.mxu0 %v132
  %v336 = vpop.f32.mrf.mxu0
  %v337 = vadd.f32 %v68, %v336
  %v338 = vpop.f32.mrf.mxu0
  %v339 = vpop.f32.mrf.mxu0
  %v340 = vadd.f32 %v68, %v339
  %v341 = vpop.f32.mrf.mxu0
  %342 = vdwg.mxu0
  %v343 = vmax.f32 %v281, 0.0
  %v344 = vmax.f32 %v284, 0.0
  %v345 = vmax.f32 %v289, 0.0
  %v346 = vmax.f32 %v292, 0.0
  %v347 = vmax.f32 %v297, 0.0
  %v348 = vmax.f32 %v300, 0.0
  %v349 = vmax.f32 %v305, 0.0
  %v350 = vmax.f32 %v308, 0.0
  %v351 = vmax.f32 %v313, 0.0
  %v352 = vmax.f32 %v316, 0.0
  %v353 = vmax.f32 %v321, 0.0
  %v354 = vmax.f32 %v324, 0.0
  %v355 = vmax.f32 %v329, 0.0
  %v356 = vmax.f32 %v332, 0.0
  %v357 = vmax.f32 %v337, 0.0
  %v358 = vmax.f32 %v340, 0.0
  %v359 = vpack.c.bf16 %v344, %v343
  %v360 = vpack.c.bf16 %v346, %v345
  %v361 = vpack.c.bf16 %v348, %v347
  %v362 = vpack.c.bf16 %v350, %v349
  %v363 = vpack.c.bf16 %v352, %v351
  %v364 = vpack.c.bf16 %v354, %v353
  %v365 = vpack.c.bf16 %v356, %v355
  %v366 = vpack.c.bf16 %v358, %v357
  %v375 = vunpack.c.l.b16 %v359
  %v376 = vunpack.c.h.b16 %v359
  %v377 = vunpack.c.l.b16 %v360
  %v378 = vunpack.c.h.b16 %v360
  %v379 = vunpack.c.l.b16 %v361
  %v380 = vunpack.c.h.b16 %v361
  %v381 = vunpack.c.l.b16 %v362
  %v382 = vunpack.c.h.b16 %v362
  %v383 = vunpack.c.l.b16 %v363
  %v384 = vunpack.c.h.b16 %v363
  %v385 = vunpack.c.l.b16 %v364
  %v386 = vunpack.c.h.b16 %v364
  %v387 = vunpack.c.l.b16 %v365
  %v388 = vunpack.c.h.b16 %v365
  %v389 = vunpack.c.l.b16 %v366
  %v390 = vunpack.c.h.b16 %v366
  %v391 = vpack.c.b16 %v375, %v375
  %v392 = vpack.c.b16 %v376, %v376
  %v393 = vpack.c.b16 %v377, %v377
  %v394 = vpack.c.b16 %v378, %v378
  %v395 = vpack.c.b16 %v379, %v379
  %v396 = vpack.c.b16 %v380, %v380
  %v397 = vpack.c.b16 %v381, %v381
  %v398 = vpack.c.b16 %v382, %v382
  %v399 = vpack.c.b16 %v383, %v383
  %v400 = vpack.c.b16 %v384, %v384
  %v401 = vpack.c.b16 %v385, %v385
  %v402 = vpack.c.b16 %v386, %v386
  %v403 = vpack.c.b16 %v387, %v387
  %v404 = vpack.c.b16 %v388, %v388
  %v405 = vpack.c.b16 %v389, %v389
  %v406 = vpack.c.b16 %v390, %v390
  %423 = vst [vmem:[%s3] sm:$0xf] %v391
  %424 = vst [vmem:[%s3 + $0x4] sm:$0xf] %v392
  %425 = vst [vmem:[%s3 + $0x8] sm:$0xf] %v393
  %426 = vst [vmem:[%s3 + $0xc] sm:$0xf] %v394
  %427 = vst [vmem:[%s3 + $0x10] sm:$0xf] %v395
  %428 = vst [vmem:[%s3 + $0x14] sm:$0xf] %v396
  %429 = vst [vmem:[%s3 + $0x18] sm:$0xf] %v397
  %430 = vst [vmem:[%s3 + $0x1c] sm:$0xf] %v398
  %431 = vst [vmem:[%s3 + $0x20] sm:$0xf] %v399
  %432 = vst [vmem:[%s3 + $0x24] sm:$0xf] %v400
  %433 = vst [vmem:[%s3 + $0x28] sm:$0xf] %v401
  %434 = vst [vmem:[%s3 + $0x2c] sm:$0xf] %v402
  %435 = vst [vmem:[%s3 + $0x30] sm:$0xf] %v403
  %436 = vst [vmem:[%s3 + $0x34] sm:$0xf] %v404
  %437 = vst [vmem:[%s3 + $0x38] sm:$0xf] %v405
  %438 = vst [vmem:[%s3 + $0x3c] sm:$0xf] %v406
  // Predicated region
  $region14: #{_lambda_.10} parent=0 // pred_check
    _
  $region15: #{_lambda_.10} parent=0 // pred_check_branch
    %440 = sbr.rel (0) target = $region17
  $region16: #{_lambda_.10} parent=0 // pred_region
    _
  $region17: #{_lambda_.10} parent=0 // pred_fallthru
    _
  // Predicated region
  $region18: #{_lambda_.10} parent=0 // pred_check
    _
  $region19: #{_lambda_.10} parent=0 // pred_check_branch
    %442 = sbr.rel (0) target = $region21
  $region20: #{_lambda_.10} parent=0 // pred_region
    _
  $region21: #{_lambda_.10} parent=0 // pred_fallthru
    _

// kernel: _lambda_.11
$region0: #{_lambda_.11}
  #allocation0 [shape = 'u32[]', space=smem, size = 0x4, offset = 0x4, fixed_abs, tag = 'smem constant byte address 0x4 - core index']
  #allocation1 [shape = 'u32[144,128]{1,0:T(1,128)}', space=vmem, size = 0x12000, scoped, tag = 'internal scratch']
  %s0 = inlined_call_operand.vmem [shape: bf16[9,32,64], index: 0, kind: input, shape index: {}]
  %s1 = inlined_call_operand.vmem [shape: bf16[32,64], index: 1, kind: output, shape index: {}]
  %s2 = sld [smem:[#allocation0]]
  $region14: #{_lambda_.11} parent=0
    _
  %s4 = ssub.s32 1, %s2
  %s5 = scalar_select 0, %s4, %s2
  // Predicated region
  $region2: #{_lambda_.11} parent=0 // pred_check
    _
  $region3: #{_lambda_.11} parent=0 // pred_check_branch
    %7 = sbr.rel (0) target = $region5
  $region4: #{_lambda_.11} parent=0 // pred_region
    _
  $region5: #{_lambda_.11} parent=0 // pred_fallthru
    _
  %v9 = vld [vmem:[%s0] sm:$0xf]
  %v10 = vld [vmem:[%s0 + $0x4] sm:$0xf]
  %v11 = vld [vmem:[%s0 + $0x8] sm:$0xf]
  %v12 = vld [vmem:[%s0 + $0xc] sm:$0xf]
  %v13 = vld [vmem:[%s0 + $0x10] sm:$0xf]
  %v14 = vld [vmem:[%s0 + $0x14] sm:$0xf]
  %v15 = vld [vmem:[%s0 + $0x18] sm:$0xf]
  %v16 = vld [vmem:[%s0 + $0x1c] sm:$0xf]
  %v17 = vld [vmem:[%s0 + $0x20] sm:$0xf]
  %v18 = vld [vmem:[%s0 + $0x24] sm:$0xf]
  %v19 = vld [vmem:[%s0 + $0x28] sm:$0xf]
  %v20 = vld [vmem:[%s0 + $0x2c] sm:$0xf]
  %v21 = vld [vmem:[%s0 + $0x30] sm:$0xf]
  %v22 = vld [vmem:[%s0 + $0x34] sm:$0xf]
  %v23 = vld [vmem:[%s0 + $0x38] sm:$0xf]
  %v24 = vld [vmem:[%s0 + $0x3c] sm:$0xf]
  %v25 = vld [vmem:[%s0 + $0x40] sm:$0xf]
  %v26 = vld [vmem:[%s0 + $0x44] sm:$0xf]
  %v27 = vld [vmem:[%s0 + $0x48] sm:$0xf]
  %v28 = vld [vmem:[%s0 + $0x4c] sm:$0xf]
  %v29 = vld [vmem:[%s0 + $0x50] sm:$0xf]
  %v30 = vld [vmem:[%s0 + $0x54] sm:$0xf]
  %v31 = vld [vmem:[%s0 + $0x58] sm:$0xf]
  %v32 = vld [vmem:[%s0 + $0x5c] sm:$0xf]
  %v33 = vld [vmem:[%s0 + $0x60] sm:$0xf]
  %v34 = vld [vmem:[%s0 + $0x64] sm:$0xf]
  %v35 = vld [vmem:[%s0 + $0x68] sm:$0xf]
  %v36 = vld [vmem:[%s0 + $0x6c] sm:$0xf]
  %v37 = vld [vmem:[%s0 + $0x70] sm:$0xf]
  %v38 = vld [vmem:[%s0 + $0x74] sm:$0xf]
  %v39 = vld [vmem:[%s0 + $0x78] sm:$0xf]
  %v40 = vld [vmem:[%s0 + $0x7c] sm:$0xf]
  %v41 = vld [vmem:[%s0 + $0x80] sm:$0xf]
  %v42 = vld [vmem:[%s0 + $0x84] sm:$0xf]
  %v43 = vld [vmem:[%s0 + $0x88] sm:$0xf]
  %v44 = vld [vmem:[%s0 + $0x8c] sm:$0xf]
  %vm45 = vcmask 519168
  %v48 = vsel %vm45, %v9, 4286644096
  %v51 = vsel %vm45, %v13, 4286644096
  %v53 = vmax.bf16 %v48, %v51
  %v55 = vsel %vm45, %v17, 4286644096
  %v57 = vmax.bf16 %v53, %v55
  %v59 = vsel %vm45, %v21, 4286644096
  %v61 = vmax.bf16 %v57, %v59
  %v63 = vsel %vm45, %v25, 4286644096
  %v65 = vmax.bf16 %v61, %v63
  %v67 = vsel %vm45, %v29, 4286644096
  %v69 = vmax.bf16 %v65, %v67
  %v71 = vsel %vm45, %v33, 4286644096
  %v73 = vmax.bf16 %v69, %v71
  %v75 = vsel %vm45, %v37, 4286644096
  %v77 = vmax.bf16 %v73, %v75
  %v79 = vsel %vm45, %v41, 4286644096
  %v81 = vmax.bf16 %v77, %v79
  %v83 = vsel %vm45, %v10, 4286644096
  %v86 = vsel %vm45, %v14, 4286644096
  %v88 = vmax.bf16 %v83, %v86
  %v90 = vsel %vm45, %v18, 4286644096
  %v92 = vmax.bf16 %v88, %v90
  %v94 = vsel %vm45, %v22, 4286644096
  %v96 = vmax.bf16 %v92, %v94
  %v98 = vsel %vm45, %v26, 4286644096
  %v100 = vmax.bf16 %v96, %v98
  %v102 = vsel %vm45, %v30, 4286644096
  %v104 = vmax.bf16 %v100, %v102
  %v106 = vsel %vm45, %v34, 4286644096
  %v108 = vmax.bf16 %v104, %v106
  %v110 = vsel %vm45, %v38, 4286644096
  %v112 = vmax.bf16 %v108, %v110
  %v114 = vsel %vm45, %v42, 4286644096
  %v116 = vmax.bf16 %v112, %v114
  %v118 = vsel %vm45, %v11, 4286644096
  %v121 = vsel %vm45, %v15, 4286644096
  %v123 = vmax.bf16 %v118, %v121
  %v125 = vsel %vm45, %v19, 4286644096
  %v127 = vmax.bf16 %v123, %v125
  %v129 = vsel %vm45, %v23, 4286644096
  %v131 = vmax.bf16 %v127, %v129
  %v133 = vsel %vm45, %v27, 4286644096
  %v135 = vmax.bf16 %v131, %v133
  %v137 = vsel %vm45, %v31, 4286644096
  %v139 = vmax.bf16 %v135, %v137
  %v141 = vsel %vm45, %v35, 4286644096
  %v143 = vmax.bf16 %v139, %v141
  %v145 = vsel %vm45, %v39, 4286644096
  %v147 = vmax.bf16 %v143, %v145
  %v149 = vsel %vm45, %v43, 4286644096
  %v151 = vmax.bf16 %v147, %v149
  %v153 = vsel %vm45, %v12, 4286644096
  %v156 = vsel %vm45, %v16, 4286644096
  %v158 = vmax.bf16 %v153, %v156
  %v160 = vsel %vm45, %v20, 4286644096
  %v162 = vmax.bf16 %v158, %v160
  %v164 = vsel %vm45, %v24, 4286644096
  %v166 = vmax.bf16 %v162, %v164
  %v168 = vsel %vm45, %v28, 4286644096
  %v170 = vmax.bf16 %v166, %v168
  %v172 = vsel %vm45, %v32, 4286644096
  %v174 = vmax.bf16 %v170, %v172
  %v176 = vsel %vm45, %v36, 4286644096
  %v178 = vmax.bf16 %v174, %v176
  %v180 = vsel %vm45, %v40, 4286644096
  %v182 = vmax.bf16 %v178, %v180
  %v184 = vsel %vm45, %v44, 4286644096
  %v186 = vmax.bf16 %v182, %v184
  %187 = vst.msk [vmem:[%s1] sm:$0xf] %vm45, %v81
  %188 = vst.msk [vmem:[%s1 + $0x4] sm:$0xf] %vm45, %v116
  %189 = vst.msk [vmem:[%s1 + $0x8] sm:$0xf] %vm45, %v151
  %190 = vst.msk [vmem:[%s1 + $0xc] sm:$0xf] %vm45, %v186
  // Predicated region
  $region6: #{_lambda_.11} parent=0 // pred_check
    _
  $region7: #{_lambda_.11} parent=0 // pred_check_branch
    %192 = sbr.rel (0) target = $region9
  $region8: #{_lambda_.11} parent=0 // pred_region
    _
  $region9: #{_lambda_.11} parent=0 // pred_fallthru
    _
  // Predicated region
  $region10: #{_lambda_.11} parent=0 // pred_check
    _
  $region11: #{_lambda_.11} parent=0 // pred_check_branch
    %194 = sbr.rel (0) target = $region13
  $region12: #{_lambda_.11} parent=0 // pred_region
    _
  $region13: #{_lambda_.11} parent=0 // pred_fallthru
    _

// kernel: _lambda_.12
$region0: #{_lambda_.12}
  #allocation0 [shape = 'u32[]', space=smem, size = 0x4, offset = 0x4, fixed_abs, tag = 'smem constant byte address 0x4 - core index']
  #allocation1 [shape = 'u32[144,128]{1,0:T(1,128)}', space=vmem, size = 0x12000, scoped, tag = 'internal scratch']
  %s0 = inlined_call_operand.vmem [shape: bf16[32,640], index: 0, kind: input, shape index: {}]
  %s1 = inlined_call_operand.vmem [shape: bf16[640,128], index: 1, kind: input, shape index: {}]
  %s2 = inlined_call_operand.vmem [shape: f32[1,128], index: 2, kind: input, shape index: {}]
  %s3 = inlined_call_operand.vmem [shape: bf16[32,128], index: 3, kind: output, shape index: {}]
  %s4 = sld [smem:[#allocation0]]
  $region22: #{_lambda_.12} parent=0
    _
  %s6 = ssub.s32 1, %s4
  %s7 = scalar_select 0, %s6, %s4
  // Predicated region
  $region2: #{_lambda_.12} parent=0 // pred_check
    _
  $region3: #{_lambda_.12} parent=0 // pred_check_branch
    %9 = sbr.rel (0) target = $region5
  $region4: #{_lambda_.12} parent=0 // pred_region
    _
  $region5: #{_lambda_.12} parent=0 // pred_fallthru
    _
  // Predicated region
  $region6: #{_lambda_.12} parent=0 // pred_check
    _
  $region7: #{_lambda_.12} parent=0 // pred_check_branch
    %11 = sbr.rel (0) target = $region9
  $region8: #{_lambda_.12} parent=0 // pred_region
    _
  $region9: #{_lambda_.12} parent=0 // pred_fallthru
    _
  // Predicated region
  $region10: #{_lambda_.12} parent=0 // pred_check
    _
  $region11: #{_lambda_.12} parent=0 // pred_check_branch
    %13 = sbr.rel (0) target = $region13
  $region12: #{_lambda_.12} parent=0 // pred_region
    _
  $region13: #{_lambda_.12} parent=0 // pred_fallthru
    _
  %v15 = vld [vmem:[%s0] sm:$0xff]
  %v16 = vld [vmem:[%s0 + $0x8] sm:$0xff]
  %v17 = vld [vmem:[%s0 + $0x10] sm:$0xf]
  %v18 = vld [vmem:[%s0 + $0x14] sm:$0xff]
  %v19 = vld [vmem:[%s0 + $0x1c] sm:$0xff]
  %v20 = vld [vmem:[%s0 + $0x24] sm:$0xf]
  %v21 = vld [vmem:[%s0 + $0x28] sm:$0xff]
  %v22 = vld [vmem:[%s0 + $0x30] sm:$0xff]
  %v23 = vld [vmem:[%s0 + $0x38] sm:$0xf]
  %v24 = vld [vmem:[%s0 + $0x3c] sm:$0xff]
  %v25 = vld [vmem:[%s0 + $0x44] sm:$0xff]
  %v26 = vld [vmem:[%s0 + $0x4c] sm:$0xf]
  %v27 = vld [vmem:[%s1] sm:$0xf]
  %v28 = vld [vmem:[%s1 + $0x4] sm:$0xf]
  %v29 = vld [vmem:[%s1 + $0x8] sm:$0xf]
  %v30 = vld [vmem:[%s1 + $0xc] sm:$0xf]
  %v31 = vld [vmem:[%s1 + $0x10] sm:$0xf]
  %v32 = vld [vmem:[%s1 + $0x14] sm:$0xf]
  %v33 = vld [vmem:[%s1 + $0x18] sm:$0xf]
  %v34 = vld [vmem:[%s1 + $0x1c] sm:$0xf]
  %v35 = vld [vmem:[%s1 + $0x20] sm:$0xf]
  %v36 = vld [vmem:[%s1 + $0x24] sm:$0xf]
  %v37 = vld [vmem:[%s1 + $0x28] sm:$0xf]
  %v38 = vld [vmem:[%s1 + $0x2c] sm:$0xf]
  %v39 = vld [vmem:[%s1 + $0x30] sm:$0xf]
  %v40 = vld [vmem:[%s1 + $0x34] sm:$0xf]
  %v41 = vld [vmem:[%s1 + $0x38] sm:$0xf]
  %v42 = vld [vmem:[%s1 + $0x3c] sm:$0xf]
  %v43 = vld [vmem:[%s1 + $0x40] sm:$0xf]
  %v44 = vld [vmem:[%s1 + $0x44] sm:$0xf]
  %v45 = vld [vmem:[%s1 + $0x48] sm:$0xf]
  %v46 = vld [vmem:[%s1 + $0x4c] sm:$0xf]
  %v47 = vld [vmem:[%s1 + $0x50] sm:$0xf]
  %v48 = vld [vmem:[%s1 + $0x54] sm:$0xf]
  %v49 = vld [vmem:[%s1 + $0x58] sm:$0xf]
  %v50 = vld [vmem:[%s1 + $0x5c] sm:$0xf]
  %v51 = vld [vmem:[%s1 + $0x60] sm:$0xf]
  %v52 = vld [vmem:[%s1 + $0x64] sm:$0xf]
  %v53 = vld [vmem:[%s1 + $0x68] sm:$0xf]
  %v54 = vld [vmem:[%s1 + $0x6c] sm:$0xf]
  %v55 = vld [vmem:[%s1 + $0x70] sm:$0xf]
  %v56 = vld [vmem:[%s1 + $0x74] sm:$0xf]
  %v57 = vld [vmem:[%s1 + $0x78] sm:$0xf]
  %v58 = vld [vmem:[%s1 + $0x7c] sm:$0xf]
  %v59 = vld [vmem:[%s1 + $0x80] sm:$0xf]
  %v60 = vld [vmem:[%s1 + $0x84] sm:$0xf]
  %v61 = vld [vmem:[%s1 + $0x88] sm:$0xf]
  %v62 = vld [vmem:[%s1 + $0x8c] sm:$0xf]
  %v63 = vld [vmem:[%s1 + $0x90] sm:$0xf]
  %v64 = vld [vmem:[%s1 + $0x94] sm:$0xf]
  %v65 = vld [vmem:[%s1 + $0x98] sm:$0xf]
  %v66 = vld [vmem:[%s1 + $0x9c] sm:$0xf]
  %v67 = vld [vmem:[%s1 + $0xa0] sm:$0xf]
  %v68 = vld [vmem:[%s1 + $0xa4] sm:$0xf]
  %v69 = vld [vmem:[%s1 + $0xa8] sm:$0xf]
  %v70 = vld [vmem:[%s1 + $0xac] sm:$0xf]
  %v71 = vld [vmem:[%s1 + $0xb0] sm:$0xf]
  %v72 = vld [vmem:[%s1 + $0xb4] sm:$0xf]
  %v73 = vld [vmem:[%s1 + $0xb8] sm:$0xf]
  %v74 = vld [vmem:[%s1 + $0xbc] sm:$0xf]
  %v75 = vld [vmem:[%s1 + $0xc0] sm:$0xf]
  %v76 = vld [vmem:[%s1 + $0xc4] sm:$0xf]
  %v77 = vld [vmem:[%s1 + $0xc8] sm:$0xf]
  %v78 = vld [vmem:[%s1 + $0xcc] sm:$0xf]
  %v79 = vld [vmem:[%s1 + $0xd0] sm:$0xf]
  %v80 = vld [vmem:[%s1 + $0xd4] sm:$0xf]
  %v81 = vld [vmem:[%s1 + $0xd8] sm:$0xf]
  %v82 = vld [vmem:[%s1 + $0xdc] sm:$0xf]
  %v83 = vld [vmem:[%s1 + $0xe0] sm:$0xf]
  %v84 = vld [vmem:[%s1 + $0xe4] sm:$0xf]
  %v85 = vld [vmem:[%s1 + $0xe8] sm:$0xf]
  %v86 = vld [vmem:[%s1 + $0xec] sm:$0xf]
  %v87 = vld [vmem:[%s1 + $0xf0] sm:$0xf]
  %v88 = vld [vmem:[%s1 + $0xf4] sm:$0xf]
  %v89 = vld [vmem:[%s1 + $0xf8] sm:$0xf]
  %v90 = vld [vmem:[%s1 + $0xfc] sm:$0xf]
  %v91 = vld [vmem:[%s1 + $0x100] sm:$0xf]
  %v92 = vld [vmem:[%s1 + $0x104] sm:$0xf]
  %v93 = vld [vmem:[%s1 + $0x108] sm:$0xf]
  %v94 = vld [vmem:[%s1 + $0x10c] sm:$0xf]
  %v95 = vld [vmem:[%s1 + $0x110] sm:$0xf]
  %v96 = vld [vmem:[%s1 + $0x114] sm:$0xf]
  %v97 = vld [vmem:[%s1 + $0x118] sm:$0xf]
  %v98 = vld [vmem:[%s1 + $0x11c] sm:$0xf]
  %v99 = vld [vmem:[%s1 + $0x120] sm:$0xf]
  %v100 = vld [vmem:[%s1 + $0x124] sm:$0xf]
  %v101 = vld [vmem:[%s1 + $0x128] sm:$0xf]
  %v102 = vld [vmem:[%s1 + $0x12c] sm:$0xf]
  %v103 = vld [vmem:[%s1 + $0x130] sm:$0xf]
  %v104 = vld [vmem:[%s1 + $0x134] sm:$0xf]
  %v105 = vld [vmem:[%s1 + $0x138] sm:$0xf]
  %v106 = vld [vmem:[%s1 + $0x13c] sm:$0xf]
  %v107 = vld [vmem:[%s2] sm:$0x1]
  %v109 = vlaneseq
  %v110 = vshrl.u32 %v109, 7
  %v111 = vsub.s32 0, %v110
  %v112 = vrot.slane %v107, %v111
  %v126 = vunpack.c.l.b16 %v15
  %v127 = vunpack.c.h.b16 %v15
  %v128 = vunpack.c.l.b16 %v16
  %v129 = vunpack.c.h.b16 %v16
  %v130 = vunpack.c.l.b16 %v17
  %v131 = vunpack.c.l.b16 %v18
  %v132 = vunpack.c.h.b16 %v18
  %v133 = vunpack.c.l.b16 %v19
  %v134 = vunpack.c.h.b16 %v19
  %v135 = vunpack.c.l.b16 %v20
  %v136 = vunpack.c.l.b16 %v21
  %v137 = vunpack.c.h.b16 %v21
  %v138 = vunpack.c.l.b16 %v22
  %v139 = vunpack.c.h.b16 %v22
  %v140 = vunpack.c.l.b16 %v23
  %v141 = vunpack.c.l.b16 %v24
  %v142 = vunpack.c.h.b16 %v24
  %v143 = vunpack.c.l.b16 %v25
  %v144 = vunpack.c.h.b16 %v25
  %v145 = vunpack.c.l.b16 %v26
  %v146 = vpack.c.b16 %v131, %v126
  %v147 = vpack.c.b16 %v132, %v127
  %v148 = vpack.c.b16 %v133, %v128
  %v149 = vpack.c.b16 %v134, %v129
  %v150 = vpack.c.b16 %v135, %v130
  %v151 = vpack.c.b16 %v141, %v136
  %v152 = vpack.c.b16 %v142, %v137
  %v153 = vpack.c.b16 %v143, %v138
  %v154 = vpack.c.b16 %v144, %v139
  %v155 = vpack.c.b16 %v145, %v140
  %v246 = vunpack.c.l.b16 %v27
  %v247 = vunpack.c.l.b16 %v28
  %v248 = vunpack.c.l.b16 %v29
  %v249 = vunpack.c.l.b16 %v30
  %v250 = vunpack.c.l.b16 %v31
  %v251 = vunpack.c.l.b16 %v32
  %v252 = vunpack.c.l.b16 %v33
  %v253 = vunpack.c.l.b16 %v34
  %v254 = vunpack.c.l.b16 %v35
  %v255 = vunpack.c.l.b16 %v36
  %v256 = vunpack.c.l.b16 %v37
  %v257 = vunpack.c.l.b16 %v38
  %v258 = vunpack.c.l.b16 %v39
  %v259 = vunpack.c.l.b16 %v40
  %v260 = vunpack.c.l.b16 %v41
  %v261 = vunpack.c.l.b16 %v42
  %v262 = vunpack.c.l.b16 %v43
  %v263 = vunpack.c.l.b16 %v44
  %v264 = vunpack.c.l.b16 %v45
  %v265 = vunpack.c.l.b16 %v46
  %v266 = vunpack.c.l.b16 %v47
  %v267 = vunpack.c.l.b16 %v48
  %v268 = vunpack.c.l.b16 %v49
  %v269 = vunpack.c.l.b16 %v50
  %v270 = vunpack.c.l.b16 %v51
  %v271 = vunpack.c.l.b16 %v52
  %v272 = vunpack.c.l.b16 %v53
  %v273 = vunpack.c.l.b16 %v54
  %v274 = vunpack.c.l.b16 %v55
  %v275 = vunpack.c.l.b16 %v56
  %v276 = vunpack.c.l.b16 %v57
  %v277 = vunpack.c.l.b16 %v58
  %v278 = vunpack.c.l.b16 %v59
  %v279 = vunpack.c.l.b16 %v60
  %v280 = vunpack.c.l.b16 %v61
  %v281 = vunpack.c.l.b16 %v62
  %v282 = vunpack.c.l.b16 %v63
  %v283 = vunpack.c.l.b16 %v64
  %v284 = vunpack.c.l.b16 %v65
  %v285 = vunpack.c.l.b16 %v66
  %v286 = vunpack.c.l.b16 %v67
  %v287 = vunpack.c.l.b16 %v68
  %v288 = vunpack.c.l.b16 %v69
  %v289 = vunpack.c.l.b16 %v70
  %v290 = vunpack.c.l.b16 %v71
  %v291 = vunpack.c.l.b16 %v72
  %v292 = vunpack.c.l.b16 %v73
  %v293 = vunpack.c.l.b16 %v74
  %v294 = vunpack.c.l.b16 %v75
  %v295 = vunpack.c.l.b16 %v76
  %v296 = vunpack.c.l.b16 %v77
  %v297 = vunpack.c.l.b16 %v78
  %v298 = vunpack.c.l.b16 %v79
  %v299 = vunpack.c.l.b16 %v80
  %v300 = vunpack.c.l.b16 %v81
  %v301 = vunpack.c.l.b16 %v82
  %v302 = vunpack.c.l.b16 %v83
  %v303 = vunpack.c.l.b16 %v84
  %v304 = vunpack.c.l.b16 %v85
  %v305 = vunpack.c.l.b16 %v86
  %v306 = vunpack.c.l.b16 %v87
  %v307 = vunpack.c.l.b16 %v88
  %v308 = vunpack.c.l.b16 %v89
  %v309 = vunpack.c.l.b16 %v90
  %v310 = vunpack.c.l.b16 %v91
  %v311 = vunpack.c.l.b16 %v92
  %v312 = vunpack.c.l.b16 %v93
  %v313 = vunpack.c.l.b16 %v94
  %v314 = vunpack.c.l.b16 %v95
  %v315 = vunpack.c.l.b16 %v96
  %v316 = vunpack.c.l.b16 %v97
  %v317 = vunpack.c.l.b16 %v98
  %v318 = vunpack.c.l.b16 %v99
  %v319 = vunpack.c.l.b16 %v100
  %v320 = vunpack.c.l.b16 %v101
  %v321 = vunpack.c.l.b16 %v102
  %v322 = vunpack.c.l.b16 %v103
  %v323 = vunpack.c.l.b16 %v104
  %v324 = vunpack.c.l.b16 %v105
  %v325 = vunpack.c.l.b16 %v106
  %v326 = vpack.c.b16 %v247, %v246
  %v327 = vpack.c.b16 %v249, %v248
  %v328 = vpack.c.b16 %v251, %v250
  %v329 = vpack.c.b16 %v253, %v252
  %v330 = vpack.c.b16 %v255, %v254
  %v331 = vpack.c.b16 %v257, %v256
  %v332 = vpack.c.b16 %v259, %v258
  %v333 = vpack.c.b16 %v261, %v260
  %v334 = vpack.c.b16 %v263, %v262
  %v335 = vpack.c.b16 %v265, %v264
  %v336 = vpack.c.b16 %v267, %v266
  %v337 = vpack.c.b16 %v269, %v268
  %v338 = vpack.c.b16 %v271, %v270
  %v339 = vpack.c.b16 %v273, %v272
  %v340 = vpack.c.b16 %v275, %v274
  %v341 = vpack.c.b16 %v277, %v276
  %v342 = vpack.c.b16 %v279, %v278
  %v343 = vpack.c.b16 %v281, %v280
  %v344 = vpack.c.b16 %v283, %v282
  %v345 = vpack.c.b16 %v285, %v284
  %v346 = vpack.c.b16 %v287, %v286
  %v347 = vpack.c.b16 %v289, %v288
  %v348 = vpack.c.b16 %v291, %v290
  %v349 = vpack.c.b16 %v293, %v292
  %v350 = vpack.c.b16 %v295, %v294
  %v351 = vpack.c.b16 %v297, %v296
  %v352 = vpack.c.b16 %v299, %v298
  %v353 = vpack.c.b16 %v301, %v300
  %v354 = vpack.c.b16 %v303, %v302
  %v355 = vpack.c.b16 %v305, %v304
  %v356 = vpack.c.b16 %v307, %v306
  %v357 = vpack.c.b16 %v309, %v308
  %v358 = vpack.c.b16 %v311, %v310
  %v359 = vpack.c.b16 %v313, %v312
  %v360 = vpack.c.b16 %v315, %v314
  %v361 = vpack.c.b16 %v317, %v316
  %v362 = vpack.c.b16 %v319, %v318
  %v363 = vpack.c.b16 %v321, %v320
  %v364 = vpack.c.b16 %v323, %v322
  %v365 = vpack.c.b16 %v325, %v324
  %406 = vmatprep.subr.bf16.mxu0 0
  %407 = vmatpush1.bf16.msra.mxu0 %v333
  %408 = vmatprep.subr.bf16.mxu0 0
  %409 = vmatpush1.bf16.msra.mxu0 %v332
  %410 = vmatprep.subr.bf16.mxu0 0
  %411 = vmatpush1.bf16.msra.mxu0 %v331
  %412 = vmatprep.subr.bf16.mxu0 0
  %413 = vmatpush1.bf16.msra.mxu0 %v330
  %414 = vmatprep.subr.bf16.mxu0 0
  %415 = vmatpush1.bf16.msra.mxu0 %v329
  %416 = vmatprep.subr.bf16.mxu0 0
  %417 = vmatpush1.bf16.msra.mxu0 %v328
  %418 = vmatprep.subr.bf16.mxu0 0
  %419 = vmatpush1.bf16.msra.mxu0 %v327
  %420 = vmatprep.subr.bf16.mxu0 0
  %421 = vmatpush1.bf16.msra.mxu0 %v326
  %422 = vmatprep.subr.bf16.mxu0 0
  %423 = vmatpush2.bf16.msra.mxu0 %v341
  %424 = vmatprep.subr.bf16.mxu0 0
  %425 = vmatpush2.bf16.msra.mxu0 %v340
  %426 = vmatprep.subr.bf16.mxu0 0
  %427 = vmatpush2.bf16.msra.mxu0 %v339
  %428 = vmatprep.subr.bf16.mxu0 0
  %429 = vmatpush2.bf16.msra.mxu0 %v338
  %430 = vmatprep.subr.bf16.mxu0 0
  %431 = vmatpush2.bf16.msra.mxu0 %v337
  %432 = vmatprep.subr.bf16.mxu0 0
  %433 = vmatpush2.bf16.msra.mxu0 %v336
  %434 = vmatprep.subr.bf16.mxu0 0
  %435 = vmatpush2.bf16.msra.mxu0 %v335
  %436 = vmatprep.subr.bf16.mxu0 0
  %437 = vmatpush2.bf16.msra.mxu0 %v334
  %438 = vmatprep.mubr.bf16.mxu0 %v147
  %439 = vmatmul.mubr.bf16.gmra.mxu0 %v146
  %v440 = vpop.f32.mrf.mxu0
  %v441 = vadd.f32 %v112, %v440
  %v442 = vpop.f32.mrf.mxu0
  %v443 = vpop.f32.mrf.mxu0
  %v444 = vadd.f32 %v112, %v443
  %v445 = vpop.f32.mrf.mxu0
  %446 = vmatprep.mubr.bf16.mxu0 %v152
  %447 = vmatmul.mubr.bf16.gmra.mxu0 %v151
  %v448 = vpop.f32.mrf.mxu0
  %v449 = vadd.f32 %v112, %v448
  %v450 = vpop.f32.mrf.mxu0
  %v451 = vpop.f32.mrf.mxu0
  %v452 = vadd.f32 %v112, %v451
  %v453 = vpop.f32.mrf.mxu0
  %454 = vdwg.mxu0
  %455 = vmatprep.subr.bf16.mxu0 0
  %456 = vmatpush1.bf16.msra.mxu0 %v349
  %457 = vmatprep.subr.bf16.mxu0 0
  %458 = vmatpush1.bf16.msra.mxu0 %v348
  %459 = vmatprep.subr.bf16.mxu0 0
  %460 = vmatpush1.bf16.msra.mxu0 %v347
  %461 = vmatprep.subr.bf16.mxu0 0
  %462 = vmatpush1.bf16.msra.mxu0 %v346
  %463 = vmatprep.subr.bf16.mxu0 0
  %464 = vmatpush1.bf16.msra.mxu0 %v345
  %465 = vmatprep.subr.bf16.mxu0 0
  %466 = vmatpush1.bf16.msra.mxu0 %v344
  %467 = vmatprep.subr.bf16.mxu0 0
  %468 = vmatpush1.bf16.msra.mxu0 %v343
  %469 = vmatprep.subr.bf16.mxu0 0
  %470 = vmatpush1.bf16.msra.mxu0 %v342
  %471 = vmatprep.subr.bf16.mxu0 0
  %472 = vmatpush2.bf16.msra.mxu0 %v357
  %473 = vmatprep.subr.bf16.mxu0 0
  %474 = vmatpush2.bf16.msra.mxu0 %v356
  %475 = vmatprep.subr.bf16.mxu0 0
  %476 = vmatpush2.bf16.msra.mxu0 %v355
  %477 = vmatprep.subr.bf16.mxu0 0
  %478 = vmatpush2.bf16.msra.mxu0 %v354
  %479 = vmatprep.subr.bf16.mxu0 0
  %480 = vmatpush2.bf16.msra.mxu0 %v353
  %481 = vmatprep.subr.bf16.mxu0 0
  %482 = vmatpush2.bf16.msra.mxu0 %v352
  %483 = vmatprep.subr.bf16.mxu0 0
  %484 = vmatpush2.bf16.msra.mxu0 %v351
  %485 = vmatprep.subr.bf16.mxu0 0
  %486 = vmatpush2.bf16.msra.mxu0 %v350
  %487 = vmatprep.mubr.bf16.mxu0 %v149
  %488 = vmatmul.mubr.bf16.gmra.mxu0 %v148
  %v489 = vpop.f32.mrf.mxu0
  %v490 = vadd.f32 %v441, %v489
  %v491 = vpop.f32.mrf.mxu0
  %v492 = vpop.f32.mrf.mxu0
  %v493 = vadd.f32 %v444, %v492
  %v494 = vpop.f32.mrf.mxu0
  %495 = vmatprep.mubr.bf16.mxu0 %v154
  %496 = vmatmul.mubr.bf16.gmra.mxu0 %v153
  %v497 = vpop.f32.mrf.mxu0
  %v498 = vadd.f32 %v449, %v497
  %v499 = vpop.f32.mrf.mxu0
  %v500 = vpop.f32.mrf.mxu0
  %v501 = vadd.f32 %v452, %v500
  %v502 = vpop.f32.mrf.mxu0
  %503 = vdwg.mxu0
  %504 = vmatprep.subr.bf16.mxu0 0
  %505 = vmatpush1.bf16.msra.mxu0 %v365
  %506 = vmatprep.subr.bf16.mxu0 0
  %507 = vmatpush1.bf16.msra.mxu0 %v364
  %508 = vmatprep.subr.bf16.mxu0 0
  %509 = vmatpush1.bf16.msra.mxu0 %v363
  %510 = vmatprep.subr.bf16.mxu0 0
  %511 = vmatpush1.bf16.msra.mxu0 %v362
  %512 = vmatprep.subr.bf16.mxu0 0
  %513 = vmatpush1.bf16.msra.mxu0 %v361
  %514 = vmatprep.subr.bf16.mxu0 0
  %515 = vmatpush1.bf16.msra.mxu0 %v360
  %516 = vmatprep.subr.bf16.mxu0 0
  %517 = vmatpush1.bf16.msra.mxu0 %v359
  %518 = vmatprep.subr.bf16.mxu0 0
  %519 = vmatpush1.bf16.msra.mxu0 %v358
  %520 = vmatprep.subr.bf16.mxu0 0
  %521 = vmatpush2.bf16.msra.mxu0 0
  %522 = vmatprep.subr.bf16.mxu0 0
  %523 = vmatpush2.bf16.msra.mxu0 0
  %524 = vmatprep.subr.bf16.mxu0 0
  %525 = vmatpush2.bf16.msra.mxu0 0
  %526 = vmatprep.subr.bf16.mxu0 0
  %527 = vmatpush2.bf16.msra.mxu0 0
  %528 = vmatprep.subr.bf16.mxu0 0
  %529 = vmatpush2.bf16.msra.mxu0 0
  %530 = vmatprep.subr.bf16.mxu0 0
  %531 = vmatpush2.bf16.msra.mxu0 0
  %532 = vmatprep.subr.bf16.mxu0 0
  %533 = vmatpush2.bf16.msra.mxu0 0
  %534 = vmatprep.subr.bf16.mxu0 0
  %535 = vmatpush2.bf16.msra.mxu0 0
  %536 = vmatprep.mubr.bf16.mxu0 0
  %537 = vmatmul.mubr.bf16.gmra.mxu0 %v150
  %v538 = vpop.f32.mrf.mxu0
  %v539 = vadd.f32 %v490, %v538
  %v540 = vpop.f32.mrf.mxu0
  %v541 = vpop.f32.mrf.mxu0
  %v542 = vadd.f32 %v493, %v541
  %v543 = vpop.f32.mrf.mxu0
  %544 = vmatprep.mubr.bf16.mxu0 0
  %545 = vmatmul.mubr.bf16.gmra.mxu0 %v155
  %v546 = vpop.f32.mrf.mxu0
  %v547 = vadd.f32 %v498, %v546
  %v548 = vpop.f32.mrf.mxu0
  %v549 = vpop.f32.mrf.mxu0
  %v550 = vadd.f32 %v501, %v549
  %v551 = vpop.f32.mrf.mxu0
  %552 = vdwg.mxu0
  %v553 = vmax.f32 %v539, 0.0
  %v554 = vmax.f32 %v542, 0.0
  %v555 = vmax.f32 %v547, 0.0
  %v556 = vmax.f32 %v550, 0.0
  %v557 = vpack.c.bf16 %v554, %v553
  %v558 = vpack.c.bf16 %v556, %v555
  %v561 = vunpack.c.l.b16 %v557
  %v562 = vunpack.c.h.b16 %v557
  %v563 = vunpack.c.l.b16 %v558
  %v564 = vunpack.c.h.b16 %v558
  %v565 = vpack.c.b16 %v561, %v561
  %v566 = vpack.c.b16 %v562, %v562
  %v567 = vpack.c.b16 %v563, %v563
  %v568 = vpack.c.b16 %v564, %v564
  %573 = vst [vmem:[%s3] sm:$0xf] %v565
  %574 = vst [vmem:[%s3 + $0x4] sm:$0xf] %v566
  %575 = vst [vmem:[%s3 + $0x8] sm:$0xf] %v567
  %576 = vst [vmem:[%s3 + $0xc] sm:$0xf] %v568
  // Predicated region
  $region14: #{_lambda_.12} parent=0 // pred_check
    _
  $region15: #{_lambda_.12} parent=0 // pred_check_branch
    %578 = sbr.rel (0) target = $region17
  $region16: #{_lambda_.12} parent=0 // pred_region
    _
  $region17: #{_lambda_.12} parent=0 // pred_fallthru
    _
  // Predicated region
  $region18: #{_lambda_.12} parent=0 // pred_check
    _
  $region19: #{_lambda_.12} parent=0 // pred_check_branch
    %580 = sbr.rel (0) target = $region21
  $region20: #{_lambda_.12} parent=0 // pred_region
    _
  $region21: #{_lambda_.12} parent=0 // pred_fallthru
    _

// kernel: _lambda_.13
$region0: #{_lambda_.13}
  #allocation0 [shape = 'u32[]', space=smem, size = 0x4, offset = 0x4, fixed_abs, tag = 'smem constant byte address 0x4 - core index']
  #allocation1 [shape = 'u32[144,128]{1,0:T(1,128)}', space=vmem, size = 0x12000, scoped, tag = 'internal scratch']
  %s0 = inlined_call_operand.vmem [shape: bf16[32,640], index: 0, kind: input, shape index: {}]
  %s1 = inlined_call_operand.vmem [shape: bf16[640,128], index: 1, kind: input, shape index: {}]
  %s2 = inlined_call_operand.vmem [shape: f32[1,128], index: 2, kind: input, shape index: {}]
  %s3 = inlined_call_operand.vmem [shape: bf16[32,128], index: 3, kind: input, shape index: {}]
  %s4 = inlined_call_operand.vmem [shape: bf16[32,128], index: 4, kind: output, shape index: {}]
  %s5 = sld [smem:[#allocation0]]
  $region26: #{_lambda_.13} parent=0
    _
  %s7 = ssub.s32 1, %s5
  %s8 = scalar_select 0, %s7, %s5
  // Predicated region
  $region2: #{_lambda_.13} parent=0 // pred_check
    _
  $region3: #{_lambda_.13} parent=0 // pred_check_branch
    %10 = sbr.rel (0) target = $region5
  $region4: #{_lambda_.13} parent=0 // pred_region
    _
  $region5: #{_lambda_.13} parent=0 // pred_fallthru
    _
  // Predicated region
  $region6: #{_lambda_.13} parent=0 // pred_check
    _
  $region7: #{_lambda_.13} parent=0 // pred_check_branch
    %12 = sbr.rel (0) target = $region9
  $region8: #{_lambda_.13} parent=0 // pred_region
    _
  $region9: #{_lambda_.13} parent=0 // pred_fallthru
    _
  // Predicated region
  $region10: #{_lambda_.13} parent=0 // pred_check
    _
  $region11: #{_lambda_.13} parent=0 // pred_check_branch
    %14 = sbr.rel (0) target = $region13
  $region12: #{_lambda_.13} parent=0 // pred_region
    _
  $region13: #{_lambda_.13} parent=0 // pred_fallthru
    _
  // Predicated region
  $region14: #{_lambda_.13} parent=0 // pred_check
    _
  $region15: #{_lambda_.13} parent=0 // pred_check_branch
    %16 = sbr.rel (0) target = $region17
  $region16: #{_lambda_.13} parent=0 // pred_region
    _
  $region17: #{_lambda_.13} parent=0 // pred_fallthru
    _
  %v18 = vld [vmem:[%s0] sm:$0xff]
  %v19 = vld [vmem:[%s0 + $0x8] sm:$0xff]
  %v20 = vld [vmem:[%s0 + $0x10] sm:$0xf]
  %v21 = vld [vmem:[%s0 + $0x14] sm:$0xff]
  %v22 = vld [vmem:[%s0 + $0x1c] sm:$0xff]
  %v23 = vld [vmem:[%s0 + $0x24] sm:$0xf]
  %v24 = vld [vmem:[%s0 + $0x28] sm:$0xff]
  %v25 = vld [vmem:[%s0 + $0x30] sm:$0xff]
  %v26 = vld [vmem:[%s0 + $0x38] sm:$0xf]
  %v27 = vld [vmem:[%s0 + $0x3c] sm:$0xff]
  %v28 = vld [vmem:[%s0 + $0x44] sm:$0xff]
  %v29 = vld [vmem:[%s0 + $0x4c] sm:$0xf]
  %v30 = vld [vmem:[%s1] sm:$0xf]
  %v31 = vld [vmem:[%s1 + $0x4] sm:$0xf]
  %v32 = vld [vmem:[%s1 + $0x8] sm:$0xf]
  %v33 = vld [vmem:[%s1 + $0xc] sm:$0xf]
  %v34 = vld [vmem:[%s1 + $0x10] sm:$0xf]
  %v35 = vld [vmem:[%s1 + $0x14] sm:$0xf]
  %v36 = vld [vmem:[%s1 + $0x18] sm:$0xf]
  %v37 = vld [vmem:[%s1 + $0x1c] sm:$0xf]
  %v38 = vld [vmem:[%s1 + $0x20] sm:$0xf]
  %v39 = vld [vmem:[%s1 + $0x24] sm:$0xf]
  %v40 = vld [vmem:[%s1 + $0x28] sm:$0xf]
  %v41 = vld [vmem:[%s1 + $0x2c] sm:$0xf]
  %v42 = vld [vmem:[%s1 + $0x30] sm:$0xf]
  %v43 = vld [vmem:[%s1 + $0x34] sm:$0xf]
  %v44 = vld [vmem:[%s1 + $0x38] sm:$0xf]
  %v45 = vld [vmem:[%s1 + $0x3c] sm:$0xf]
  %v46 = vld [vmem:[%s1 + $0x40] sm:$0xf]
  %v47 = vld [vmem:[%s1 + $0x44] sm:$0xf]
  %v48 = vld [vmem:[%s1 + $0x48] sm:$0xf]
  %v49 = vld [vmem:[%s1 + $0x4c] sm:$0xf]
  %v50 = vld [vmem:[%s1 + $0x50] sm:$0xf]
  %v51 = vld [vmem:[%s1 + $0x54] sm:$0xf]
  %v52 = vld [vmem:[%s1 + $0x58] sm:$0xf]
  %v53 = vld [vmem:[%s1 + $0x5c] sm:$0xf]
  %v54 = vld [vmem:[%s1 + $0x60] sm:$0xf]
  %v55 = vld [vmem:[%s1 + $0x64] sm:$0xf]
  %v56 = vld [vmem:[%s1 + $0x68] sm:$0xf]
  %v57 = vld [vmem:[%s1 + $0x6c] sm:$0xf]
  %v58 = vld [vmem:[%s1 + $0x70] sm:$0xf]
  %v59 = vld [vmem:[%s1 + $0x74] sm:$0xf]
  %v60 = vld [vmem:[%s1 + $0x78] sm:$0xf]
  %v61 = vld [vmem:[%s1 + $0x7c] sm:$0xf]
  %v62 = vld [vmem:[%s1 + $0x80] sm:$0xf]
  %v63 = vld [vmem:[%s1 + $0x84] sm:$0xf]
  %v64 = vld [vmem:[%s1 + $0x88] sm:$0xf]
  %v65 = vld [vmem:[%s1 + $0x8c] sm:$0xf]
  %v66 = vld [vmem:[%s1 + $0x90] sm:$0xf]
  %v67 = vld [vmem:[%s1 + $0x94] sm:$0xf]
  %v68 = vld [vmem:[%s1 + $0x98] sm:$0xf]
  %v69 = vld [vmem:[%s1 + $0x9c] sm:$0xf]
  %v70 = vld [vmem:[%s1 + $0xa0] sm:$0xf]
  %v71 = vld [vmem:[%s1 + $0xa4] sm:$0xf]
  %v72 = vld [vmem:[%s1 + $0xa8] sm:$0xf]
  %v73 = vld [vmem:[%s1 + $0xac] sm:$0xf]
  %v74 = vld [vmem:[%s1 + $0xb0] sm:$0xf]
  %v75 = vld [vmem:[%s1 + $0xb4] sm:$0xf]
  %v76 = vld [vmem:[%s1 + $0xb8] sm:$0xf]
  %v77 = vld [vmem:[%s1 + $0xbc] sm:$0xf]
  %v78 = vld [vmem:[%s1 + $0xc0] sm:$0xf]
  %v79 = vld [vmem:[%s1 + $0xc4] sm:$0xf]
  %v80 = vld [vmem:[%s1 + $0xc8] sm:$0xf]
  %v81 = vld [vmem:[%s1 + $0xcc] sm:$0xf]
  %v82 = vld [vmem:[%s1 + $0xd0] sm:$0xf]
  %v83 = vld [vmem:[%s1 + $0xd4] sm:$0xf]
  %v84 = vld [vmem:[%s1 + $0xd8] sm:$0xf]
  %v85 = vld [vmem:[%s1 + $0xdc] sm:$0xf]
  %v86 = vld [vmem:[%s1 + $0xe0] sm:$0xf]
  %v87 = vld [vmem:[%s1 + $0xe4] sm:$0xf]
  %v88 = vld [vmem:[%s1 + $0xe8] sm:$0xf]
  %v89 = vld [vmem:[%s1 + $0xec] sm:$0xf]
  %v90 = vld [vmem:[%s1 + $0xf0] sm:$0xf]
  %v91 = vld [vmem:[%s1 + $0xf4] sm:$0xf]
  %v92 = vld [vmem:[%s1 + $0xf8] sm:$0xf]
  %v93 = vld [vmem:[%s1 + $0xfc] sm:$0xf]
  %v94 = vld [vmem:[%s1 + $0x100] sm:$0xf]
  %v95 = vld [vmem:[%s1 + $0x104] sm:$0xf]
  %v96 = vld [vmem:[%s1 + $0x108] sm:$0xf]
  %v97 = vld [vmem:[%s1 + $0x10c] sm:$0xf]
  %v98 = vld [vmem:[%s1 + $0x110] sm:$0xf]
  %v99 = vld [vmem:[%s1 + $0x114] sm:$0xf]
  %v100 = vld [vmem:[%s1 + $0x118] sm:$0xf]
  %v101 = vld [vmem:[%s1 + $0x11c] sm:$0xf]
  %v102 = vld [vmem:[%s1 + $0x120] sm:$0xf]
  %v103 = vld [vmem:[%s1 + $0x124] sm:$0xf]
  %v104 = vld [vmem:[%s1 + $0x128] sm:$0xf]
  %v105 = vld [vmem:[%s1 + $0x12c] sm:$0xf]
  %v106 = vld [vmem:[%s1 + $0x130] sm:$0xf]
  %v107 = vld [vmem:[%s1 + $0x134] sm:$0xf]
  %v108 = vld [vmem:[%s1 + $0x138] sm:$0xf]
  %v109 = vld [vmem:[%s1 + $0x13c] sm:$0xf]
  %v110 = vld [vmem:[%s2] sm:$0x1]
  %v112 = vlaneseq
  %v113 = vshrl.u32 %v112, 7
  %v114 = vsub.s32 0, %v113
  %v115 = vrot.slane %v110, %v114
  %v129 = vunpack.c.l.b16 %v18
  %v130 = vunpack.c.h.b16 %v18
  %v131 = vunpack.c.l.b16 %v19
  %v132 = vunpack.c.h.b16 %v19
  %v133 = vunpack.c.l.b16 %v20
  %v134 = vunpack.c.l.b16 %v21
  %v135 = vunpack.c.h.b16 %v21
  %v136 = vunpack.c.l.b16 %v22
  %v137 = vunpack.c.h.b16 %v22
  %v138 = vunpack.c.l.b16 %v23
  %v139 = vunpack.c.l.b16 %v24
  %v140 = vunpack.c.h.b16 %v24
  %v141 = vunpack.c.l.b16 %v25
  %v142 = vunpack.c.h.b16 %v25
  %v143 = vunpack.c.l.b16 %v26
  %v144 = vunpack.c.l.b16 %v27
  %v145 = vunpack.c.h.b16 %v27
  %v146 = vunpack.c.l.b16 %v28
  %v147 = vunpack.c.h.b16 %v28
  %v148 = vunpack.c.l.b16 %v29
  %v149 = vpack.c.b16 %v134, %v129
  %v150 = vpack.c.b16 %v135, %v130
  %v151 = vpack.c.b16 %v136, %v131
  %v152 = vpack.c.b16 %v137, %v132
  %v153 = vpack.c.b16 %v138, %v133
  %v154 = vpack.c.b16 %v144, %v139
  %v155 = vpack.c.b16 %v145, %v140
  %v156 = vpack.c.b16 %v146, %v141
  %v157 = vpack.c.b16 %v147, %v142
  %v158 = vpack.c.b16 %v148, %v143
  %v249 = vunpack.c.l.b16 %v30
  %v250 = vunpack.c.l.b16 %v31
  %v251 = vunpack.c.l.b16 %v32
  %v252 = vunpack.c.l.b16 %v33
  %v253 = vunpack.c.l.b16 %v34
  %v254 = vunpack.c.l.b16 %v35
  %v255 = vunpack.c.l.b16 %v36
  %v256 = vunpack.c.l.b16 %v37
  %v257 = vunpack.c.l.b16 %v38
  %v258 = vunpack.c.l.b16 %v39
  %v259 = vunpack.c.l.b16 %v40
  %v260 = vunpack.c.l.b16 %v41
  %v261 = vunpack.c.l.b16 %v42
  %v262 = vunpack.c.l.b16 %v43
  %v263 = vunpack.c.l.b16 %v44
  %v264 = vunpack.c.l.b16 %v45
  %v265 = vunpack.c.l.b16 %v46
  %v266 = vunpack.c.l.b16 %v47
  %v267 = vunpack.c.l.b16 %v48
  %v268 = vunpack.c.l.b16 %v49
  %v269 = vunpack.c.l.b16 %v50
  %v270 = vunpack.c.l.b16 %v51
  %v271 = vunpack.c.l.b16 %v52
  %v272 = vunpack.c.l.b16 %v53
  %v273 = vunpack.c.l.b16 %v54
  %v274 = vunpack.c.l.b16 %v55
  %v275 = vunpack.c.l.b16 %v56
  %v276 = vunpack.c.l.b16 %v57
  %v277 = vunpack.c.l.b16 %v58
  %v278 = vunpack.c.l.b16 %v59
  %v279 = vunpack.c.l.b16 %v60
  %v280 = vunpack.c.l.b16 %v61
  %v281 = vunpack.c.l.b16 %v62
  %v282 = vunpack.c.l.b16 %v63
  %v283 = vunpack.c.l.b16 %v64
  %v284 = vunpack.c.l.b16 %v65
  %v285 = vunpack.c.l.b16 %v66
  %v286 = vunpack.c.l.b16 %v67
  %v287 = vunpack.c.l.b16 %v68
  %v288 = vunpack.c.l.b16 %v69
  %v289 = vunpack.c.l.b16 %v70
  %v290 = vunpack.c.l.b16 %v71
  %v291 = vunpack.c.l.b16 %v72
  %v292 = vunpack.c.l.b16 %v73
  %v293 = vunpack.c.l.b16 %v74
  %v294 = vunpack.c.l.b16 %v75
  %v295 = vunpack.c.l.b16 %v76
  %v296 = vunpack.c.l.b16 %v77
  %v297 = vunpack.c.l.b16 %v78
  %v298 = vunpack.c.l.b16 %v79
  %v299 = vunpack.c.l.b16 %v80
  %v300 = vunpack.c.l.b16 %v81
  %v301 = vunpack.c.l.b16 %v82
  %v302 = vunpack.c.l.b16 %v83
  %v303 = vunpack.c.l.b16 %v84
  %v304 = vunpack.c.l.b16 %v85
  %v305 = vunpack.c.l.b16 %v86
  %v306 = vunpack.c.l.b16 %v87
  %v307 = vunpack.c.l.b16 %v88
  %v308 = vunpack.c.l.b16 %v89
  %v309 = vunpack.c.l.b16 %v90
  %v310 = vunpack.c.l.b16 %v91
  %v311 = vunpack.c.l.b16 %v92
  %v312 = vunpack.c.l.b16 %v93
  %v313 = vunpack.c.l.b16 %v94
  %v314 = vunpack.c.l.b16 %v95
  %v315 = vunpack.c.l.b16 %v96
  %v316 = vunpack.c.l.b16 %v97
  %v317 = vunpack.c.l.b16 %v98
  %v318 = vunpack.c.l.b16 %v99
  %v319 = vunpack.c.l.b16 %v100
  %v320 = vunpack.c.l.b16 %v101
  %v321 = vunpack.c.l.b16 %v102
  %v322 = vunpack.c.l.b16 %v103
  %v323 = vunpack.c.l.b16 %v104
  %v324 = vunpack.c.l.b16 %v105
  %v325 = vunpack.c.l.b16 %v106
  %v326 = vunpack.c.l.b16 %v107
  %v327 = vunpack.c.l.b16 %v108
  %v328 = vunpack.c.l.b16 %v109
  %v329 = vpack.c.b16 %v250, %v249
  %v330 = vpack.c.b16 %v252, %v251
  %v331 = vpack.c.b16 %v254, %v253
  %v332 = vpack.c.b16 %v256, %v255
  %v333 = vpack.c.b16 %v258, %v257
  %v334 = vpack.c.b16 %v260, %v259
  %v335 = vpack.c.b16 %v262, %v261
  %v336 = vpack.c.b16 %v264, %v263
  %v337 = vpack.c.b16 %v266, %v265
  %v338 = vpack.c.b16 %v268, %v267
  %v339 = vpack.c.b16 %v270, %v269
  %v340 = vpack.c.b16 %v272, %v271
  %v341 = vpack.c.b16 %v274, %v273
  %v342 = vpack.c.b16 %v276, %v275
  %v343 = vpack.c.b16 %v278, %v277
  %v344 = vpack.c.b16 %v280, %v279
  %v345 = vpack.c.b16 %v282, %v281
  %v346 = vpack.c.b16 %v284, %v283
  %v347 = vpack.c.b16 %v286, %v285
  %v348 = vpack.c.b16 %v288, %v287
  %v349 = vpack.c.b16 %v290, %v289
  %v350 = vpack.c.b16 %v292, %v291
  %v351 = vpack.c.b16 %v294, %v293
  %v352 = vpack.c.b16 %v296, %v295
  %v353 = vpack.c.b16 %v298, %v297
  %v354 = vpack.c.b16 %v300, %v299
  %v355 = vpack.c.b16 %v302, %v301
  %v356 = vpack.c.b16 %v304, %v303
  %v357 = vpack.c.b16 %v306, %v305
  %v358 = vpack.c.b16 %v308, %v307
  %v359 = vpack.c.b16 %v310, %v309
  %v360 = vpack.c.b16 %v312, %v311
  %v361 = vpack.c.b16 %v314, %v313
  %v362 = vpack.c.b16 %v316, %v315
  %v363 = vpack.c.b16 %v318, %v317
  %v364 = vpack.c.b16 %v320, %v319
  %v365 = vpack.c.b16 %v322, %v321
  %v366 = vpack.c.b16 %v324, %v323
  %v367 = vpack.c.b16 %v326, %v325
  %v368 = vpack.c.b16 %v328, %v327
  %409 = vmatprep.subr.bf16.mxu0 0
  %410 = vmatpush1.bf16.msra.mxu0 %v336
  %411 = vmatprep.subr.bf16.mxu0 0
  %412 = vmatpush1.bf16.msra.mxu0 %v335
  %413 = vmatprep.subr.bf16.mxu0 0
  %414 = vmatpush1.bf16.msra.mxu0 %v334
  %415 = vmatprep.subr.bf16.mxu0 0
  %416 = vmatpush1.bf16.msra.mxu0 %v333
  %417 = vmatprep.subr.bf16.mxu0 0
  %418 = vmatpush1.bf16.msra.mxu0 %v332
  %419 = vmatprep.subr.bf16.mxu0 0
  %420 = vmatpush1.bf16.msra.mxu0 %v331
  %421 = vmatprep.subr.bf16.mxu0 0
  %422 = vmatpush1.bf16.msra.mxu0 %v330
  %423 = vmatprep.subr.bf16.mxu0 0
  %424 = vmatpush1.bf16.msra.mxu0 %v329
  %425 = vmatprep.subr.bf16.mxu0 0
  %426 = vmatpush2.bf16.msra.mxu0 %v344
  %427 = vmatprep.subr.bf16.mxu0 0
  %428 = vmatpush2.bf16.msra.mxu0 %v343
  %429 = vmatprep.subr.bf16.mxu0 0
  %430 = vmatpush2.bf16.msra.mxu0 %v342
  %431 = vmatprep.subr.bf16.mxu0 0
  %432 = vmatpush2.bf16.msra.mxu0 %v341
  %433 = vmatprep.subr.bf16.mxu0 0
  %434 = vmatpush2.bf16.msra.mxu0 %v340
  %435 = vmatprep.subr.bf16.mxu0 0
  %436 = vmatpush2.bf16.msra.mxu0 %v339
  %437 = vmatprep.subr.bf16.mxu0 0
  %438 = vmatpush2.bf16.msra.mxu0 %v338
  %439 = vmatprep.subr.bf16.mxu0 0
  %440 = vmatpush2.bf16.msra.mxu0 %v337
  %441 = vmatprep.mubr.bf16.mxu0 %v150
  %442 = vmatmul.mubr.bf16.gmra.mxu0 %v149
  %v443 = vpop.f32.mrf.mxu0
  %v444 = vadd.f32 %v115, %v443
  %v445 = vpop.f32.mrf.mxu0
  %v446 = vpop.f32.mrf.mxu0
  %v447 = vadd.f32 %v115, %v446
  %v448 = vpop.f32.mrf.mxu0
  %449 = vmatprep.mubr.bf16.mxu0 %v155
  %450 = vmatmul.mubr.bf16.gmra.mxu0 %v154
  %v451 = vpop.f32.mrf.mxu0
  %v452 = vadd.f32 %v115, %v451
  %v453 = vpop.f32.mrf.mxu0
  %v454 = vpop.f32.mrf.mxu0
  %v455 = vadd.f32 %v115, %v454
  %v456 = vpop.f32.mrf.mxu0
  %457 = vdwg.mxu0
  %458 = vmatprep.subr.bf16.mxu0 0
  %459 = vmatpush1.bf16.msra.mxu0 %v352
  %460 = vmatprep.subr.bf16.mxu0 0
  %461 = vmatpush1.bf16.msra.mxu0 %v351
  %462 = vmatprep.subr.bf16.mxu0 0
  %463 = vmatpush1.bf16.msra.mxu0 %v350
  %464 = vmatprep.subr.bf16.mxu0 0
  %465 = vmatpush1.bf16.msra.mxu0 %v349
  %466 = vmatprep.subr.bf16.mxu0 0
  %467 = vmatpush1.bf16.msra.mxu0 %v348
  %468 = vmatprep.subr.bf16.mxu0 0
  %469 = vmatpush1.bf16.msra.mxu0 %v347
  %470 = vmatprep.subr.bf16.mxu0 0
  %471 = vmatpush1.bf16.msra.mxu0 %v346
  %472 = vmatprep.subr.bf16.mxu0 0
  %473 = vmatpush1.bf16.msra.mxu0 %v345
  %474 = vmatprep.subr.bf16.mxu0 0
  %475 = vmatpush2.bf16.msra.mxu0 %v360
  %476 = vmatprep.subr.bf16.mxu0 0
  %477 = vmatpush2.bf16.msra.mxu0 %v359
  %478 = vmatprep.subr.bf16.mxu0 0
  %479 = vmatpush2.bf16.msra.mxu0 %v358
  %480 = vmatprep.subr.bf16.mxu0 0
  %481 = vmatpush2.bf16.msra.mxu0 %v357
  %482 = vmatprep.subr.bf16.mxu0 0
  %483 = vmatpush2.bf16.msra.mxu0 %v356
  %484 = vmatprep.subr.bf16.mxu0 0
  %485 = vmatpush2.bf16.msra.mxu0 %v355
  %486 = vmatprep.subr.bf16.mxu0 0
  %487 = vmatpush2.bf16.msra.mxu0 %v354
  %488 = vmatprep.subr.bf16.mxu0 0
  %489 = vmatpush2.bf16.msra.mxu0 %v353
  %490 = vmatprep.mubr.bf16.mxu0 %v152
  %491 = vmatmul.mubr.bf16.gmra.mxu0 %v151
  %v492 = vpop.f32.mrf.mxu0
  %v493 = vadd.f32 %v444, %v492
  %v494 = vpop.f32.mrf.mxu0
  %v495 = vpop.f32.mrf.mxu0
  %v496 = vadd.f32 %v447, %v495
  %v497 = vpop.f32.mrf.mxu0
  %498 = vmatprep.mubr.bf16.mxu0 %v157
  %499 = vmatmul.mubr.bf16.gmra.mxu0 %v156
  %v500 = vpop.f32.mrf.mxu0
  %v501 = vadd.f32 %v452, %v500
  %v502 = vpop.f32.mrf.mxu0
  %v503 = vpop.f32.mrf.mxu0
  %v504 = vadd.f32 %v455, %v503
  %v505 = vpop.f32.mrf.mxu0
  %506 = vdwg.mxu0
  %507 = vmatprep.subr.bf16.mxu0 0
  %508 = vmatpush1.bf16.msra.mxu0 %v368
  %509 = vmatprep.subr.bf16.mxu0 0
  %510 = vmatpush1.bf16.msra.mxu0 %v367
  %511 = vmatprep.subr.bf16.mxu0 0
  %512 = vmatpush1.bf16.msra.mxu0 %v366
  %513 = vmatprep.subr.bf16.mxu0 0
  %514 = vmatpush1.bf16.msra.mxu0 %v365
  %515 = vmatprep.subr.bf16.mxu0 0
  %516 = vmatpush1.bf16.msra.mxu0 %v364
  %517 = vmatprep.subr.bf16.mxu0 0
  %518 = vmatpush1.bf16.msra.mxu0 %v363
  %519 = vmatprep.subr.bf16.mxu0 0
  %520 = vmatpush1.bf16.msra.mxu0 %v362
  %521 = vmatprep.subr.bf16.mxu0 0
  %522 = vmatpush1.bf16.msra.mxu0 %v361
  %523 = vmatprep.subr.bf16.mxu0 0
  %524 = vmatpush2.bf16.msra.mxu0 0
  %525 = vmatprep.subr.bf16.mxu0 0
  %526 = vmatpush2.bf16.msra.mxu0 0
  %527 = vmatprep.subr.bf16.mxu0 0
  %528 = vmatpush2.bf16.msra.mxu0 0
  %529 = vmatprep.subr.bf16.mxu0 0
  %530 = vmatpush2.bf16.msra.mxu0 0
  %531 = vmatprep.subr.bf16.mxu0 0
  %532 = vmatpush2.bf16.msra.mxu0 0
  %533 = vmatprep.subr.bf16.mxu0 0
  %534 = vmatpush2.bf16.msra.mxu0 0
  %535 = vmatprep.subr.bf16.mxu0 0
  %536 = vmatpush2.bf16.msra.mxu0 0
  %537 = vmatprep.subr.bf16.mxu0 0
  %538 = vmatpush2.bf16.msra.mxu0 0
  %539 = vmatprep.mubr.bf16.mxu0 0
  %540 = vmatmul.mubr.bf16.gmra.mxu0 %v153
  %v541 = vpop.f32.mrf.mxu0
  %v542 = vadd.f32 %v493, %v541
  %v543 = vpop.f32.mrf.mxu0
  %v544 = vpop.f32.mrf.mxu0
  %v545 = vadd.f32 %v496, %v544
  %v546 = vpop.f32.mrf.mxu0
  %547 = vmatprep.mubr.bf16.mxu0 0
  %548 = vmatmul.mubr.bf16.gmra.mxu0 %v158
  %v549 = vpop.f32.mrf.mxu0
  %v550 = vadd.f32 %v501, %v549
  %v551 = vpop.f32.mrf.mxu0
  %v552 = vpop.f32.mrf.mxu0
  %v553 = vadd.f32 %v504, %v552
  %v554 = vpop.f32.mrf.mxu0
  %555 = vdwg.mxu0
  %v556 = vld [vmem:[%s3] sm:$0xf]
  %v557 = vld [vmem:[%s3 + $0x4] sm:$0xf]
  %v558 = vld [vmem:[%s3 + $0x8] sm:$0xf]
  %v559 = vld [vmem:[%s3 + $0xc] sm:$0xf]
  %v560 = vunpack.c.l.bf16 %v556
  %v561 = vunpack.c.l.bf16 %v557
  %v562 = vunpack.c.l.bf16 %v558
  %v563 = vunpack.c.l.bf16 %v559
  %v564 = vadd.f32 %v542, %v560
  %v565 = vadd.f32 %v545, %v561
  %v566 = vadd.f32 %v550, %v562
  %v567 = vadd.f32 %v553, %v563
  %v568 = vmax.f32 %v564, 0.0
  %v569 = vmax.f32 %v565, 0.0
  %v570 = vmax.f32 %v566, 0.0
  %v571 = vmax.f32 %v567, 0.0
  %v572 = vpack.c.bf16 %v569, %v568
  %v573 = vpack.c.bf16 %v571, %v570
  %v576 = vunpack.c.l.b16 %v572
  %v577 = vunpack.c.h.b16 %v572
  %v578 = vunpack.c.l.b16 %v573
  %v579 = vunpack.c.h.b16 %v573
  %v580 = vpack.c.b16 %v576, %v576
  %v581 = vpack.c.b16 %v577, %v577
  %v582 = vpack.c.b16 %v578, %v578
  %v583 = vpack.c.b16 %v579, %v579
  %588 = vst [vmem:[%s4] sm:$0xf] %v580
  %589 = vst [vmem:[%s4 + $0x4] sm:$0xf] %v581
  %590 = vst [vmem:[%s4 + $0x8] sm:$0xf] %v582
  %591 = vst [vmem:[%s4 + $0xc] sm:$0xf] %v583
  // Predicated region
  $region18: #{_lambda_.13} parent=0 // pred_check
    _
  $region19: #{_lambda_.13} parent=0 // pred_check_branch
    %593 = sbr.rel (0) target = $region21
  $region20: #{_lambda_.13} parent=0 // pred_region
    _
  $region21: #{_lambda_.13} parent=0 // pred_fallthru
    _
  // Predicated region
  $region22: #{_lambda_.13} parent=0 // pred_check
    _
  $region23: #{_lambda_.13} parent=0 // pred_check_branch
    %595 = sbr.rel (0) target = $region25
  $region24: #{_lambda_.13} parent=0 // pred_region
    _
  $region25: #{_lambda_.13} parent=0 // pred_fallthru
    _

// kernel: _lambda_.15
$region0: #{_lambda_.15}
  #allocation0 [shape = 'u32[]', space=smem, size = 0x4, offset = 0x4, fixed_abs, tag = 'smem constant byte address 0x4 - core index']
  #allocation1 [shape = 'u32[144,128]{1,0:T(1,128)}', space=vmem, size = 0x12000, scoped, tag = 'internal scratch']
  %s0 = inlined_call_operand.vmem [shape: bf16[8,640], index: 0, kind: input, shape index: {}]
  %s1 = inlined_call_operand.vmem [shape: bf16[640,128], index: 1, kind: input, shape index: {}]
  %s2 = inlined_call_operand.vmem [shape: f32[1,128], index: 2, kind: input, shape index: {}]
  %s3 = inlined_call_operand.vmem [shape: bf16[8,128], index: 3, kind: output, shape index: {}]
  %s4 = sld [smem:[#allocation0]]
  $region22: #{_lambda_.15} parent=0
    _
  %s6 = ssub.s32 1, %s4
  %s7 = scalar_select 0, %s6, %s4
  // Predicated region
  $region2: #{_lambda_.15} parent=0 // pred_check
    _
  $region3: #{_lambda_.15} parent=0 // pred_check_branch
    %9 = sbr.rel (0) target = $region5
  $region4: #{_lambda_.15} parent=0 // pred_region
    _
  $region5: #{_lambda_.15} parent=0 // pred_fallthru
    _
  // Predicated region
  $region6: #{_lambda_.15} parent=0 // pred_check
    _
  $region7: #{_lambda_.15} parent=0 // pred_check_branch
    %11 = sbr.rel (0) target = $region9
  $region8: #{_lambda_.15} parent=0 // pred_region
    _
  $region9: #{_lambda_.15} parent=0 // pred_fallthru
    _
  // Predicated region
  $region10: #{_lambda_.15} parent=0 // pred_check
    _
  $region11: #{_lambda_.15} parent=0 // pred_check_branch
    %13 = sbr.rel (0) target = $region13
  $region12: #{_lambda_.15} parent=0 // pred_region
    _
  $region13: #{_lambda_.15} parent=0 // pred_fallthru
    _
  %v15 = vld [vmem:[%s0] sm:$0xff]
  %v16 = vld [vmem:[%s0 + $0x8] sm:$0xff]
  %v17 = vld [vmem:[%s0 + $0x10] sm:$0xf]
  %v18 = vld [vmem:[%s1] sm:$0xf]
  %v19 = vld [vmem:[%s1 + $0x4] sm:$0xf]
  %v20 = vld [vmem:[%s1 + $0x8] sm:$0xf]
  %v21 = vld [vmem:[%s1 + $0xc] sm:$0xf]
  %v22 = vld [vmem:[%s1 + $0x10] sm:$0xf]
  %v23 = vld [vmem:[%s1 + $0x14] sm:$0xf]
  %v24 = vld [vmem:[%s1 + $0x18] sm:$0xf]
  %v25 = vld [vmem:[%s1 + $0x1c] sm:$0xf]
  %v26 = vld [vmem:[%s1 + $0x20] sm:$0xf]
  %v27 = vld [vmem:[%s1 + $0x24] sm:$0xf]
  %v28 = vld [vmem:[%s1 + $0x28] sm:$0xf]
  %v29 = vld [vmem:[%s1 + $0x2c] sm:$0xf]
  %v30 = vld [vmem:[%s1 + $0x30] sm:$0xf]
  %v31 = vld [vmem:[%s1 + $0x34] sm:$0xf]
  %v32 = vld [vmem:[%s1 + $0x38] sm:$0xf]
  %v33 = vld [vmem:[%s1 + $0x3c] sm:$0xf]
  %v34 = vld [vmem:[%s1 + $0x40] sm:$0xf]
  %v35 = vld [vmem:[%s1 + $0x44] sm:$0xf]
  %v36 = vld [vmem:[%s1 + $0x48] sm:$0xf]
  %v37 = vld [vmem:[%s1 + $0x4c] sm:$0xf]
  %v38 = vld [vmem:[%s1 + $0x50] sm:$0xf]
  %v39 = vld [vmem:[%s1 + $0x54] sm:$0xf]
  %v40 = vld [vmem:[%s1 + $0x58] sm:$0xf]
  %v41 = vld [vmem:[%s1 + $0x5c] sm:$0xf]
  %v42 = vld [vmem:[%s1 + $0x60] sm:$0xf]
  %v43 = vld [vmem:[%s1 + $0x64] sm:$0xf]
  %v44 = vld [vmem:[%s1 + $0x68] sm:$0xf]
  %v45 = vld [vmem:[%s1 + $0x6c] sm:$0xf]
  %v46 = vld [vmem:[%s1 + $0x70] sm:$0xf]
  %v47 = vld [vmem:[%s1 + $0x74] sm:$0xf]
  %v48 = vld [vmem:[%s1 + $0x78] sm:$0xf]
  %v49 = vld [vmem:[%s1 + $0x7c] sm:$0xf]
  %v50 = vld [vmem:[%s1 + $0x80] sm:$0xf]
  %v51 = vld [vmem:[%s1 + $0x84] sm:$0xf]
  %v52 = vld [vmem:[%s1 + $0x88] sm:$0xf]
  %v53 = vld [vmem:[%s1 + $0x8c] sm:$0xf]
  %v54 = vld [vmem:[%s1 + $0x90] sm:$0xf]
  %v55 = vld [vmem:[%s1 + $0x94] sm:$0xf]
  %v56 = vld [vmem:[%s1 + $0x98] sm:$0xf]
  %v57 = vld [vmem:[%s1 + $0x9c] sm:$0xf]
  %v58 = vld [vmem:[%s1 + $0xa0] sm:$0xf]
  %v59 = vld [vmem:[%s1 + $0xa4] sm:$0xf]
  %v60 = vld [vmem:[%s1 + $0xa8] sm:$0xf]
  %v61 = vld [vmem:[%s1 + $0xac] sm:$0xf]
  %v62 = vld [vmem:[%s1 + $0xb0] sm:$0xf]
  %v63 = vld [vmem:[%s1 + $0xb4] sm:$0xf]
  %v64 = vld [vmem:[%s1 + $0xb8] sm:$0xf]
  %v65 = vld [vmem:[%s1 + $0xbc] sm:$0xf]
  %v66 = vld [vmem:[%s1 + $0xc0] sm:$0xf]
  %v67 = vld [vmem:[%s1 + $0xc4] sm:$0xf]
  %v68 = vld [vmem:[%s1 + $0xc8] sm:$0xf]
  %v69 = vld [vmem:[%s1 + $0xcc] sm:$0xf]
  %v70 = vld [vmem:[%s1 + $0xd0] sm:$0xf]
  %v71 = vld [vmem:[%s1 + $0xd4] sm:$0xf]
  %v72 = vld [vmem:[%s1 + $0xd8] sm:$0xf]
  %v73 = vld [vmem:[%s1 + $0xdc] sm:$0xf]
  %v74 = vld [vmem:[%s1 + $0xe0] sm:$0xf]
  %v75 = vld [vmem:[%s1 + $0xe4] sm:$0xf]
  %v76 = vld [vmem:[%s1 + $0xe8] sm:$0xf]
  %v77 = vld [vmem:[%s1 + $0xec] sm:$0xf]
  %v78 = vld [vmem:[%s1 + $0xf0] sm:$0xf]
  %v79 = vld [vmem:[%s1 + $0xf4] sm:$0xf]
  %v80 = vld [vmem:[%s1 + $0xf8] sm:$0xf]
  %v81 = vld [vmem:[%s1 + $0xfc] sm:$0xf]
  %v82 = vld [vmem:[%s1 + $0x100] sm:$0xf]
  %v83 = vld [vmem:[%s1 + $0x104] sm:$0xf]
  %v84 = vld [vmem:[%s1 + $0x108] sm:$0xf]
  %v85 = vld [vmem:[%s1 + $0x10c] sm:$0xf]
  %v86 = vld [vmem:[%s1 + $0x110] sm:$0xf]
  %v87 = vld [vmem:[%s1 + $0x114] sm:$0xf]
  %v88 = vld [vmem:[%s1 + $0x118] sm:$0xf]
  %v89 = vld [vmem:[%s1 + $0x11c] sm:$0xf]
  %v90 = vld [vmem:[%s1 + $0x120] sm:$0xf]
  %v91 = vld [vmem:[%s1 + $0x124] sm:$0xf]
  %v92 = vld [vmem:[%s1 + $0x128] sm:$0xf]
  %v93 = vld [vmem:[%s1 + $0x12c] sm:$0xf]
  %v94 = vld [vmem:[%s1 + $0x130] sm:$0xf]
  %v95 = vld [vmem:[%s1 + $0x134] sm:$0xf]
  %v96 = vld [vmem:[%s1 + $0x138] sm:$0xf]
  %v97 = vld [vmem:[%s1 + $0x13c] sm:$0xf]
  %v98 = vld [vmem:[%s2] sm:$0x1]
  %v100 = vlaneseq
  %v101 = vshrl.u32 %v100, 7
  %v102 = vsub.s32 0, %v101
  %v103 = vrot.slane %v98, %v102
  %v108 = vunpack.c.l.b16 %v15
  %v109 = vunpack.c.h.b16 %v15
  %v110 = vunpack.c.l.b16 %v16
  %v111 = vunpack.c.h.b16 %v16
  %v112 = vunpack.c.l.b16 %v17
  %v113 = vpack.c.b16 %v108, %v108
  %v114 = vpack.c.b16 %v109, %v109
  %v115 = vpack.c.b16 %v110, %v110
  %v116 = vpack.c.b16 %v111, %v111
  %v117 = vpack.c.b16 %v112, %v112
  %v203 = vunpack.c.l.b16 %v18
  %v204 = vunpack.c.l.b16 %v19
  %v205 = vunpack.c.l.b16 %v20
  %v206 = vunpack.c.l.b16 %v21
  %v207 = vunpack.c.l.b16 %v22
  %v208 = vunpack.c.l.b16 %v23
  %v209 = vunpack.c.l.b16 %v24
  %v210 = vunpack.c.l.b16 %v25
  %v211 = vunpack.c.l.b16 %v26
  %v212 = vunpack.c.l.b16 %v27
  %v213 = vunpack.c.l.b16 %v28
  %v214 = vunpack.c.l.b16 %v29
  %v215 = vunpack.c.l.b16 %v30
  %v216 = vunpack.c.l.b16 %v31
  %v217 = vunpack.c.l.b16 %v32
  %v218 = vunpack.c.l.b16 %v33
  %v219 = vunpack.c.l.b16 %v34
  %v220 = vunpack.c.l.b16 %v35
  %v221 = vunpack.c.l.b16 %v36
  %v222 = vunpack.c.l.b16 %v37
  %v223 = vunpack.c.l.b16 %v38
  %v224 = vunpack.c.l.b16 %v39
  %v225 = vunpack.c.l.b16 %v40
  %v226 = vunpack.c.l.b16 %v41
  %v227 = vunpack.c.l.b16 %v42
  %v228 = vunpack.c.l.b16 %v43
  %v229 = vunpack.c.l.b16 %v44
  %v230 = vunpack.c.l.b16 %v45
  %v231 = vunpack.c.l.b16 %v46
  %v232 = vunpack.c.l.b16 %v47
  %v233 = vunpack.c.l.b16 %v48
  %v234 = vunpack.c.l.b16 %v49
  %v235 = vunpack.c.l.b16 %v50
  %v236 = vunpack.c.l.b16 %v51
  %v237 = vunpack.c.l.b16 %v52
  %v238 = vunpack.c.l.b16 %v53
  %v239 = vunpack.c.l.b16 %v54
  %v240 = vunpack.c.l.b16 %v55
  %v241 = vunpack.c.l.b16 %v56
  %v242 = vunpack.c.l.b16 %v57
  %v243 = vunpack.c.l.b16 %v58
  %v244 = vunpack.c.l.b16 %v59
  %v245 = vunpack.c.l.b16 %v60
  %v246 = vunpack.c.l.b16 %v61
  %v247 = vunpack.c.l.b16 %v62
  %v248 = vunpack.c.l.b16 %v63
  %v249 = vunpack.c.l.b16 %v64
  %v250 = vunpack.c.l.b16 %v65
  %v251 = vunpack.c.l.b16 %v66
  %v252 = vunpack.c.l.b16 %v67
  %v253 = vunpack.c.l.b16 %v68
  %v254 = vunpack.c.l.b16 %v69
  %v255 = vunpack.c.l.b16 %v70
  %v256 = vunpack.c.l.b16 %v71
  %v257 = vunpack.c.l.b16 %v72
  %v258 = vunpack.c.l.b16 %v73
  %v259 = vunpack.c.l.b16 %v74
  %v260 = vunpack.c.l.b16 %v75
  %v261 = vunpack.c.l.b16 %v76
  %v262 = vunpack.c.l.b16 %v77
  %v263 = vunpack.c.l.b16 %v78
  %v264 = vunpack.c.l.b16 %v79
  %v265 = vunpack.c.l.b16 %v80
  %v266 = vunpack.c.l.b16 %v81
  %v267 = vunpack.c.l.b16 %v82
  %v268 = vunpack.c.l.b16 %v83
  %v269 = vunpack.c.l.b16 %v84
  %v270 = vunpack.c.l.b16 %v85
  %v271 = vunpack.c.l.b16 %v86
  %v272 = vunpack.c.l.b16 %v87
  %v273 = vunpack.c.l.b16 %v88
  %v274 = vunpack.c.l.b16 %v89
  %v275 = vunpack.c.l.b16 %v90
  %v276 = vunpack.c.l.b16 %v91
  %v277 = vunpack.c.l.b16 %v92
  %v278 = vunpack.c.l.b16 %v93
  %v279 = vunpack.c.l.b16 %v94
  %v280 = vunpack.c.l.b16 %v95
  %v281 = vunpack.c.l.b16 %v96
  %v282 = vunpack.c.l.b16 %v97
  %v283 = vpack.c.b16 %v204, %v203
  %v284 = vpack.c.b16 %v206, %v205
  %v285 = vpack.c.b16 %v208, %v207
  %v286 = vpack.c.b16 %v210, %v209
  %v287 = vpack.c.b16 %v212, %v211
  %v288 = vpack.c.b16 %v214, %v213
  %v289 = vpack.c.b16 %v216, %v215
  %v290 = vpack.c.b16 %v218, %v217
  %v291 = vpack.c.b16 %v220, %v219
  %v292 = vpack.c.b16 %v222, %v221
  %v293 = vpack.c.b16 %v224, %v223
  %v294 = vpack.c.b16 %v226, %v225
  %v295 = vpack.c.b16 %v228, %v227
  %v296 = vpack.c.b16 %v230, %v229
  %v297 = vpack.c.b16 %v232, %v231
  %v298 = vpack.c.b16 %v234, %v233
  %v299 = vpack.c.b16 %v236, %v235
  %v300 = vpack.c.b16 %v238, %v237
  %v301 = vpack.c.b16 %v240, %v239
  %v302 = vpack.c.b16 %v242, %v241
  %v303 = vpack.c.b16 %v244, %v243
  %v304 = vpack.c.b16 %v246, %v245
  %v305 = vpack.c.b16 %v248, %v247
  %v306 = vpack.c.b16 %v250, %v249
  %v307 = vpack.c.b16 %v252, %v251
  %v308 = vpack.c.b16 %v254, %v253
  %v309 = vpack.c.b16 %v256, %v255
  %v310 = vpack.c.b16 %v258, %v257
  %v311 = vpack.c.b16 %v260, %v259
  %v312 = vpack.c.b16 %v262, %v261
  %v313 = vpack.c.b16 %v264, %v263
  %v314 = vpack.c.b16 %v266, %v265
  %v315 = vpack.c.b16 %v268, %v267
  %v316 = vpack.c.b16 %v270, %v269
  %v317 = vpack.c.b16 %v272, %v271
  %v318 = vpack.c.b16 %v274, %v273
  %v319 = vpack.c.b16 %v276, %v275
  %v320 = vpack.c.b16 %v278, %v277
  %v321 = vpack.c.b16 %v280, %v279
  %v322 = vpack.c.b16 %v282, %v281
  %363 = vmatprep.subr.bf16.mxu0 0
  %364 = vmatpush1.bf16.msra.mxu0 %v290
  %365 = vmatprep.subr.bf16.mxu0 0
  %366 = vmatpush1.bf16.msra.mxu0 %v289
  %367 = vmatprep.subr.bf16.mxu0 0
  %368 = vmatpush1.bf16.msra.mxu0 %v288
  %369 = vmatprep.subr.bf16.mxu0 0
  %370 = vmatpush1.bf16.msra.mxu0 %v287
  %371 = vmatprep.subr.bf16.mxu0 0
  %372 = vmatpush1.bf16.msra.mxu0 %v286
  %373 = vmatprep.subr.bf16.mxu0 0
  %374 = vmatpush1.bf16.msra.mxu0 %v285
  %375 = vmatprep.subr.bf16.mxu0 0
  %376 = vmatpush1.bf16.msra.mxu0 %v284
  %377 = vmatprep.subr.bf16.mxu0 0
  %378 = vmatpush1.bf16.msra.mxu0 %v283
  %379 = vmatprep.subr.bf16.mxu0 0
  %380 = vmatpush2.bf16.msra.mxu0 %v298
  %381 = vmatprep.subr.bf16.mxu0 0
  %382 = vmatpush2.bf16.msra.mxu0 %v297
  %383 = vmatprep.subr.bf16.mxu0 0
  %384 = vmatpush2.bf16.msra.mxu0 %v296
  %385 = vmatprep.subr.bf16.mxu0 0
  %386 = vmatpush2.bf16.msra.mxu0 %v295
  %387 = vmatprep.subr.bf16.mxu0 0
  %388 = vmatpush2.bf16.msra.mxu0 %v294
  %389 = vmatprep.subr.bf16.mxu0 0
  %390 = vmatpush2.bf16.msra.mxu0 %v293
  %391 = vmatprep.subr.bf16.mxu0 0
  %392 = vmatpush2.bf16.msra.mxu0 %v292
  %393 = vmatprep.subr.bf16.mxu0 0
  %394 = vmatpush2.bf16.msra.mxu0 %v291
  %395 = vmatprep.mubr.bf16.mxu0 %v114
  %396 = vmatmul.mubr.bf16.gmra.mxu0 %v113
  %v397 = vpop.f32.mrf.mxu0
  %v398 = vadd.f32 %v103, %v397
  %v399 = vpop.f32.mrf.mxu0
  %v400 = vpop.f32.mrf.mxu0
  %v401 = vpop.f32.mrf.mxu0
  %402 = vdwg.mxu0
  %403 = vmatprep.subr.bf16.mxu0 0
  %404 = vmatpush1.bf16.msra.mxu0 %v306
  %405 = vmatprep.subr.bf16.mxu0 0
  %406 = vmatpush1.bf16.msra.mxu0 %v305
  %407 = vmatprep.subr.bf16.mxu0 0
  %408 = vmatpush1.bf16.msra.mxu0 %v304
  %409 = vmatprep.subr.bf16.mxu0 0
  %410 = vmatpush1.bf16.msra.mxu0 %v303
  %411 = vmatprep.subr.bf16.mxu0 0
  %412 = vmatpush1.bf16.msra.mxu0 %v302
  %413 = vmatprep.subr.bf16.mxu0 0
  %414 = vmatpush1.bf16.msra.mxu0 %v301
  %415 = vmatprep.subr.bf16.mxu0 0
  %416 = vmatpush1.bf16.msra.mxu0 %v300
  %417 = vmatprep.subr.bf16.mxu0 0
  %418 = vmatpush1.bf16.msra.mxu0 %v299
  %419 = vmatprep.subr.bf16.mxu0 0
  %420 = vmatpush2.bf16.msra.mxu0 %v314
  %421 = vmatprep.subr.bf16.mxu0 0
  %422 = vmatpush2.bf16.msra.mxu0 %v313
  %423 = vmatprep.subr.bf16.mxu0 0
  %424 = vmatpush2.bf16.msra.mxu0 %v312
  %425 = vmatprep.subr.bf16.mxu0 0
  %426 = vmatpush2.bf16.msra.mxu0 %v311
  %427 = vmatprep.subr.bf16.mxu0 0
  %428 = vmatpush2.bf16.msra.mxu0 %v310
  %429 = vmatprep.subr.bf16.mxu0 0
  %430 = vmatpush2.bf16.msra.mxu0 %v309
  %431 = vmatprep.subr.bf16.mxu0 0
  %432 = vmatpush2.bf16.msra.mxu0 %v308
  %433 = vmatprep.subr.bf16.mxu0 0
  %434 = vmatpush2.bf16.msra.mxu0 %v307
  %435 = vmatprep.mubr.bf16.mxu0 %v116
  %436 = vmatmul.mubr.bf16.gmra.mxu0 %v115
  %v437 = vpop.f32.mrf.mxu0
  %v438 = vadd.f32 %v398, %v437
  %v439 = vpop.f32.mrf.mxu0
  %v440 = vpop.f32.mrf.mxu0
  %v441 = vpop.f32.mrf.mxu0
  %442 = vdwg.mxu0
  %443 = vmatprep.subr.bf16.mxu0 0
  %444 = vmatpush1.bf16.msra.mxu0 %v322
  %445 = vmatprep.subr.bf16.mxu0 0
  %446 = vmatpush1.bf16.msra.mxu0 %v321
  %447 = vmatprep.subr.bf16.mxu0 0
  %448 = vmatpush1.bf16.msra.mxu0 %v320
  %449 = vmatprep.subr.bf16.mxu0 0
  %450 = vmatpush1.bf16.msra.mxu0 %v319
  %451 = vmatprep.subr.bf16.mxu0 0
  %452 = vmatpush1.bf16.msra.mxu0 %v318
  %453 = vmatprep.subr.bf16.mxu0 0
  %454 = vmatpush1.bf16.msra.mxu0 %v317
  %455 = vmatprep.subr.bf16.mxu0 0
  %456 = vmatpush1.bf16.msra.mxu0 %v316
  %457 = vmatprep.subr.bf16.mxu0 0
  %458 = vmatpush1.bf16.msra.mxu0 %v315
  %459 = vmatprep.subr.bf16.mxu0 0
  %460 = vmatpush2.bf16.msra.mxu0 0
  %461 = vmatprep.subr.bf16.mxu0 0
  %462 = vmatpush2.bf16.msra.mxu0 0
  %463 = vmatprep.subr.bf16.mxu0 0
  %464 = vmatpush2.bf16.msra.mxu0 0
  %465 = vmatprep.subr.bf16.mxu0 0
  %466 = vmatpush2.bf16.msra.mxu0 0
  %467 = vmatprep.subr.bf16.mxu0 0
  %468 = vmatpush2.bf16.msra.mxu0 0
  %469 = vmatprep.subr.bf16.mxu0 0
  %470 = vmatpush2.bf16.msra.mxu0 0
  %471 = vmatprep.subr.bf16.mxu0 0
  %472 = vmatpush2.bf16.msra.mxu0 0
  %473 = vmatprep.subr.bf16.mxu0 0
  %474 = vmatpush2.bf16.msra.mxu0 0
  %475 = vmatprep.mubr.bf16.mxu0 0
  %476 = vmatmul.mubr.bf16.gmra.mxu0 %v117
  %v477 = vpop.f32.mrf.mxu0
  %v478 = vadd.f32 %v438, %v477
  %v479 = vpop.f32.mrf.mxu0
  %v480 = vpop.f32.mrf.mxu0
  %v481 = vpop.f32.mrf.mxu0
  %482 = vdwg.mxu0
  %v483 = vmax.f32 %v478, 0.0
  %v484 = vpack.c.bf16 %v483, %v483
  %485 = vst [vmem:[%s3] sm:$0xf] %v484
  // Predicated region
  $region14: #{_lambda_.15} parent=0 // pred_check
    _
  $region15: #{_lambda_.15} parent=0 // pred_check_branch
    %487 = sbr.rel (0) target = $region17
  $region16: #{_lambda_.15} parent=0 // pred_region
    _
  $region17: #{_lambda_.15} parent=0 // pred_fallthru
    _
  // Predicated region
  $region18: #{_lambda_.15} parent=0 // pred_check
    _
  $region19: #{_lambda_.15} parent=0 // pred_check_branch
    %489 = sbr.rel (0) target = $region21
  $region20: #{_lambda_.15} parent=0 // pred_region
    _
  $region21: #{_lambda_.15} parent=0 // pred_fallthru
    _

// kernel: _lambda_.14
$region0: #{_lambda_.14}
  #allocation0 [shape = 'u32[]', space=smem, size = 0x4, offset = 0x4, fixed_abs, tag = 'smem constant byte address 0x4 - core index']
  #allocation1 [shape = 'u32[144,128]{1,0:T(1,128)}', space=vmem, size = 0x12000, scoped, tag = 'internal scratch']
  %s0 = inlined_call_operand.vmem [shape: bf16[8,128], index: 0, kind: input, shape index: {}]
  %s1 = inlined_call_operand.vmem [shape: bf16[128,128], index: 1, kind: input, shape index: {}]
  %s2 = inlined_call_operand.vmem [shape: f32[1,128], index: 2, kind: input, shape index: {}]
  %s3 = inlined_call_operand.vmem [shape: bf16[8,128], index: 3, kind: output, shape index: {}]
  %s4 = sld [smem:[#allocation0]]
  $region22: #{_lambda_.14} parent=0
    _
  %s6 = ssub.s32 1, %s4
  %s7 = scalar_select 0, %s6, %s4
  // Predicated region
  $region2: #{_lambda_.14} parent=0 // pred_check
    _
  $region3: #{_lambda_.14} parent=0 // pred_check_branch
    %9 = sbr.rel (0) target = $region5
  $region4: #{_lambda_.14} parent=0 // pred_region
    _
  $region5: #{_lambda_.14} parent=0 // pred_fallthru
    _
  // Predicated region
  $region6: #{_lambda_.14} parent=0 // pred_check
    _
  $region7: #{_lambda_.14} parent=0 // pred_check_branch
    %11 = sbr.rel (0) target = $region9
  $region8: #{_lambda_.14} parent=0 // pred_region
    _
  $region9: #{_lambda_.14} parent=0 // pred_fallthru
    _
  // Predicated region
  $region10: #{_lambda_.14} parent=0 // pred_check
    _
  $region11: #{_lambda_.14} parent=0 // pred_check_branch
    %13 = sbr.rel (0) target = $region13
  $region12: #{_lambda_.14} parent=0 // pred_region
    _
  $region13: #{_lambda_.14} parent=0 // pred_fallthru
    _
  %v15 = vld [vmem:[%s0] sm:$0xf]
  %v16 = vld [vmem:[%s1] sm:$0xf]
  %v17 = vld [vmem:[%s1 + $0x4] sm:$0xf]
  %v18 = vld [vmem:[%s1 + $0x8] sm:$0xf]
  %v19 = vld [vmem:[%s1 + $0xc] sm:$0xf]
  %v20 = vld [vmem:[%s1 + $0x10] sm:$0xf]
  %v21 = vld [vmem:[%s1 + $0x14] sm:$0xf]
  %v22 = vld [vmem:[%s1 + $0x18] sm:$0xf]
  %v23 = vld [vmem:[%s1 + $0x1c] sm:$0xf]
  %v24 = vld [vmem:[%s1 + $0x20] sm:$0xf]
  %v25 = vld [vmem:[%s1 + $0x24] sm:$0xf]
  %v26 = vld [vmem:[%s1 + $0x28] sm:$0xf]
  %v27 = vld [vmem:[%s1 + $0x2c] sm:$0xf]
  %v28 = vld [vmem:[%s1 + $0x30] sm:$0xf]
  %v29 = vld [vmem:[%s1 + $0x34] sm:$0xf]
  %v30 = vld [vmem:[%s1 + $0x38] sm:$0xf]
  %v31 = vld [vmem:[%s1 + $0x3c] sm:$0xf]
  %v32 = vld [vmem:[%s2] sm:$0x1]
  %v34 = vlaneseq
  %v35 = vshrl.u32 %v34, 7
  %v36 = vsub.s32 0, %v35
  %v37 = vrot.slane %v32, %v36
  %v55 = vunpack.c.l.b16 %v16
  %v56 = vunpack.c.l.b16 %v17
  %v57 = vunpack.c.l.b16 %v18
  %v58 = vunpack.c.l.b16 %v19
  %v59 = vunpack.c.l.b16 %v20
  %v60 = vunpack.c.l.b16 %v21
  %v61 = vunpack.c.l.b16 %v22
  %v62 = vunpack.c.l.b16 %v23
  %v63 = vunpack.c.l.b16 %v24
  %v64 = vunpack.c.l.b16 %v25
  %v65 = vunpack.c.l.b16 %v26
  %v66 = vunpack.c.l.b16 %v27
  %v67 = vunpack.c.l.b16 %v28
  %v68 = vunpack.c.l.b16 %v29
  %v69 = vunpack.c.l.b16 %v30
  %v70 = vunpack.c.l.b16 %v31
  %v71 = vpack.c.b16 %v56, %v55
  %v72 = vpack.c.b16 %v58, %v57
  %v73 = vpack.c.b16 %v60, %v59
  %v74 = vpack.c.b16 %v62, %v61
  %v75 = vpack.c.b16 %v64, %v63
  %v76 = vpack.c.b16 %v66, %v65
  %v77 = vpack.c.b16 %v68, %v67
  %v78 = vpack.c.b16 %v70, %v69
  %87 = vmatprep.subr.bf16.mxu0 0
  %88 = vmatpush1.bf16.msra.mxu0 %v78
  %89 = vmatprep.subr.bf16.mxu0 0
  %90 = vmatpush1.bf16.msra.mxu0 %v77
  %91 = vmatprep.subr.bf16.mxu0 0
  %92 = vmatpush1.bf16.msra.mxu0 %v76
  %93 = vmatprep.subr.bf16.mxu0 0
  %94 = vmatpush1.bf16.msra.mxu0 %v75
  %95 = vmatprep.subr.bf16.mxu0 0
  %96 = vmatpush1.bf16.msra.mxu0 %v74
  %97 = vmatprep.subr.bf16.mxu0 0
  %98 = vmatpush1.bf16.msra.mxu0 %v73
  %99 = vmatprep.subr.bf16.mxu0 0
  %100 = vmatpush1.bf16.msra.mxu0 %v72
  %101 = vmatprep.subr.bf16.mxu0 0
  %102 = vmatpush1.bf16.msra.mxu0 %v71
  %103 = vmatprep.subr.bf16.mxu0 0
  %104 = vmatpush2.bf16.msra.mxu0 0
  %105 = vmatprep.subr.bf16.mxu0 0
  %106 = vmatpush2.bf16.msra.mxu0 0
  %107 = vmatprep.subr.bf16.mxu0 0
  %108 = vmatpush2.bf16.msra.mxu0 0
  %109 = vmatprep.subr.bf16.mxu0 0
  %110 = vmatpush2.bf16.msra.mxu0 0
  %111 = vmatprep.subr.bf16.mxu0 0
  %112 = vmatpush2.bf16.msra.mxu0 0
  %113 = vmatprep.subr.bf16.mxu0 0
  %114 = vmatpush2.bf16.msra.mxu0 0
  %115 = vmatprep.subr.bf16.mxu0 0
  %116 = vmatpush2.bf16.msra.mxu0 0
  %117 = vmatprep.subr.bf16.mxu0 0
  %118 = vmatpush2.bf16.msra.mxu0 0
  %119 = vmatprep.mubr.bf16.mxu0 0
  %120 = vmatmul.mubr.bf16.gmra.mxu0 %v15
  %v121 = vpop.f32.mrf.mxu0
  %v122 = vadd.f32 %v37, %v121
  %v123 = vpop.f32.mrf.mxu0
  %v124 = vpop.f32.mrf.mxu0
  %v125 = vpop.f32.mrf.mxu0
  %126 = vdwg.mxu0
  %v127 = vpack.c.bf16 %v122, %v122
  %128 = vst [vmem:[%s3] sm:$0xf] %v127
  // Predicated region
  $region14: #{_lambda_.14} parent=0 // pred_check
    _
  $region15: #{_lambda_.14} parent=0 // pred_check_branch
    %130 = sbr.rel (0) target = $region17
  $region16: #{_lambda_.14} parent=0 // pred_region
    _
  $region17: #{_lambda_.14} parent=0 // pred_fallthru
    _
  // Predicated region
  $region18: #{_lambda_.14} parent=0 // pred_check
    _
  $region19: #{_lambda_.14} parent=0 // pred_check_branch
    %132 = sbr.rel (0) target = $region21
  $region20: #{_lambda_.14} parent=0 // pred_region
    _
  $region21: #{_lambda_.14} parent=0 // pred_fallthru
    _

// kernel: _lambda_.16
$region0: #{_lambda_.16}
  #allocation0 [shape = 'u32[]', space=smem, size = 0x4, offset = 0x4, fixed_abs, tag = 'smem constant byte address 0x4 - core index']
  #allocation1 [shape = 'u32[144,128]{1,0:T(1,128)}', space=vmem, size = 0x12000, scoped, tag = 'internal scratch']
  %s0 = inlined_call_operand.vmem [shape: bf16[8,1152], index: 0, kind: input, shape index: {}]
  %s1 = inlined_call_operand.vmem [shape: bf16[1152,128], index: 1, kind: input, shape index: {}]
  %s2 = inlined_call_operand.vmem [shape: f32[1,128], index: 2, kind: input, shape index: {}]
  %s3 = inlined_call_operand.vmem [shape: bf16[8,128], index: 3, kind: input, shape index: {}]
  %s4 = inlined_call_operand.vmem [shape: bf16[8,128], index: 4, kind: output, shape index: {}]
  %s5 = sld [smem:[#allocation0]]
  $region26: #{_lambda_.16} parent=0
    _
  %s7 = ssub.s32 1, %s5
  %s8 = scalar_select 0, %s7, %s5
  // Predicated region
  $region2: #{_lambda_.16} parent=0 // pred_check
    _
  $region3: #{_lambda_.16} parent=0 // pred_check_branch
    %10 = sbr.rel (0) target = $region5
  $region4: #{_lambda_.16} parent=0 // pred_region
    _
  $region5: #{_lambda_.16} parent=0 // pred_fallthru
    _
  // Predicated region
  $region6: #{_lambda_.16} parent=0 // pred_check
    _
  $region7: #{_lambda_.16} parent=0 // pred_check_branch
    %12 = sbr.rel (0) target = $region9
  $region8: #{_lambda_.16} parent=0 // pred_region
    _
  $region9: #{_lambda_.16} parent=0 // pred_fallthru
    _
  // Predicated region
  $region10: #{_lambda_.16} parent=0 // pred_check
    _
  $region11: #{_lambda_.16} parent=0 // pred_check_branch
    %14 = sbr.rel (0) target = $region13
  $region12: #{_lambda_.16} parent=0 // pred_region
    _
  $region13: #{_lambda_.16} parent=0 // pred_fallthru
    _
  // Predicated region
  $region14: #{_lambda_.16} parent=0 // pred_check
    _
  $region15: #{_lambda_.16} parent=0 // pred_check_branch
    %16 = sbr.rel (0) target = $region17
  $region16: #{_lambda_.16} parent=0 // pred_region
    _
  $region17: #{_lambda_.16} parent=0 // pred_fallthru
    _
  %v18 = vld [vmem:[%s0] sm:$0xff]
  %v19 = vld [vmem:[%s0 + $0x8] sm:$0xff]
  %v20 = vld [vmem:[%s0 + $0x10] sm:$0xff]
  %v21 = vld [vmem:[%s0 + $0x18] sm:$0xff]
  %v22 = vld [vmem:[%s0 + $0x20] sm:$0xf]
  %v23 = vld [vmem:[%s1] sm:$0xf]
  %v24 = vld [vmem:[%s1 + $0x4] sm:$0xf]
  %v25 = vld [vmem:[%s1 + $0x8] sm:$0xf]
  %v26 = vld [vmem:[%s1 + $0xc] sm:$0xf]
  %v27 = vld [vmem:[%s1 + $0x10] sm:$0xf]
  %v28 = vld [vmem:[%s1 + $0x14] sm:$0xf]
  %v29 = vld [vmem:[%s1 + $0x18] sm:$0xf]
  %v30 = vld [vmem:[%s1 + $0x1c] sm:$0xf]
  %v31 = vld [vmem:[%s1 + $0x20] sm:$0xf]
  %v32 = vld [vmem:[%s1 + $0x24] sm:$0xf]
  %v33 = vld [vmem:[%s1 + $0x28] sm:$0xf]
  %v34 = vld [vmem:[%s1 + $0x2c] sm:$0xf]
  %v35 = vld [vmem:[%s1 + $0x30] sm:$0xf]
  %v36 = vld [vmem:[%s1 + $0x34] sm:$0xf]
  %v37 = vld [vmem:[%s1 + $0x38] sm:$0xf]
  %v38 = vld [vmem:[%s1 + $0x3c] sm:$0xf]
  %v39 = vld [vmem:[%s1 + $0x40] sm:$0xf]
  %v40 = vld [vmem:[%s1 + $0x44] sm:$0xf]
  %v41 = vld [vmem:[%s1 + $0x48] sm:$0xf]
  %v42 = vld [vmem:[%s1 + $0x4c] sm:$0xf]
  %v43 = vld [vmem:[%s1 + $0x50] sm:$0xf]
  %v44 = vld [vmem:[%s1 + $0x54] sm:$0xf]
  %v45 = vld [vmem:[%s1 + $0x58] sm:$0xf]
  %v46 = vld [vmem:[%s1 + $0x5c] sm:$0xf]
  %v47 = vld [vmem:[%s1 + $0x60] sm:$0xf]
  %v48 = vld [vmem:[%s1 + $0x64] sm:$0xf]
  %v49 = vld [vmem:[%s1 + $0x68] sm:$0xf]
  %v50 = vld [vmem:[%s1 + $0x6c] sm:$0xf]
  %v51 = vld [vmem:[%s1 + $0x70] sm:$0xf]
  %v52 = vld [vmem:[%s1 + $0x74] sm:$0xf]
  %v53 = vld [vmem:[%s1 + $0x78] sm:$0xf]
  %v54 = vld [vmem:[%s1 + $0x7c] sm:$0xf]
  %v55 = vld [vmem:[%s1 + $0x80] sm:$0xf]
  %v56 = vld [vmem:[%s1 + $0x84] sm:$0xf]
  %v57 = vld [vmem:[%s1 + $0x88] sm:$0xf]
  %v58 = vld [vmem:[%s1 + $0x8c] sm:$0xf]
  %v59 = vld [vmem:[%s1 + $0x90] sm:$0xf]
  %v60 = vld [vmem:[%s1 + $0x94] sm:$0xf]
  %v61 = vld [vmem:[%s1 + $0x98] sm:$0xf]
  %v62 = vld [vmem:[%s1 + $0x9c] sm:$0xf]
  %v63 = vld [vmem:[%s1 + $0xa0] sm:$0xf]
  %v64 = vld [vmem:[%s1 + $0xa4] sm:$0xf]
  %v65 = vld [vmem:[%s1 + $0xa8] sm:$0xf]
  %v66 = vld [vmem:[%s1 + $0xac] sm:$0xf]
  %v67 = vld [vmem:[%s1 + $0xb0] sm:$0xf]
  %v68 = vld [vmem:[%s1 + $0xb4] sm:$0xf]
  %v69 = vld [vmem:[%s1 + $0xb8] sm:$0xf]
  %v70 = vld [vmem:[%s1 + $0xbc] sm:$0xf]
  %v71 = vld [vmem:[%s1 + $0xc0] sm:$0xf]
  %v72 = vld [vmem:[%s1 + $0xc4] sm:$0xf]
  %v73 = vld [vmem:[%s1 + $0xc8] sm:$0xf]
  %v74 = vld [vmem:[%s1 + $0xcc] sm:$0xf]
  %v75 = vld [vmem:[%s1 + $0xd0] sm:$0xf]
  %v76 = vld [vmem:[%s1 + $0xd4] sm:$0xf]
  %v77 = vld [vmem:[%s1 + $0xd8] sm:$0xf]
  %v78 = vld [vmem:[%s1 + $0xdc] sm:$0xf]
  %v79 = vld [vmem:[%s1 + $0xe0] sm:$0xf]
  %v80 = vld [vmem:[%s1 + $0xe4] sm:$0xf]
  %v81 = vld [vmem:[%s1 + $0xe8] sm:$0xf]
  %v82 = vld [vmem:[%s1 + $0xec] sm:$0xf]
  %v83 = vld [vmem:[%s1 + $0xf0] sm:$0xf]
  %v84 = vld [vmem:[%s1 + $0xf4] sm:$0xf]
  %v85 = vld [vmem:[%s1 + $0xf8] sm:$0xf]
  %v86 = vld [vmem:[%s1 + $0xfc] sm:$0xf]
  %v87 = vld [vmem:[%s1 + $0x100] sm:$0xf]
  %v88 = vld [vmem:[%s1 + $0x104] sm:$0xf]
  %v89 = vld [vmem:[%s1 + $0x108] sm:$0xf]
  %v90 = vld [vmem:[%s1 + $0x10c] sm:$0xf]
  %v91 = vld [vmem:[%s1 + $0x110] sm:$0xf]
  %v92 = vld [vmem:[%s1 + $0x114] sm:$0xf]
  %v93 = vld [vmem:[%s1 + $0x118] sm:$0xf]
  %v94 = vld [vmem:[%s1 + $0x11c] sm:$0xf]
  %v95 = vld [vmem:[%s1 + $0x120] sm:$0xf]
  %v96 = vld [vmem:[%s1 + $0x124] sm:$0xf]
  %v97 = vld [vmem:[%s1 + $0x128] sm:$0xf]
  %v98 = vld [vmem:[%s1 + $0x12c] sm:$0xf]
  %v99 = vld [vmem:[%s1 + $0x130] sm:$0xf]
  %v100 = vld [vmem:[%s1 + $0x134] sm:$0xf]
  %v101 = vld [vmem:[%s1 + $0x138] sm:$0xf]
  %v102 = vld [vmem:[%s1 + $0x13c] sm:$0xf]
  %v103 = vld [vmem:[%s1 + $0x140] sm:$0xf]
  %v104 = vld [vmem:[%s1 + $0x144] sm:$0xf]
  %v105 = vld [vmem:[%s1 + $0x148] sm:$0xf]
  %v106 = vld [vmem:[%s1 + $0x14c] sm:$0xf]
  %v107 = vld [vmem:[%s1 + $0x150] sm:$0xf]
  %v108 = vld [vmem:[%s1 + $0x154] sm:$0xf]
  %v109 = vld [vmem:[%s1 + $0x158] sm:$0xf]
  %v110 = vld [vmem:[%s1 + $0x15c] sm:$0xf]
  %v111 = vld [vmem:[%s1 + $0x160] sm:$0xf]
  %v112 = vld [vmem:[%s1 + $0x164] sm:$0xf]
  %v113 = vld [vmem:[%s1 + $0x168] sm:$0xf]
  %v114 = vld [vmem:[%s1 + $0x16c] sm:$0xf]
  %v115 = vld [vmem:[%s1 + $0x170] sm:$0xf]
  %v116 = vld [vmem:[%s1 + $0x174] sm:$0xf]
  %v117 = vld [vmem:[%s1 + $0x178] sm:$0xf]
  %v118 = vld [vmem:[%s1 + $0x17c] sm:$0xf]
  %v119 = vld [vmem:[%s1 + $0x180] sm:$0xf]
  %v120 = vld [vmem:[%s1 + $0x184] sm:$0xf]
  %v121 = vld [vmem:[%s1 + $0x188] sm:$0xf]
  %v122 = vld [vmem:[%s1 + $0x18c] sm:$0xf]
  %v123 = vld [vmem:[%s1 + $0x190] sm:$0xf]
  %v124 = vld [vmem:[%s1 + $0x194] sm:$0xf]
  %v125 = vld [vmem:[%s1 + $0x198] sm:$0xf]
  %v126 = vld [vmem:[%s1 + $0x19c] sm:$0xf]
  %v127 = vld [vmem:[%s1 + $0x1a0] sm:$0xf]
  %v128 = vld [vmem:[%s1 + $0x1a4] sm:$0xf]
  %v129 = vld [vmem:[%s1 + $0x1a8] sm:$0xf]
  %v130 = vld [vmem:[%s1 + $0x1ac] sm:$0xf]
  %v131 = vld [vmem:[%s1 + $0x1b0] sm:$0xf]
  %v132 = vld [vmem:[%s1 + $0x1b4] sm:$0xf]
  %v133 = vld [vmem:[%s1 + $0x1b8] sm:$0xf]
  %v134 = vld [vmem:[%s1 + $0x1bc] sm:$0xf]
  %v135 = vld [vmem:[%s1 + $0x1c0] sm:$0xf]
  %v136 = vld [vmem:[%s1 + $0x1c4] sm:$0xf]
  %v137 = vld [vmem:[%s1 + $0x1c8] sm:$0xf]
  %v138 = vld [vmem:[%s1 + $0x1cc] sm:$0xf]
  %v139 = vld [vmem:[%s1 + $0x1d0] sm:$0xf]
  %v140 = vld [vmem:[%s1 + $0x1d4] sm:$0xf]
  %v141 = vld [vmem:[%s1 + $0x1d8] sm:$0xf]
  %v142 = vld [vmem:[%s1 + $0x1dc] sm:$0xf]
  %v143 = vld [vmem:[%s1 + $0x1e0] sm:$0xf]
  %v144 = vld [vmem:[%s1 + $0x1e4] sm:$0xf]
  %v145 = vld [vmem:[%s1 + $0x1e8] sm:$0xf]
  %v146 = vld [vmem:[%s1 + $0x1ec] sm:$0xf]
  %v147 = vld [vmem:[%s1 + $0x1f0] sm:$0xf]
  %v148 = vld [vmem:[%s1 + $0x1f4] sm:$0xf]
  %v149 = vld [vmem:[%s1 + $0x1f8] sm:$0xf]
  %v150 = vld [vmem:[%s1 + $0x1fc] sm:$0xf]
  %v151 = vld [vmem:[%s1 + $0x200] sm:$0xf]
  %v152 = vld [vmem:[%s1 + $0x204] sm:$0xf]
  %v153 = vld [vmem:[%s1 + $0x208] sm:$0xf]
  %v154 = vld [vmem:[%s1 + $0x20c] sm:$0xf]
  %v155 = vld [vmem:[%s1 + $0x210] sm:$0xf]
  %v156 = vld [vmem:[%s1 + $0x214] sm:$0xf]
  %v157 = vld [vmem:[%s1 + $0x218] sm:$0xf]
  %v158 = vld [vmem:[%s1 + $0x21c] sm:$0xf]
  %v159 = vld [vmem:[%s1 + $0x220] sm:$0xf]
  %v160 = vld [vmem:[%s1 + $0x224] sm:$0xf]
  %v161 = vld [vmem:[%s1 + $0x228] sm:$0xf]
  %v162 = vld [vmem:[%s1 + $0x22c] sm:$0xf]
  %v163 = vld [vmem:[%s1 + $0x230] sm:$0xf]
  %v164 = vld [vmem:[%s1 + $0x234] sm:$0xf]
  %v165 = vld [vmem:[%s1 + $0x238] sm:$0xf]
  %v166 = vld [vmem:[%s1 + $0x23c] sm:$0xf]
  %v167 = vld [vmem:[%s2] sm:$0x1]
  %v169 = vlaneseq
  %v170 = vshrl.u32 %v169, 7
  %v171 = vsub.s32 0, %v170
  %v172 = vrot.slane %v167, %v171
  %v179 = vunpack.c.l.b16 %v18
  %v180 = vunpack.c.h.b16 %v18
  %v181 = vunpack.c.l.b16 %v19
  %v182 = vunpack.c.h.b16 %v19
  %v183 = vunpack.c.l.b16 %v20
  %v184 = vunpack.c.h.b16 %v20
  %v185 = vunpack.c.l.b16 %v21
  %v186 = vunpack.c.h.b16 %v21
  %v187 = vunpack.c.l.b16 %v22
  %v188 = vpack.c.b16 %v179, %v179
  %v189 = vpack.c.b16 %v180, %v180
  %v190 = vpack.c.b16 %v181, %v181
  %v191 = vpack.c.b16 %v182, %v182
  %v192 = vpack.c.b16 %v183, %v183
  %v193 = vpack.c.b16 %v184, %v184
  %v194 = vpack.c.b16 %v185, %v185
  %v195 = vpack.c.b16 %v186, %v186
  %v196 = vpack.c.b16 %v187, %v187
  %v350 = vunpack.c.l.b16 %v23
  %v351 = vunpack.c.l.b16 %v24
  %v352 = vunpack.c.l.b16 %v25
  %v353 = vunpack.c.l.b16 %v26
  %v354 = vunpack.c.l.b16 %v27
  %v355 = vunpack.c.l.b16 %v28
  %v356 = vunpack.c.l.b16 %v29
  %v357 = vunpack.c.l.b16 %v30
  %v358 = vunpack.c.l.b16 %v31
  %v359 = vunpack.c.l.b16 %v32
  %v360 = vunpack.c.l.b16 %v33
  %v361 = vunpack.c.l.b16 %v34
  %v362 = vunpack.c.l.b16 %v35
  %v363 = vunpack.c.l.b16 %v36
  %v364 = vunpack.c.l.b16 %v37
  %v365 = vunpack.c.l.b16 %v38
  %v366 = vunpack.c.l.b16 %v39
  %v367 = vunpack.c.l.b16 %v40
  %v368 = vunpack.c.l.b16 %v41
  %v369 = vunpack.c.l.b16 %v42
  %v370 = vunpack.c.l.b16 %v43
  %v371 = vunpack.c.l.b16 %v44
  %v372 = vunpack.c.l.b16 %v45
  %v373 = vunpack.c.l.b16 %v46
  %v374 = vunpack.c.l.b16 %v47
  %v375 = vunpack.c.l.b16 %v48
  %v376 = vunpack.c.l.b16 %v49
  %v377 = vunpack.c.l.b16 %v50
  %v378 = vunpack.c.l.b16 %v51
  %v379 = vunpack.c.l.b16 %v52
  %v380 = vunpack.c.l.b16 %v53
  %v381 = vunpack.c.l.b16 %v54
  %v382 = vunpack.c.l.b16 %v55
  %v383 = vunpack.c.l.b16 %v56
  %v384 = vunpack.c.l.b16 %v57
  %v385 = vunpack.c.l.b16 %v58
  %v386 = vunpack.c.l.b16 %v59
  %v387 = vunpack.c.l.b16 %v60
  %v388 = vunpack.c.l.b16 %v61
  %v389 = vunpack.c.l.b16 %v62
  %v390 = vunpack.c.l.b16 %v63
  %v391 = vunpack.c.l.b16 %v64
  %v392 = vunpack.c.l.b16 %v65
  %v393 = vunpack.c.l.b16 %v66
  %v394 = vunpack.c.l.b16 %v67
  %v395 = vunpack.c.l.b16 %v68
  %v396 = vunpack.c.l.b16 %v69
  %v397 = vunpack.c.l.b16 %v70
  %v398 = vunpack.c.l.b16 %v71
  %v399 = vunpack.c.l.b16 %v72
  %v400 = vunpack.c.l.b16 %v73
  %v401 = vunpack.c.l.b16 %v74
  %v402 = vunpack.c.l.b16 %v75
  %v403 = vunpack.c.l.b16 %v76
  %v404 = vunpack.c.l.b16 %v77
  %v405 = vunpack.c.l.b16 %v78
  %v406 = vunpack.c.l.b16 %v79
  %v407 = vunpack.c.l.b16 %v80
  %v408 = vunpack.c.l.b16 %v81
  %v409 = vunpack.c.l.b16 %v82
  %v410 = vunpack.c.l.b16 %v83
  %v411 = vunpack.c.l.b16 %v84
  %v412 = vunpack.c.l.b16 %v85
  %v413 = vunpack.c.l.b16 %v86
  %v414 = vunpack.c.l.b16 %v87
  %v415 = vunpack.c.l.b16 %v88
  %v416 = vunpack.c.l.b16 %v89
  %v417 = vunpack.c.l.b16 %v90
  %v418 = vunpack.c.l.b16 %v91
  %v419 = vunpack.c.l.b16 %v92
  %v420 = vunpack.c.l.b16 %v93
  %v421 = vunpack.c.l.b16 %v94
  %v422 = vunpack.c.l.b16 %v95
  %v423 = vunpack.c.l.b16 %v96
  %v424 = vunpack.c.l.b16 %v97
  %v425 = vunpack.c.l.b16 %v98
  %v426 = vunpack.c.l.b16 %v99
  %v427 = vunpack.c.l.b16 %v100
  %v428 = vunpack.c.l.b16 %v101
  %v429 = vunpack.c.l.b16 %v102
  %v430 = vunpack.c.l.b16 %v103
  %v431 = vunpack.c.l.b16 %v104
  %v432 = vunpack.c.l.b16 %v105
  %v433 = vunpack.c.l.b16 %v106
  %v434 = vunpack.c.l.b16 %v107
  %v435 = vunpack.c.l.b16 %v108
  %v436 = vunpack.c.l.b16 %v109
  %v437 = vunpack.c.l.b16 %v110
  %v438 = vunpack.c.l.b16 %v111
  %v439 = vunpack.c.l.b16 %v112
  %v440 = vunpack.c.l.b16 %v113
  %v441 = vunpack.c.l.b16 %v114
  %v442 = vunpack.c.l.b16 %v115
  %v443 = vunpack.c.l.b16 %v116
  %v444 = vunpack.c.l.b16 %v117
  %v445 = vunpack.c.l.b16 %v118
  %v446 = vunpack.c.l.b16 %v119
  %v447 = vunpack.c.l.b16 %v120
  %v448 = vunpack.c.l.b16 %v121
  %v449 = vunpack.c.l.b16 %v122
  %v450 = vunpack.c.l.b16 %v123
  %v451 = vunpack.c.l.b16 %v124
  %v452 = vunpack.c.l.b16 %v125
  %v453 = vunpack.c.l.b16 %v126
  %v454 = vunpack.c.l.b16 %v127
  %v455 = vunpack.c.l.b16 %v128
  %v456 = vunpack.c.l.b16 %v129
  %v457 = vunpack.c.l.b16 %v130
  %v458 = vunpack.c.l.b16 %v131
  %v459 = vunpack.c.l.b16 %v132
  %v460 = vunpack.c.l.b16 %v133
  %v461 = vunpack.c.l.b16 %v134
  %v462 = vunpack.c.l.b16 %v135
  %v463 = vunpack.c.l.b16 %v136
  %v464 = vunpack.c.l.b16 %v137
  %v465 = vunpack.c.l.b16 %v138
  %v466 = vunpack.c.l.b16 %v139
  %v467 = vunpack.c.l.b16 %v140
  %v468 = vunpack.c.l.b16 %v141
  %v469 = vunpack.c.l.b16 %v142
  %v470 = vunpack.c.l.b16 %v143
  %v471 = vunpack.c.l.b16 %v144
  %v472 = vunpack.c.l.b16 %v145
  %v473 = vunpack.c.l.b16 %v146
  %v474 = vunpack.c.l.b16 %v147
  %v475 = vunpack.c.l.b16 %v148
  %v476 = vunpack.c.l.b16 %v149
  %v477 = vunpack.c.l.b16 %v150
  %v478 = vunpack.c.l.b16 %v151
  %v479 = vunpack.c.l.b16 %v152
  %v480 = vunpack.c.l.b16 %v153
  %v481 = vunpack.c.l.b16 %v154
  %v482 = vunpack.c.l.b16 %v155
  %v483 = vunpack.c.l.b16 %v156
  %v484 = vunpack.c.l.b16 %v157
  %v485 = vunpack.c.l.b16 %v158
  %v486 = vunpack.c.l.b16 %v159
  %v487 = vunpack.c.l.b16 %v160
  %v488 = vunpack.c.l.b16 %v161
  %v489 = vunpack.c.l.b16 %v162
  %v490 = vunpack.c.l.b16 %v163
  %v491 = vunpack.c.l.b16 %v164
  %v492 = vunpack.c.l.b16 %v165
  %v493 = vunpack.c.l.b16 %v166
  %v494 = vpack.c.b16 %v351, %v350
  %v495 = vpack.c.b16 %v353, %v352
  %v496 = vpack.c.b16 %v355, %v354
  %v497 = vpack.c.b16 %v357, %v356
  %v498 = vpack.c.b16 %v359, %v358
  %v499 = vpack.c.b16 %v361, %v360
  %v500 = vpack.c.b16 %v363, %v362
  %v501 = vpack.c.b16 %v365, %v364
  %v502 = vpack.c.b16 %v367, %v366
  %v503 = vpack.c.b16 %v369, %v368
  %v504 = vpack.c.b16 %v371, %v370
  %v505 = vpack.c.b16 %v373, %v372
  %v506 = vpack.c.b16 %v375, %v374
  %v507 = vpack.c.b16 %v377, %v376
  %v508 = vpack.c.b16 %v379, %v378
  %v509 = vpack.c.b16 %v381, %v380
  %v510 = vpack.c.b16 %v383, %v382
  %v511 = vpack.c.b16 %v385, %v384
  %v512 = vpack.c.b16 %v387, %v386
  %v513 = vpack.c.b16 %v389, %v388
  %v514 = vpack.c.b16 %v391, %v390
  %v515 = vpack.c.b16 %v393, %v392
  %v516 = vpack.c.b16 %v395, %v394
  %v517 = vpack.c.b16 %v397, %v396
  %v518 = vpack.c.b16 %v399, %v398
  %v519 = vpack.c.b16 %v401, %v400
  %v520 = vpack.c.b16 %v403, %v402
  %v521 = vpack.c.b16 %v405, %v404
  %v522 = vpack.c.b16 %v407, %v406
  %v523 = vpack.c.b16 %v409, %v408
  %v524 = vpack.c.b16 %v411, %v410
  %v525 = vpack.c.b16 %v413, %v412
  %v526 = vpack.c.b16 %v415, %v414
  %v527 = vpack.c.b16 %v417, %v416
  %v528 = vpack.c.b16 %v419, %v418
  %v529 = vpack.c.b16 %v421, %v420
  %v530 = vpack.c.b16 %v423, %v422
  %v531 = vpack.c.b16 %v425, %v424
  %v532 = vpack.c.b16 %v427, %v426
  %v533 = vpack.c.b16 %v429, %v428
  %v534 = vpack.c.b16 %v431, %v430
  %v535 = vpack.c.b16 %v433, %v432
  %v536 = vpack.c.b16 %v435, %v434
  %v537 = vpack.c.b16 %v437, %v436
  %v538 = vpack.c.b16 %v439, %v438
  %v539 = vpack.c.b16 %v441, %v440
  %v540 = vpack.c.b16 %v443, %v442
  %v541 = vpack.c.b16 %v445, %v444
  %v542 = vpack.c.b16 %v447, %v446
  %v543 = vpack.c.b16 %v449, %v448
  %v544 = vpack.c.b16 %v451, %v450
  %v545 = vpack.c.b16 %v453, %v452
  %v546 = vpack.c.b16 %v455, %v454
  %v547 = vpack.c.b16 %v457, %v456
  %v548 = vpack.c.b16 %v459, %v458
  %v549 = vpack.c.b16 %v461, %v460
  %v550 = vpack.c.b16 %v463, %v462
  %v551 = vpack.c.b16 %v465, %v464
  %v552 = vpack.c.b16 %v467, %v466
  %v553 = vpack.c.b16 %v469, %v468
  %v554 = vpack.c.b16 %v471, %v470
  %v555 = vpack.c.b16 %v473, %v472
  %v556 = vpack.c.b16 %v475, %v474
  %v557 = vpack.c.b16 %v477, %v476
  %v558 = vpack.c.b16 %v479, %v478
  %v559 = vpack.c.b16 %v481, %v480
  %v560 = vpack.c.b16 %v483, %v482
  %v561 = vpack.c.b16 %v485, %v484
  %v562 = vpack.c.b16 %v487, %v486
  %v563 = vpack.c.b16 %v489, %v488
  %v564 = vpack.c.b16 %v491, %v490
  %v565 = vpack.c.b16 %v493, %v492
  %638 = vmatprep.subr.bf16.mxu0 0
  %639 = vmatpush1.bf16.msra.mxu0 %v501
  %640 = vmatprep.subr.bf16.mxu0 0
  %641 = vmatpush1.bf16.msra.mxu0 %v500
  %642 = vmatprep.subr.bf16.mxu0 0
  %643 = vmatpush1.bf16.msra.mxu0 %v499
  %644 = vmatprep.subr.bf16.mxu0 0
  %645 = vmatpush1.bf16.msra.mxu0 %v498
  %646 = vmatprep.subr.bf16.mxu0 0
  %647 = vmatpush1.bf16.msra.mxu0 %v497
  %648 = vmatprep.subr.bf16.mxu0 0
  %649 = vmatpush1.bf16.msra.mxu0 %v496
  %650 = vmatprep.subr.bf16.mxu0 0
  %651 = vmatpush1.bf16.msra.mxu0 %v495
  %652 = vmatprep.subr.bf16.mxu0 0
  %653 = vmatpush1.bf16.msra.mxu0 %v494
  %654 = vmatprep.subr.bf16.mxu0 0
  %655 = vmatpush2.bf16.msra.mxu0 %v509
  %656 = vmatprep.subr.bf16.mxu0 0
  %657 = vmatpush2.bf16.msra.mxu0 %v508
  %658 = vmatprep.subr.bf16.mxu0 0
  %659 = vmatpush2.bf16.msra.mxu0 %v507
  %660 = vmatprep.subr.bf16.mxu0 0
  %661 = vmatpush2.bf16.msra.mxu0 %v506
  %662 = vmatprep.subr.bf16.mxu0 0
  %663 = vmatpush2.bf16.msra.mxu0 %v505
  %664 = vmatprep.subr.bf16.mxu0 0
  %665 = vmatpush2.bf16.msra.mxu0 %v504
  %666 = vmatprep.subr.bf16.mxu0 0
  %667 = vmatpush2.bf16.msra.mxu0 %v503
  %668 = vmatprep.subr.bf16.mxu0 0
  %669 = vmatpush2.bf16.msra.mxu0 %v502
  %670 = vmatprep.mubr.bf16.mxu0 %v189
  %671 = vmatmul.mubr.bf16.gmra.mxu0 %v188
  %v672 = vpop.f32.mrf.mxu0
  %v673 = vadd.f32 %v172, %v672
  %v674 = vpop.f32.mrf.mxu0
  %v675 = vpop.f32.mrf.mxu0
  %v676 = vpop.f32.mrf.mxu0
  %677 = vdwg.mxu0
  %678 = vmatprep.subr.bf16.mxu0 0
  %679 = vmatpush1.bf16.msra.mxu0 %v517
  %680 = vmatprep.subr.bf16.mxu0 0
  %681 = vmatpush1.bf16.msra.mxu0 %v516
  %682 = vmatprep.subr.bf16.mxu0 0
  %683 = vmatpush1.bf16.msra.mxu0 %v515
  %684 = vmatprep.subr.bf16.mxu0 0
  %685 = vmatpush1.bf16.msra.mxu0 %v514
  %686 = vmatprep.subr.bf16.mxu0 0
  %687 = vmatpush1.bf16.msra.mxu0 %v513
  %688 = vmatprep.subr.bf16.mxu0 0
  %689 = vmatpush1.bf16.msra.mxu0 %v512
  %690 = vmatprep.subr.bf16.mxu0 0
  %691 = vmatpush1.bf16.msra.mxu0 %v511
  %692 = vmatprep.subr.bf16.mxu0 0
  %693 = vmatpush1.bf16.msra.mxu0 %v510
  %694 = vmatprep.subr.bf16.mxu0 0
  %695 = vmatpush2.bf16.msra.mxu0 %v525
  %696 = vmatprep.subr.bf16.mxu0 0
  %697 = vmatpush2.bf16.msra.mxu0 %v524
  %698 = vmatprep.subr.bf16.mxu0 0
  %699 = vmatpush2.bf16.msra.mxu0 %v523
  %700 = vmatprep.subr.bf16.mxu0 0
  %701 = vmatpush2.bf16.msra.mxu0 %v522
  %702 = vmatprep.subr.bf16.mxu0 0
  %703 = vmatpush2.bf16.msra.mxu0 %v521
  %704 = vmatprep.subr.bf16.mxu0 0
  %705 = vmatpush2.bf16.msra.mxu0 %v520
  %706 = vmatprep.subr.bf16.mxu0 0
  %707 = vmatpush2.bf16.msra.mxu0 %v519
  %708 = vmatprep.subr.bf16.mxu0 0
  %709 = vmatpush2.bf16.msra.mxu0 %v518
  %710 = vmatprep.mubr.bf16.mxu0 %v191
  %711 = vmatmul.mubr.bf16.gmra.mxu0 %v190
  %v712 = vpop.f32.mrf.mxu0
  %v713 = vadd.f32 %v673, %v712
  %v714 = vpop.f32.mrf.mxu0
  %v715 = vpop.f32.mrf.mxu0
  %v716 = vpop.f32.mrf.mxu0
  %717 = vdwg.mxu0
  %718 = vmatprep.subr.bf16.mxu0 0
  %719 = vmatpush1.bf16.msra.mxu0 %v533
  %720 = vmatprep.subr.bf16.mxu0 0
  %721 = vmatpush1.bf16.msra.mxu0 %v532
  %722 = vmatprep.subr.bf16.mxu0 0
  %723 = vmatpush1.bf16.msra.mxu0 %v531
  %724 = vmatprep.subr.bf16.mxu0 0
  %725 = vmatpush1.bf16.msra.mxu0 %v530
  %726 = vmatprep.subr.bf16.mxu0 0
  %727 = vmatpush1.bf16.msra.mxu0 %v529
  %728 = vmatprep.subr.bf16.mxu0 0
  %729 = vmatpush1.bf16.msra.mxu0 %v528
  %730 = vmatprep.subr.bf16.mxu0 0
  %731 = vmatpush1.bf16.msra.mxu0 %v527
  %732 = vmatprep.subr.bf16.mxu0 0
  %733 = vmatpush1.bf16.msra.mxu0 %v526
  %734 = vmatprep.subr.bf16.mxu0 0
  %735 = vmatpush2.bf16.msra.mxu0 %v541
  %736 = vmatprep.subr.bf16.mxu0 0
  %737 = vmatpush2.bf16.msra.mxu0 %v540
  %738 = vmatprep.subr.bf16.mxu0 0
  %739 = vmatpush2.bf16.msra.mxu0 %v539
  %740 = vmatprep.subr.bf16.mxu0 0
  %741 = vmatpush2.bf16.msra.mxu0 %v538
  %742 = vmatprep.subr.bf16.mxu0 0
  %743 = vmatpush2.bf16.msra.mxu0 %v537
  %744 = vmatprep.subr.bf16.mxu0 0
  %745 = vmatpush2.bf16.msra.mxu0 %v536
  %746 = vmatprep.subr.bf16.mxu0 0
  %747 = vmatpush2.bf16.msra.mxu0 %v535
  %748 = vmatprep.subr.bf16.mxu0 0
  %749 = vmatpush2.bf16.msra.mxu0 %v534
  %750 = vmatprep.mubr.bf16.mxu0 %v193
  %751 = vmatmul.mubr.bf16.gmra.mxu0 %v192
  %v752 = vpop.f32.mrf.mxu0
  %v753 = vadd.f32 %v713, %v752
  %v754 = vpop.f32.mrf.mxu0
  %v755 = vpop.f32.mrf.mxu0
  %v756 = vpop.f32.mrf.mxu0
  %757 = vdwg.mxu0
  %758 = vmatprep.subr.bf16.mxu0 0
  %759 = vmatpush1.bf16.msra.mxu0 %v549
  %760 = vmatprep.subr.bf16.mxu0 0
  %761 = vmatpush1.bf16.msra.mxu0 %v548
  %762 = vmatprep.subr.bf16.mxu0 0
  %763 = vmatpush1.bf16.msra.mxu0 %v547
  %764 = vmatprep.subr.bf16.mxu0 0
  %765 = vmatpush1.bf16.msra.mxu0 %v546
  %766 = vmatprep.subr.bf16.mxu0 0
  %767 = vmatpush1.bf16.msra.mxu0 %v545
  %768 = vmatprep.subr.bf16.mxu0 0
  %769 = vmatpush1.bf16.msra.mxu0 %v544
  %770 = vmatprep.subr.bf16.mxu0 0
  %771 = vmatpush1.bf16.msra.mxu0 %v543
  %772 = vmatprep.subr.bf16.mxu0 0
  %773 = vmatpush1.bf16.msra.mxu0 %v542
  %774 = vmatprep.subr.bf16.mxu0 0
  %775 = vmatpush2.bf16.msra.mxu0 %v557
  %776 = vmatprep.subr.bf16.mxu0 0
  %777 = vmatpush2.bf16.msra.mxu0 %v556
  %778 = vmatprep.subr.bf16.mxu0 0
  %779 = vmatpush2.bf16.msra.mxu0 %v555
  %780 = vmatprep.subr.bf16.mxu0 0
  %781 = vmatpush2.bf16.msra.mxu0 %v554
  %782 = vmatprep.subr.bf16.mxu0 0
  %783 = vmatpush2.bf16.msra.mxu0 %v553
  %784 = vmatprep.subr.bf16.mxu0 0
  %785 = vmatpush2.bf16.msra.mxu0 %v552
  %786 = vmatprep.subr.bf16.mxu0 0
  %787 = vmatpush2.bf16.msra.mxu0 %v551
  %788 = vmatprep.subr.bf16.mxu0 0
  %789 = vmatpush2.bf16.msra.mxu0 %v550
  %790 = vmatprep.mubr.bf16.mxu0 %v195
  %791 = vmatmul.mubr.bf16.gmra.mxu0 %v194
  %v792 = vpop.f32.mrf.mxu0
  %v793 = vadd.f32 %v753, %v792
  %v794 = vpop.f32.mrf.mxu0
  %v795 = vpop.f32.mrf.mxu0
  %v796 = vpop.f32.mrf.mxu0
  %797 = vdwg.mxu0
  %798 = vmatprep.subr.bf16.mxu0 0
  %799 = vmatpush1.bf16.msra.mxu0 %v565
  %800 = vmatprep.subr.bf16.mxu0 0
  %801 = vmatpush1.bf16.msra.mxu0 %v564
  %802 = vmatprep.subr.bf16.mxu0 0
  %803 = vmatpush1.bf16.msra.mxu0 %v563
  %804 = vmatprep.subr.bf16.mxu0 0
  %805 = vmatpush1.bf16.msra.mxu0 %v562
  %806 = vmatprep.subr.bf16.mxu0 0
  %807 = vmatpush1.bf16.msra.mxu0 %v561
  %808 = vmatprep.subr.bf16.mxu0 0
  %809 = vmatpush1.bf16.msra.mxu0 %v560
  %810 = vmatprep.subr.bf16.mxu0 0
  %811 = vmatpush1.bf16.msra.mxu0 %v559
  %812 = vmatprep.subr.bf16.mxu0 0
  %813 = vmatpush1.bf16.msra.mxu0 %v558
  %814 = vmatprep.subr.bf16.mxu0 0
  %815 = vmatpush2.bf16.msra.mxu0 0
  %816 = vmatprep.subr.bf16.mxu0 0
  %817 = vmatpush2.bf16.msra.mxu0 0
  %818 = vmatprep.subr.bf16.mxu0 0
  %819 = vmatpush2.bf16.msra.mxu0 0
  %820 = vmatprep.subr.bf16.mxu0 0
  %821 = vmatpush2.bf16.msra.mxu0 0
  %822 = vmatprep.subr.bf16.mxu0 0
  %823 = vmatpush2.bf16.msra.mxu0 0
  %824 = vmatprep.subr.bf16.mxu0 0
  %825 = vmatpush2.bf16.msra.mxu0 0
  %826 = vmatprep.subr.bf16.mxu0 0
  %827 = vmatpush2.bf16.msra.mxu0 0
  %828 = vmatprep.subr.bf16.mxu0 0
  %829 = vmatpush2.bf16.msra.mxu0 0
  %830 = vmatprep.mubr.bf16.mxu0 0
  %831 = vmatmul.mubr.bf16.gmra.mxu0 %v196
  %v832 = vpop.f32.mrf.mxu0
  %v833 = vadd.f32 %v793, %v832
  %v834 = vpop.f32.mrf.mxu0
  %v835 = vpop.f32.mrf.mxu0
  %v836 = vpop.f32.mrf.mxu0
  %837 = vdwg.mxu0
  %v838 = vld [vmem:[%s3] sm:$0xf]
  %v839 = vunpack.c.l.bf16 %v838
  %v840 = vadd.f32 %v833, %v839
  %v841 = vmax.f32 %v840, 0.0
  %v842 = vpack.c.bf16 %v841, %v841
  %843 = vst [vmem:[%s4] sm:$0xf] %v842
  // Predicated region
  $region18: #{_lambda_.16} parent=0 // pred_check
    _
  $region19: #{_lambda_.16} parent=0 // pred_check_branch
    %845 = sbr.rel (0) target = $region21
  $region20: #{_lambda_.16} parent=0 // pred_region
    _
  $region21: #{_lambda_.16} parent=0 // pred_fallthru
    _
  // Predicated region
  $region22: #{_lambda_.16} parent=0 // pred_check
    _
  $region23: #{_lambda_.16} parent=0 // pred_check_branch
    %847 = sbr.rel (0) target = $region25
  $region24: #{_lambda_.16} parent=0 // pred_region
    _
  $region25: #{_lambda_.16} parent=0 // pred_fallthru
    _

// kernel: _lambda_.17
$region0: #{_lambda_.17}
  #allocation0 [shape = 'u32[]', space=smem, size = 0x4, offset = 0x4, fixed_abs, tag = 'smem constant byte address 0x4 - core index']
  #allocation1 [shape = 'u32[144,128]{1,0:T(1,128)}', space=vmem, size = 0x12000, scoped, tag = 'internal scratch']
  %s0 = inlined_call_operand.vmem [shape: bf16[8,128], index: 0, kind: input, shape index: {}]
  %s1 = inlined_call_operand.vmem [shape: bf16[128,256], index: 1, kind: input, shape index: {}]
  %s2 = inlined_call_operand.vmem [shape: f32[1,256], index: 2, kind: input, shape index: {}]
  %s3 = inlined_call_operand.vmem [shape: bf16[8,256], index: 3, kind: output, shape index: {}]
  %s4 = sld [smem:[#allocation0]]
  $region22: #{_lambda_.17} parent=0
    _
  %s6 = ssub.s32 1, %s4
  %s7 = scalar_select 0, %s6, %s4
  // Predicated region
  $region2: #{_lambda_.17} parent=0 // pred_check
    _
  $region3: #{_lambda_.17} parent=0 // pred_check_branch
    %9 = sbr.rel (0) target = $region5
  $region4: #{_lambda_.17} parent=0 // pred_region
    _
  $region5: #{_lambda_.17} parent=0 // pred_fallthru
    _
  // Predicated region
  $region6: #{_lambda_.17} parent=0 // pred_check
    _
  $region7: #{_lambda_.17} parent=0 // pred_check_branch
    %11 = sbr.rel (0) target = $region9
  $region8: #{_lambda_.17} parent=0 // pred_region
    _
  $region9: #{_lambda_.17} parent=0 // pred_fallthru
    _
  // Predicated region
  $region10: #{_lambda_.17} parent=0 // pred_check
    _
  $region11: #{_lambda_.17} parent=0 // pred_check_branch
    %13 = sbr.rel (0) target = $region13
  $region12: #{_lambda_.17} parent=0 // pred_region
    _
  $region13: #{_lambda_.17} parent=0 // pred_fallthru
    _
  %v15 = vld [vmem:[%s0] sm:$0xf]
  %v16 = vld [vmem:[%s1] sm:$0xff]
  %v17 = vld [vmem:[%s1 + $0x8] sm:$0xff]
  %v18 = vld [vmem:[%s1 + $0x10] sm:$0xff]
  %v19 = vld [vmem:[%s1 + $0x18] sm:$0xff]
  %v20 = vld [vmem:[%s1 + $0x20] sm:$0xff]
  %v21 = vld [vmem:[%s1 + $0x28] sm:$0xff]
  %v22 = vld [vmem:[%s1 + $0x30] sm:$0xff]
  %v23 = vld [vmem:[%s1 + $0x38] sm:$0xff]
  %v24 = vld [vmem:[%s1 + $0x40] sm:$0xff]
  %v25 = vld [vmem:[%s1 + $0x48] sm:$0xff]
  %v26 = vld [vmem:[%s1 + $0x50] sm:$0xff]
  %v27 = vld [vmem:[%s1 + $0x58] sm:$0xff]
  %v28 = vld [vmem:[%s1 + $0x60] sm:$0xff]
  %v29 = vld [vmem:[%s1 + $0x68] sm:$0xff]
  %v30 = vld [vmem:[%s1 + $0x70] sm:$0xff]
  %v31 = vld [vmem:[%s1 + $0x78] sm:$0xff]
  %v32 = vld [vmem:[%s2] sm:$0x3]
  %v34 = vlaneseq
  %v35 = vshrl.u32 %v34, 7
  %v36 = vsub.s32 0, %v35
  %v37 = vrot.slane %v32, %v36
  %v38 = vlaneseq
  %v39 = vshrl.u32 %v38, 7
  %v40 = vsub.s32 1, %v39
  %v41 = vrot.slane %v32, %v40
  %v60 = vunpack.c.l.b16 %v16
  %v61 = vunpack.c.h.b16 %v16
  %v62 = vunpack.c.l.b16 %v17
  %v63 = vunpack.c.h.b16 %v17
  %v64 = vunpack.c.l.b16 %v18
  %v65 = vunpack.c.h.b16 %v18
  %v66 = vunpack.c.l.b16 %v19
  %v67 = vunpack.c.h.b16 %v19
  %v68 = vunpack.c.l.b16 %v20
  %v69 = vunpack.c.h.b16 %v20
  %v70 = vunpack.c.l.b16 %v21
  %v71 = vunpack.c.h.b16 %v21
  %v72 = vunpack.c.l.b16 %v22
  %v73 = vunpack.c.h.b16 %v22
  %v74 = vunpack.c.l.b16 %v23
  %v75 = vunpack.c.h.b16 %v23
  %v76 = vunpack.c.l.b16 %v24
  %v77 = vunpack.c.h.b16 %v24
  %v78 = vunpack.c.l.b16 %v25
  %v79 = vunpack.c.h.b16 %v25
  %v80 = vunpack.c.l.b16 %v26
  %v81 = vunpack.c.h.b16 %v26
  %v82 = vunpack.c.l.b16 %v27
  %v83 = vunpack.c.h.b16 %v27
  %v84 = vunpack.c.l.b16 %v28
  %v85 = vunpack.c.h.b16 %v28
  %v86 = vunpack.c.l.b16 %v29
  %v87 = vunpack.c.h.b16 %v29
  %v88 = vunpack.c.l.b16 %v30
  %v89 = vunpack.c.h.b16 %v30
  %v90 = vunpack.c.l.b16 %v31
  %v91 = vunpack.c.h.b16 %v31
  %v92 = vpack.c.b16 %v62, %v60
  %v93 = vpack.c.b16 %v63, %v61
  %v94 = vpack.c.b16 %v66, %v64
  %v95 = vpack.c.b16 %v67, %v65
  %v96 = vpack.c.b16 %v70, %v68
  %v97 = vpack.c.b16 %v71, %v69
  %v98 = vpack.c.b16 %v74, %v72
  %v99 = vpack.c.b16 %v75, %v73
  %v100 = vpack.c.b16 %v78, %v76
  %v101 = vpack.c.b16 %v79, %v77
  %v102 = vpack.c.b16 %v82, %v80
  %v103 = vpack.c.b16 %v83, %v81
  %v104 = vpack.c.b16 %v86, %v84
  %v105 = vpack.c.b16 %v87, %v85
  %v106 = vpack.c.b16 %v90, %v88
  %v107 = vpack.c.b16 %v91, %v89
  %124 = vmatprep.subr.bf16.mxu0 %v107
  %125 = vmatpush1.bf16.msra.mxu0 %v106
  %126 = vmatprep.subr.bf16.mxu0 %v105
  %127 = vmatpush1.bf16.msra.mxu0 %v104
  %128 = vmatprep.subr.bf16.mxu0 %v103
  %129 = vmatpush1.bf16.msra.mxu0 %v102
  %130 = vmatprep.subr.bf16.mxu0 %v101
  %131 = vmatpush1.bf16.msra.mxu0 %v100
  %132 = vmatprep.subr.bf16.mxu0 %v99
  %133 = vmatpush1.bf16.msra.mxu0 %v98
  %134 = vmatprep.subr.bf16.mxu0 %v97
  %135 = vmatpush1.bf16.msra.mxu0 %v96
  %136 = vmatprep.subr.bf16.mxu0 %v95
  %137 = vmatpush1.bf16.msra.mxu0 %v94
  %138 = vmatprep.subr.bf16.mxu0 %v93
  %139 = vmatpush1.bf16.msra.mxu0 %v92
  %140 = vmatprep.subr.bf16.mxu0 0
  %141 = vmatpush2.bf16.msra.mxu0 0
  %142 = vmatprep.subr.bf16.mxu0 0
  %143 = vmatpush2.bf16.msra.mxu0 0
  %144 = vmatprep.subr.bf16.mxu0 0
  %145 = vmatpush2.bf16.msra.mxu0 0
  %146 = vmatprep.subr.bf16.mxu0 0
  %147 = vmatpush2.bf16.msra.mxu0 0
  %148 = vmatprep.subr.bf16.mxu0 0
  %149 = vmatpush2.bf16.msra.mxu0 0
  %150 = vmatprep.subr.bf16.mxu0 0
  %151 = vmatpush2.bf16.msra.mxu0 0
  %152 = vmatprep.subr.bf16.mxu0 0
  %153 = vmatpush2.bf16.msra.mxu0 0
  %154 = vmatprep.subr.bf16.mxu0 0
  %155 = vmatpush2.bf16.msra.mxu0 0
  %156 = vmatprep.mubr.bf16.mxu0 0
  %157 = vmatmul.mubr.bf16.gmra.mxu0 %v15
  %v158 = vpop.f32.mrf.mxu0
  %v159 = vadd.f32 %v37, %v158
  %v160 = vpop.f32.mrf.mxu0
  %v161 = vadd.f32 %v41, %v160
  %v162 = vpop.f32.mrf.mxu0
  %v163 = vpop.f32.mrf.mxu0
  %164 = vdwg.mxu0
  %v165 = vpack.c.bf16 %v159, %v159
  %v166 = vpack.c.bf16 %v161, %v161
  %v169 = vunpack.c.l.b16 %v165
  %v170 = vunpack.c.l.b16 %v166
  %v171 = vpack.c.b16 %v170, %v169
  %173 = vst [vmem:[%s3] sm:$0xff] %v171
  // Predicated region
  $region14: #{_lambda_.17} parent=0 // pred_check
    _
  $region15: #{_lambda_.17} parent=0 // pred_check_branch
    %175 = sbr.rel (0) target = $region17
  $region16: #{_lambda_.17} parent=0 // pred_region
    _
  $region17: #{_lambda_.17} parent=0 // pred_fallthru
    _
  // Predicated region
  $region18: #{_lambda_.17} parent=0 // pred_check
    _
  $region19: #{_lambda_.17} parent=0 // pred_check_branch
    %177 = sbr.rel (0) target = $region21
  $region20: #{_lambda_.17} parent=0 // pred_region
    _
  $region21: #{_lambda_.17} parent=0 // pred_fallthru
    _

// kernel: _lambda_.18
$region0: #{_lambda_.18}
  #allocation0 [shape = 'u32[]', space=smem, size = 0x4, offset = 0x4, fixed_abs, tag = 'smem constant byte address 0x4 - core index']
  #allocation1 [shape = 'u32[144,128]{1,0:T(1,128)}', space=vmem, size = 0x12000, scoped, tag = 'internal scratch']
  %s0 = inlined_call_operand.vmem [shape: bf16[8,1152], index: 0, kind: input, shape index: {}]
  %s1 = inlined_call_operand.vmem [shape: bf16[1152,256], index: 1, kind: input, shape index: {}]
  %s2 = inlined_call_operand.vmem [shape: f32[1,256], index: 2, kind: input, shape index: {}]
  %s3 = inlined_call_operand.vmem [shape: bf16[8,256], index: 3, kind: output, shape index: {}]
  %s4 = sld [smem:[#allocation0]]
  $region22: #{_lambda_.18} parent=0
    _
  %s6 = ssub.s32 1, %s4
  %s7 = scalar_select 0, %s6, %s4
  // Predicated region
  $region2: #{_lambda_.18} parent=0 // pred_check
    _
  $region3: #{_lambda_.18} parent=0 // pred_check_branch
    %9 = sbr.rel (0) target = $region5
  $region4: #{_lambda_.18} parent=0 // pred_region
    _
  $region5: #{_lambda_.18} parent=0 // pred_fallthru
    _
  // Predicated region
  $region6: #{_lambda_.18} parent=0 // pred_check
    _
  $region7: #{_lambda_.18} parent=0 // pred_check_branch
    %11 = sbr.rel (0) target = $region9
  $region8: #{_lambda_.18} parent=0 // pred_region
    _
  $region9: #{_lambda_.18} parent=0 // pred_fallthru
    _
  // Predicated region
  $region10: #{_lambda_.18} parent=0 // pred_check
    _
  $region11: #{_lambda_.18} parent=0 // pred_check_branch
    %13 = sbr.rel (0) target = $region13
  $region12: #{_lambda_.18} parent=0 // pred_region
    _
  $region13: #{_lambda_.18} parent=0 // pred_fallthru
    _
  %v15 = vld [vmem:[%s0] sm:$0xff]
  %v16 = vld [vmem:[%s0 + $0x8] sm:$0xff]
  %v17 = vld [vmem:[%s0 + $0x10] sm:$0xff]
  %v18 = vld [vmem:[%s0 + $0x18] sm:$0xff]
  %v19 = vld [vmem:[%s0 + $0x20] sm:$0xf]
  %v20 = vld [vmem:[%s1] sm:$0xff]
  %v21 = vld [vmem:[%s1 + $0x8] sm:$0xff]
  %v22 = vld [vmem:[%s1 + $0x10] sm:$0xff]
  %v23 = vld [vmem:[%s1 + $0x18] sm:$0xff]
  %v24 = vld [vmem:[%s1 + $0x20] sm:$0xff]
  %v25 = vld [vmem:[%s1 + $0x28] sm:$0xff]
  %v26 = vld [vmem:[%s1 + $0x30] sm:$0xff]
  %v27 = vld [vmem:[%s1 + $0x38] sm:$0xff]
  %v28 = vld [vmem:[%s1 + $0x40] sm:$0xff]
  %v29 = vld [vmem:[%s1 + $0x48] sm:$0xff]
  %v30 = vld [vmem:[%s1 + $0x50] sm:$0xff]
  %v31 = vld [vmem:[%s1 + $0x58] sm:$0xff]
  %v32 = vld [vmem:[%s1 + $0x60] sm:$0xff]
  %v33 = vld [vmem:[%s1 + $0x68] sm:$0xff]
  %v34 = vld [vmem:[%s1 + $0x70] sm:$0xff]
  %v35 = vld [vmem:[%s1 + $0x78] sm:$0xff]
  %v36 = vld [vmem:[%s1 + $0x80] sm:$0xff]
  %v37 = vld [vmem:[%s1 + $0x88] sm:$0xff]
  %v38 = vld [vmem:[%s1 + $0x90] sm:$0xff]
  %v39 = vld [vmem:[%s1 + $0x98] sm:$0xff]
  %v40 = vld [vmem:[%s1 + $0xa0] sm:$0xff]
  %v41 = vld [vmem:[%s1 + $0xa8] sm:$0xff]
  %v42 = vld [vmem:[%s1 + $0xb0] sm:$0xff]
  %v43 = vld [vmem:[%s1 + $0xb8] sm:$0xff]
  %v44 = vld [vmem:[%s1 + $0xc0] sm:$0xff]
  %v45 = vld [vmem:[%s1 + $0xc8] sm:$0xff]
  %v46 = vld [vmem:[%s1 + $0xd0] sm:$0xff]
  %v47 = vld [vmem:[%s1 + $0xd8] sm:$0xff]
  %v48 = vld [vmem:[%s1 + $0xe0] sm:$0xff]
  %v49 = vld [vmem:[%s1 + $0xe8] sm:$0xff]
  %v50 = vld [vmem:[%s1 + $0xf0] sm:$0xff]
  %v51 = vld [vmem:[%s1 + $0xf8] sm:$0xff]
  %v52 = vld [vmem:[%s1 + $0x100] sm:$0xff]
  %v53 = vld [vmem:[%s1 + $0x108] sm:$0xff]
  %v54 = vld [vmem:[%s1 + $0x110] sm:$0xff]
  %v55 = vld [vmem:[%s1 + $0x118] sm:$0xff]
  %v56 = vld [vmem:[%s1 + $0x120] sm:$0xff]
  %v57 = vld [vmem:[%s1 + $0x128] sm:$0xff]
  %v58 = vld [vmem:[%s1 + $0x130] sm:$0xff]
  %v59 = vld [vmem:[%s1 + $0x138] sm:$0xff]
  %v60 = vld [vmem:[%s1 + $0x140] sm:$0xff]
  %v61 = vld [vmem:[%s1 + $0x148] sm:$0xff]
  %v62 = vld [vmem:[%s1 + $0x150] sm:$0xff]
  %v63 = vld [vmem:[%s1 + $0x158] sm:$0xff]
  %v64 = vld [vmem:[%s1 + $0x160] sm:$0xff]
  %v65 = vld [vmem:[%s1 + $0x168] sm:$0xff]
  %v66 = vld [vmem:[%s1 + $0x170] sm:$0xff]
  %v67 = vld [vmem:[%s1 + $0x178] sm:$0xff]
  %v68 = vld [vmem:[%s1 + $0x180] sm:$0xff]
  %v69 = vld [vmem:[%s1 + $0x188] sm:$0xff]
  %v70 = vld [vmem:[%s1 + $0x190] sm:$0xff]
  %v71 = vld [vmem:[%s1 + $0x198] sm:$0xff]
  %v72 = vld [vmem:[%s1 + $0x1a0] sm:$0xff]
  %v73 = vld [vmem:[%s1 + $0x1a8] sm:$0xff]
  %v74 = vld [vmem:[%s1 + $0x1b0] sm:$0xff]
  %v75 = vld [vmem:[%s1 + $0x1b8] sm:$0xff]
  %v76 = vld [vmem:[%s1 + $0x1c0] sm:$0xff]
  %v77 = vld [vmem:[%s1 + $0x1c8] sm:$0xff]
  %v78 = vld [vmem:[%s1 + $0x1d0] sm:$0xff]
  %v79 = vld [vmem:[%s1 + $0x1d8] sm:$0xff]
  %v80 = vld [vmem:[%s1 + $0x1e0] sm:$0xff]
  %v81 = vld [vmem:[%s1 + $0x1e8] sm:$0xff]
  %v82 = vld [vmem:[%s1 + $0x1f0] sm:$0xff]
  %v83 = vld [vmem:[%s1 + $0x1f8] sm:$0xff]
  %v84 = vld [vmem:[%s1 + $0x200] sm:$0xff]
  %v85 = vld [vmem:[%s1 + $0x208] sm:$0xff]
  %v86 = vld [vmem:[%s1 + $0x210] sm:$0xff]
  %v87 = vld [vmem:[%s1 + $0x218] sm:$0xff]
  %v88 = vld [vmem:[%s1 + $0x220] sm:$0xff]
  %v89 = vld [vmem:[%s1 + $0x228] sm:$0xff]
  %v90 = vld [vmem:[%s1 + $0x230] sm:$0xff]
  %v91 = vld [vmem:[%s1 + $0x238] sm:$0xff]
  %v92 = vld [vmem:[%s1 + $0x240] sm:$0xff]
  %v93 = vld [vmem:[%s1 + $0x248] sm:$0xff]
  %v94 = vld [vmem:[%s1 + $0x250] sm:$0xff]
  %v95 = vld [vmem:[%s1 + $0x258] sm:$0xff]
  %v96 = vld [vmem:[%s1 + $0x260] sm:$0xff]
  %v97 = vld [vmem:[%s1 + $0x268] sm:$0xff]
  %v98 = vld [vmem:[%s1 + $0x270] sm:$0xff]
  %v99 = vld [vmem:[%s1 + $0x278] sm:$0xff]
  %v100 = vld [vmem:[%s1 + $0x280] sm:$0xff]
  %v101 = vld [vmem:[%s1 + $0x288] sm:$0xff]
  %v102 = vld [vmem:[%s1 + $0x290] sm:$0xff]
  %v103 = vld [vmem:[%s1 + $0x298] sm:$0xff]
  %v104 = vld [vmem:[%s1 + $0x2a0] sm:$0xff]
  %v105 = vld [vmem:[%s1 + $0x2a8] sm:$0xff]
  %v106 = vld [vmem:[%s1 + $0x2b0] sm:$0xff]
  %v107 = vld [vmem:[%s1 + $0x2b8] sm:$0xff]
  %v108 = vld [vmem:[%s1 + $0x2c0] sm:$0xff]
  %v109 = vld [vmem:[%s1 + $0x2c8] sm:$0xff]
  %v110 = vld [vmem:[%s1 + $0x2d0] sm:$0xff]
  %v111 = vld [vmem:[%s1 + $0x2d8] sm:$0xff]
  %v112 = vld [vmem:[%s1 + $0x2e0] sm:$0xff]
  %v113 = vld [vmem:[%s1 + $0x2e8] sm:$0xff]
  %v114 = vld [vmem:[%s1 + $0x2f0] sm:$0xff]
  %v115 = vld [vmem:[%s1 + $0x2f8] sm:$0xff]
  %v116 = vld [vmem:[%s1 + $0x300] sm:$0xff]
  %v117 = vld [vmem:[%s1 + $0x308] sm:$0xff]
  %v118 = vld [vmem:[%s1 + $0x310] sm:$0xff]
  %v119 = vld [vmem:[%s1 + $0x318] sm:$0xff]
  %v120 = vld [vmem:[%s1 + $0x320] sm:$0xff]
  %v121 = vld [vmem:[%s1 + $0x328] sm:$0xff]
  %v122 = vld [vmem:[%s1 + $0x330] sm:$0xff]
  %v123 = vld [vmem:[%s1 + $0x338] sm:$0xff]
  %v124 = vld [vmem:[%s1 + $0x340] sm:$0xff]
  %v125 = vld [vmem:[%s1 + $0x348] sm:$0xff]
  %v126 = vld [vmem:[%s1 + $0x350] sm:$0xff]
  %v127 = vld [vmem:[%s1 + $0x358] sm:$0xff]
  %v128 = vld [vmem:[%s1 + $0x360] sm:$0xff]
  %v129 = vld [vmem:[%s1 + $0x368] sm:$0xff]
  %v130 = vld [vmem:[%s1 + $0x370] sm:$0xff]
  %v131 = vld [vmem:[%s1 + $0x378] sm:$0xff]
  %v132 = vld [vmem:[%s1 + $0x380] sm:$0xff]
  %v133 = vld [vmem:[%s1 + $0x388] sm:$0xff]
  %v134 = vld [vmem:[%s1 + $0x390] sm:$0xff]
  %v135 = vld [vmem:[%s1 + $0x398] sm:$0xff]
  %v136 = vld [vmem:[%s1 + $0x3a0] sm:$0xff]
  %v137 = vld [vmem:[%s1 + $0x3a8] sm:$0xff]
  %v138 = vld [vmem:[%s1 + $0x3b0] sm:$0xff]
  %v139 = vld [vmem:[%s1 + $0x3b8] sm:$0xff]
  %v140 = vld [vmem:[%s1 + $0x3c0] sm:$0xff]
  %v141 = vld [vmem:[%s1 + $0x3c8] sm:$0xff]
  %v142 = vld [vmem:[%s1 + $0x3d0] sm:$0xff]
  %v143 = vld [vmem:[%s1 + $0x3d8] sm:$0xff]
  %v144 = vld [vmem:[%s1 + $0x3e0] sm:$0xff]
  %v145 = vld [vmem:[%s1 + $0x3e8] sm:$0xff]
  %v146 = vld [vmem:[%s1 + $0x3f0] sm:$0xff]
  %v147 = vld [vmem:[%s1 + $0x3f8] sm:$0xff]
  %v148 = vld [vmem:[%s1 + $0x400] sm:$0xff]
  %v149 = vld [vmem:[%s1 + $0x408] sm:$0xff]
  %v150 = vld [vmem:[%s1 + $0x410] sm:$0xff]
  %v151 = vld [vmem:[%s1 + $0x418] sm:$0xff]
  %v152 = vld [vmem:[%s1 + $0x420] sm:$0xff]
  %v153 = vld [vmem:[%s1 + $0x428] sm:$0xff]
  %v154 = vld [vmem:[%s1 + $0x430] sm:$0xff]
  %v155 = vld [vmem:[%s1 + $0x438] sm:$0xff]
  %v156 = vld [vmem:[%s1 + $0x440] sm:$0xff]
  %v157 = vld [vmem:[%s1 + $0x448] sm:$0xff]
  %v158 = vld [vmem:[%s1 + $0x450] sm:$0xff]
  %v159 = vld [vmem:[%s1 + $0x458] sm:$0xff]
  %v160 = vld [vmem:[%s1 + $0x460] sm:$0xff]
  %v161 = vld [vmem:[%s1 + $0x468] sm:$0xff]
  %v162 = vld [vmem:[%s1 + $0x470] sm:$0xff]
  %v163 = vld [vmem:[%s1 + $0x478] sm:$0xff]
  %v164 = vld [vmem:[%s2] sm:$0x3]
  %v166 = vlaneseq
  %v167 = vshrl.u32 %v166, 7
  %v168 = vsub.s32 0, %v167
  %v169 = vrot.slane %v164, %v168
  %v170 = vlaneseq
  %v171 = vshrl.u32 %v170, 7
  %v172 = vsub.s32 1, %v171
  %v173 = vrot.slane %v164, %v172
  %v181 = vunpack.c.l.b16 %v15
  %v182 = vunpack.c.h.b16 %v15
  %v183 = vunpack.c.l.b16 %v16
  %v184 = vunpack.c.h.b16 %v16
  %v185 = vunpack.c.l.b16 %v17
  %v186 = vunpack.c.h.b16 %v17
  %v187 = vunpack.c.l.b16 %v18
  %v188 = vunpack.c.h.b16 %v18
  %v189 = vunpack.c.l.b16 %v19
  %v190 = vpack.c.b16 %v181, %v181
  %v191 = vpack.c.b16 %v182, %v182
  %v192 = vpack.c.b16 %v183, %v183
  %v193 = vpack.c.b16 %v184, %v184
  %v194 = vpack.c.b16 %v185, %v185
  %v195 = vpack.c.b16 %v186, %v186
  %v196 = vpack.c.b16 %v187, %v187
  %v197 = vpack.c.b16 %v188, %v188
  %v198 = vpack.c.b16 %v189, %v189
  %v352 = vunpack.c.l.b16 %v20
  %v353 = vunpack.c.h.b16 %v20
  %v354 = vunpack.c.l.b16 %v21
  %v355 = vunpack.c.h.b16 %v21
  %v356 = vunpack.c.l.b16 %v22
  %v357 = vunpack.c.h.b16 %v22
  %v358 = vunpack.c.l.b16 %v23
  %v359 = vunpack.c.h.b16 %v23
  %v360 = vunpack.c.l.b16 %v24
  %v361 = vunpack.c.h.b16 %v24
  %v362 = vunpack.c.l.b16 %v25
  %v363 = vunpack.c.h.b16 %v25
  %v364 = vunpack.c.l.b16 %v26
  %v365 = vunpack.c.h.b16 %v26
  %v366 = vunpack.c.l.b16 %v27
  %v367 = vunpack.c.h.b16 %v27
  %v368 = vunpack.c.l.b16 %v28
  %v369 = vunpack.c.h.b16 %v28
  %v370 = vunpack.c.l.b16 %v29
  %v371 = vunpack.c.h.b16 %v29
  %v372 = vunpack.c.l.b16 %v30
  %v373 = vunpack.c.h.b16 %v30
  %v374 = vunpack.c.l.b16 %v31
  %v375 = vunpack.c.h.b16 %v31
  %v376 = vunpack.c.l.b16 %v32
  %v377 = vunpack.c.h.b16 %v32
  %v378 = vunpack.c.l.b16 %v33
  %v379 = vunpack.c.h.b16 %v33
  %v380 = vunpack.c.l.b16 %v34
  %v381 = vunpack.c.h.b16 %v34
  %v382 = vunpack.c.l.b16 %v35
  %v383 = vunpack.c.h.b16 %v35
  %v384 = vunpack.c.l.b16 %v36
  %v385 = vunpack.c.h.b16 %v36
  %v386 = vunpack.c.l.b16 %v37
  %v387 = vunpack.c.h.b16 %v37
  %v388 = vunpack.c.l.b16 %v38
  %v389 = vunpack.c.h.b16 %v38
  %v390 = vunpack.c.l.b16 %v39
  %v391 = vunpack.c.h.b16 %v39
  %v392 = vunpack.c.l.b16 %v40
  %v393 = vunpack.c.h.b16 %v40
  %v394 = vunpack.c.l.b16 %v41
  %v395 = vunpack.c.h.b16 %v41
  %v396 = vunpack.c.l.b16 %v42
  %v397 = vunpack.c.h.b16 %v42
  %v398 = vunpack.c.l.b16 %v43
  %v399 = vunpack.c.h.b16 %v43
  %v400 = vunpack.c.l.b16 %v44
  %v401 = vunpack.c.h.b16 %v44
  %v402 = vunpack.c.l.b16 %v45
  %v403 = vunpack.c.h.b16 %v45
  %v404 = vunpack.c.l.b16 %v46
  %v405 = vunpack.c.h.b16 %v46
  %v406 = vunpack.c.l.b16 %v47
  %v407 = vunpack.c.h.b16 %v47
  %v408 = vunpack.c.l.b16 %v48
  %v409 = vunpack.c.h.b16 %v48
  %v410 = vunpack.c.l.b16 %v49
  %v411 = vunpack.c.h.b16 %v49
  %v412 = vunpack.c.l.b16 %v50
  %v413 = vunpack.c.h.b16 %v50
  %v414 = vunpack.c.l.b16 %v51
  %v415 = vunpack.c.h.b16 %v51
  %v416 = vunpack.c.l.b16 %v52
  %v417 = vunpack.c.h.b16 %v52
  %v418 = vunpack.c.l.b16 %v53
  %v419 = vunpack.c.h.b16 %v53
  %v420 = vunpack.c.l.b16 %v54
  %v421 = vunpack.c.h.b16 %v54
  %v422 = vunpack.c.l.b16 %v55
  %v423 = vunpack.c.h.b16 %v55
  %v424 = vunpack.c.l.b16 %v56
  %v425 = vunpack.c.h.b16 %v56
  %v426 = vunpack.c.l.b16 %v57
  %v427 = vunpack.c.h.b16 %v57
  %v428 = vunpack.c.l.b16 %v58
  %v429 = vunpack.c.h.b16 %v58
  %v430 = vunpack.c.l.b16 %v59
  %v431 = vunpack.c.h.b16 %v59
  %v432 = vunpack.c.l.b16 %v60
  %v433 = vunpack.c.h.b16 %v60
  %v434 = vunpack.c.l.b16 %v61
  %v435 = vunpack.c.h.b16 %v61
  %v436 = vunpack.c.l.b16 %v62
  %v437 = vunpack.c.h.b16 %v62
  %v438 = vunpack.c.l.b16 %v63
  %v439 = vunpack.c.h.b16 %v63
  %v440 = vunpack.c.l.b16 %v64
  %v441 = vunpack.c.h.b16 %v64
  %v442 = vunpack.c.l.b16 %v65
  %v443 = vunpack.c.h.b16 %v65
  %v444 = vunpack.c.l.b16 %v66
  %v445 = vunpack.c.h.b16 %v66
  %v446 = vunpack.c.l.b16 %v67
  %v447 = vunpack.c.h.b16 %v67
  %v448 = vunpack.c.l.b16 %v68
  %v449 = vunpack.c.h.b16 %v68
  %v450 = vunpack.c.l.b16 %v69
  %v451 = vunpack.c.h.b16 %v69
  %v452 = vunpack.c.l.b16 %v70
  %v453 = vunpack.c.h.b16 %v70
  %v454 = vunpack.c.l.b16 %v71
  %v455 = vunpack.c.h.b16 %v71
  %v456 = vunpack.c.l.b16 %v72
  %v457 = vunpack.c.h.b16 %v72
  %v458 = vunpack.c.l.b16 %v73
  %v459 = vunpack.c.h.b16 %v73
  %v460 = vunpack.c.l.b16 %v74
  %v461 = vunpack.c.h.b16 %v74
  %v462 = vunpack.c.l.b16 %v75
  %v463 = vunpack.c.h.b16 %v75
  %v464 = vunpack.c.l.b16 %v76
  %v465 = vunpack.c.h.b16 %v76
  %v466 = vunpack.c.l.b16 %v77
  %v467 = vunpack.c.h.b16 %v77
  %v468 = vunpack.c.l.b16 %v78
  %v469 = vunpack.c.h.b16 %v78
  %v470 = vunpack.c.l.b16 %v79
  %v471 = vunpack.c.h.b16 %v79
  %v472 = vunpack.c.l.b16 %v80
  %v473 = vunpack.c.h.b16 %v80
  %v474 = vunpack.c.l.b16 %v81
  %v475 = vunpack.c.h.b16 %v81
  %v476 = vunpack.c.l.b16 %v82
  %v477 = vunpack.c.h.b16 %v82
  %v478 = vunpack.c.l.b16 %v83
  %v479 = vunpack.c.h.b16 %v83
  %v480 = vunpack.c.l.b16 %v84
  %v481 = vunpack.c.h.b16 %v84
  %v482 = vunpack.c.l.b16 %v85
  %v483 = vunpack.c.h.b16 %v85
  %v484 = vunpack.c.l.b16 %v86
  %v485 = vunpack.c.h.b16 %v86
  %v486 = vunpack.c.l.b16 %v87
  %v487 = vunpack.c.h.b16 %v87
  %v488 = vunpack.c.l.b16 %v88
  %v489 = vunpack.c.h.b16 %v88
  %v490 = vunpack.c.l.b16 %v89
  %v491 = vunpack.c.h.b16 %v89
  %v492 = vunpack.c.l.b16 %v90
  %v493 = vunpack.c.h.b16 %v90
  %v494 = vunpack.c.l.b16 %v91
  %v495 = vunpack.c.h.b16 %v91
  %v496 = vunpack.c.l.b16 %v92
  %v497 = vunpack.c.h.b16 %v92
  %v498 = vunpack.c.l.b16 %v93
  %v499 = vunpack.c.h.b16 %v93
  %v500 = vunpack.c.l.b16 %v94
  %v501 = vunpack.c.h.b16 %v94
  %v502 = vunpack.c.l.b16 %v95
  %v503 = vunpack.c.h.b16 %v95
  %v504 = vunpack.c.l.b16 %v96
  %v505 = vunpack.c.h.b16 %v96
  %v506 = vunpack.c.l.b16 %v97
  %v507 = vunpack.c.h.b16 %v97
  %v508 = vunpack.c.l.b16 %v98
  %v509 = vunpack.c.h.b16 %v98
  %v510 = vunpack.c.l.b16 %v99
  %v511 = vunpack.c.h.b16 %v99
  %v512 = vunpack.c.l.b16 %v100
  %v513 = vunpack.c.h.b16 %v100
  %v514 = vunpack.c.l.b16 %v101
  %v515 = vunpack.c.h.b16 %v101
  %v516 = vunpack.c.l.b16 %v102
  %v517 = vunpack.c.h.b16 %v102
  %v518 = vunpack.c.l.b16 %v103
  %v519 = vunpack.c.h.b16 %v103
  %v520 = vunpack.c.l.b16 %v104
  %v521 = vunpack.c.h.b16 %v104
  %v522 = vunpack.c.l.b16 %v105
  %v523 = vunpack.c.h.b16 %v105
  %v524 = vunpack.c.l.b16 %v106
  %v525 = vunpack.c.h.b16 %v106
  %v526 = vunpack.c.l.b16 %v107
  %v527 = vunpack.c.h.b16 %v107
  %v528 = vunpack.c.l.b16 %v108
  %v529 = vunpack.c.h.b16 %v108
  %v530 = vunpack.c.l.b16 %v109
  %v531 = vunpack.c.h.b16 %v109
  %v532 = vunpack.c.l.b16 %v110
  %v533 = vunpack.c.h.b16 %v110
  %v534 = vunpack.c.l.b16 %v111
  %v535 = vunpack.c.h.b16 %v111
  %v536 = vunpack.c.l.b16 %v112
  %v537 = vunpack.c.h.b16 %v112
  %v538 = vunpack.c.l.b16 %v113
  %v539 = vunpack.c.h.b16 %v113
  %v540 = vunpack.c.l.b16 %v114
  %v541 = vunpack.c.h.b16 %v114
  %v542 = vunpack.c.l.b16 %v115
  %v543 = vunpack.c.h.b16 %v115
  %v544 = vunpack.c.l.b16 %v116
  %v545 = vunpack.c.h.b16 %v116
  %v546 = vunpack.c.l.b16 %v117
  %v547 = vunpack.c.h.b16 %v117
  %v548 = vunpack.c.l.b16 %v118
  %v549 = vunpack.c.h.b16 %v118
  %v550 = vunpack.c.l.b16 %v119
  %v551 = vunpack.c.h.b16 %v119
  %v552 = vunpack.c.l.b16 %v120
  %v553 = vunpack.c.h.b16 %v120
  %v554 = vunpack.c.l.b16 %v121
  %v555 = vunpack.c.h.b16 %v121
  %v556 = vunpack.c.l.b16 %v122
  %v557 = vunpack.c.h.b16 %v122
  %v558 = vunpack.c.l.b16 %v123
  %v559 = vunpack.c.h.b16 %v123
  %v560 = vunpack.c.l.b16 %v124
  %v561 = vunpack.c.h.b16 %v124
  %v562 = vunpack.c.l.b16 %v125
  %v563 = vunpack.c.h.b16 %v125
  %v564 = vunpack.c.l.b16 %v126
  %v565 = vunpack.c.h.b16 %v126
  %v566 = vunpack.c.l.b16 %v127
  %v567 = vunpack.c.h.b16 %v127
  %v568 = vunpack.c.l.b16 %v128
  %v569 = vunpack.c.h.b16 %v128
  %v570 = vunpack.c.l.b16 %v129
  %v571 = vunpack.c.h.b16 %v129
  %v572 = vunpack.c.l.b16 %v130
  %v573 = vunpack.c.h.b16 %v130
  %v574 = vunpack.c.l.b16 %v131
  %v575 = vunpack.c.h.b16 %v131
  %v576 = vunpack.c.l.b16 %v132
  %v577 = vunpack.c.h.b16 %v132
  %v578 = vunpack.c.l.b16 %v133
  %v579 = vunpack.c.h.b16 %v133
  %v580 = vunpack.c.l.b16 %v134
  %v581 = vunpack.c.h.b16 %v134
  %v582 = vunpack.c.l.b16 %v135
  %v583 = vunpack.c.h.b16 %v135
  %v584 = vunpack.c.l.b16 %v136
  %v585 = vunpack.c.h.b16 %v136
  %v586 = vunpack.c.l.b16 %v137
  %v587 = vunpack.c.h.b16 %v137
  %v588 = vunpack.c.l.b16 %v138
  %v589 = vunpack.c.h.b16 %v138
  %v590 = vunpack.c.l.b16 %v139
  %v591 = vunpack.c.h.b16 %v139
  %v592 = vunpack.c.l.b16 %v140
  %v593 = vunpack.c.h.b16 %v140
  %v594 = vunpack.c.l.b16 %v141
  %v595 = vunpack.c.h.b16 %v141
  %v596 = vunpack.c.l.b16 %v142
  %v597 = vunpack.c.h.b16 %v142
  %v598 = vunpack.c.l.b16 %v143
  %v599 = vunpack.c.h.b16 %v143
  %v600 = vunpack.c.l.b16 %v144
  %v601 = vunpack.c.h.b16 %v144
  %v602 = vunpack.c.l.b16 %v145
  %v603 = vunpack.c.h.b16 %v145
  %v604 = vunpack.c.l.b16 %v146
  %v605 = vunpack.c.h.b16 %v146
  %v606 = vunpack.c.l.b16 %v147
  %v607 = vunpack.c.h.b16 %v147
  %v608 = vunpack.c.l.b16 %v148
  %v609 = vunpack.c.h.b16 %v148
  %v610 = vunpack.c.l.b16 %v149
  %v611 = vunpack.c.h.b16 %v149
  %v612 = vunpack.c.l.b16 %v150
  %v613 = vunpack.c.h.b16 %v150
  %v614 = vunpack.c.l.b16 %v151
  %v615 = vunpack.c.h.b16 %v151
  %v616 = vunpack.c.l.b16 %v152
  %v617 = vunpack.c.h.b16 %v152
  %v618 = vunpack.c.l.b16 %v153
  %v619 = vunpack.c.h.b16 %v153
  %v620 = vunpack.c.l.b16 %v154
  %v621 = vunpack.c.h.b16 %v154
  %v622 = vunpack.c.l.b16 %v155
  %v623 = vunpack.c.h.b16 %v155
  %v624 = vunpack.c.l.b16 %v156
  %v625 = vunpack.c.h.b16 %v156
  %v626 = vunpack.c.l.b16 %v157
  %v627 = vunpack.c.h.b16 %v157
  %v628 = vunpack.c.l.b16 %v158
  %v629 = vunpack.c.h.b16 %v158
  %v630 = vunpack.c.l.b16 %v159
  %v631 = vunpack.c.h.b16 %v159
  %v632 = vunpack.c.l.b16 %v160
  %v633 = vunpack.c.h.b16 %v160
  %v634 = vunpack.c.l.b16 %v161
  %v635 = vunpack.c.h.b16 %v161
  %v636 = vunpack.c.l.b16 %v162
  %v637 = vunpack.c.h.b16 %v162
  %v638 = vunpack.c.l.b16 %v163
  %v639 = vunpack.c.h.b16 %v163
  %v640 = vpack.c.b16 %v354, %v352
  %v641 = vpack.c.b16 %v355, %v353
  %v642 = vpack.c.b16 %v358, %v356
  %v643 = vpack.c.b16 %v359, %v357
  %v644 = vpack.c.b16 %v362, %v360
  %v645 = vpack.c.b16 %v363, %v361
  %v646 = vpack.c.b16 %v366, %v364
  %v647 = vpack.c.b16 %v367, %v365
  %v648 = vpack.c.b16 %v370, %v368
  %v649 = vpack.c.b16 %v371, %v369
  %v650 = vpack.c.b16 %v374, %v372
  %v651 = vpack.c.b16 %v375, %v373
  %v652 = vpack.c.b16 %v378, %v376
  %v653 = vpack.c.b16 %v379, %v377
  %v654 = vpack.c.b16 %v382, %v380
  %v655 = vpack.c.b16 %v383, %v381
  %v656 = vpack.c.b16 %v386, %v384
  %v657 = vpack.c.b16 %v387, %v385
  %v658 = vpack.c.b16 %v390, %v388
  %v659 = vpack.c.b16 %v391, %v389
  %v660 = vpack.c.b16 %v394, %v392
  %v661 = vpack.c.b16 %v395, %v393
  %v662 = vpack.c.b16 %v398, %v396
  %v663 = vpack.c.b16 %v399, %v397
  %v664 = vpack.c.b16 %v402, %v400
  %v665 = vpack.c.b16 %v403, %v401
  %v666 = vpack.c.b16 %v406, %v404
  %v667 = vpack.c.b16 %v407, %v405
  %v668 = vpack.c.b16 %v410, %v408
  %v669 = vpack.c.b16 %v411, %v409
  %v670 = vpack.c.b16 %v414, %v412
  %v671 = vpack.c.b16 %v415, %v413
  %v672 = vpack.c.b16 %v418, %v416
  %v673 = vpack.c.b16 %v419, %v417
  %v674 = vpack.c.b16 %v422, %v420
  %v675 = vpack.c.b16 %v423, %v421
  %v676 = vpack.c.b16 %v426, %v424
  %v677 = vpack.c.b16 %v427, %v425
  %v678 = vpack.c.b16 %v430, %v428
  %v679 = vpack.c.b16 %v431, %v429
  %v680 = vpack.c.b16 %v434, %v432
  %v681 = vpack.c.b16 %v435, %v433
  %v682 = vpack.c.b16 %v438, %v436
  %v683 = vpack.c.b16 %v439, %v437
  %v684 = vpack.c.b16 %v442, %v440
  %v685 = vpack.c.b16 %v443, %v441
  %v686 = vpack.c.b16 %v446, %v444
  %v687 = vpack.c.b16 %v447, %v445
  %v688 = vpack.c.b16 %v450, %v448
  %v689 = vpack.c.b16 %v451, %v449
  %v690 = vpack.c.b16 %v454, %v452
  %v691 = vpack.c.b16 %v455, %v453
  %v692 = vpack.c.b16 %v458, %v456
  %v693 = vpack.c.b16 %v459, %v457
  %v694 = vpack.c.b16 %v462, %v460
  %v695 = vpack.c.b16 %v463, %v461
  %v696 = vpack.c.b16 %v466, %v464
  %v697 = vpack.c.b16 %v467, %v465
  %v698 = vpack.c.b16 %v470, %v468
  %v699 = vpack.c.b16 %v471, %v469
  %v700 = vpack.c.b16 %v474, %v472
  %v701 = vpack.c.b16 %v475, %v473
  %v702 = vpack.c.b16 %v478, %v476
  %v703 = vpack.c.b16 %v479, %v477
  %v704 = vpack.c.b16 %v482, %v480
  %v705 = vpack.c.b16 %v483, %v481
  %v706 = vpack.c.b16 %v486, %v484
  %v707 = vpack.c.b16 %v487, %v485
  %v708 = vpack.c.b16 %v490, %v488
  %v709 = vpack.c.b16 %v491, %v489
  %v710 = vpack.c.b16 %v494, %v492
  %v711 = vpack.c.b16 %v495, %v493
  %v712 = vpack.c.b16 %v498, %v496
  %v713 = vpack.c.b16 %v499, %v497
  %v714 = vpack.c.b16 %v502, %v500
  %v715 = vpack.c.b16 %v503, %v501
  %v716 = vpack.c.b16 %v506, %v504
  %v717 = vpack.c.b16 %v507, %v505
  %v718 = vpack.c.b16 %v510, %v508
  %v719 = vpack.c.b16 %v511, %v509
  %v720 = vpack.c.b16 %v514, %v512
  %v721 = vpack.c.b16 %v515, %v513
  %v722 = vpack.c.b16 %v518, %v516
  %v723 = vpack.c.b16 %v519, %v517
  %v724 = vpack.c.b16 %v522, %v520
  %v725 = vpack.c.b16 %v523, %v521
  %v726 = vpack.c.b16 %v526, %v524
  %v727 = vpack.c.b16 %v527, %v525
  %v728 = vpack.c.b16 %v530, %v528
  %v729 = vpack.c.b16 %v531, %v529
  %v730 = vpack.c.b16 %v534, %v532
  %v731 = vpack.c.b16 %v535, %v533
  %v732 = vpack.c.b16 %v538, %v536
  %v733 = vpack.c.b16 %v539, %v537
  %v734 = vpack.c.b16 %v542, %v540
  %v735 = vpack.c.b16 %v543, %v541
  %v736 = vpack.c.b16 %v546, %v544
  %v737 = vpack.c.b16 %v547, %v545
  %v738 = vpack.c.b16 %v550, %v548
  %v739 = vpack.c.b16 %v551, %v549
  %v740 = vpack.c.b16 %v554, %v552
  %v741 = vpack.c.b16 %v555, %v553
  %v742 = vpack.c.b16 %v558, %v556
  %v743 = vpack.c.b16 %v559, %v557
  %v744 = vpack.c.b16 %v562, %v560
  %v745 = vpack.c.b16 %v563, %v561
  %v746 = vpack.c.b16 %v566, %v564
  %v747 = vpack.c.b16 %v567, %v565
  %v748 = vpack.c.b16 %v570, %v568
  %v749 = vpack.c.b16 %v571, %v569
  %v750 = vpack.c.b16 %v574, %v572
  %v751 = vpack.c.b16 %v575, %v573
  %v752 = vpack.c.b16 %v578, %v576
  %v753 = vpack.c.b16 %v579, %v577
  %v754 = vpack.c.b16 %v582, %v580
  %v755 = vpack.c.b16 %v583, %v581
  %v756 = vpack.c.b16 %v586, %v584
  %v757 = vpack.c.b16 %v587, %v585
  %v758 = vpack.c.b16 %v590, %v588
  %v759 = vpack.c.b16 %v591, %v589
  %v760 = vpack.c.b16 %v594, %v592
  %v761 = vpack.c.b16 %v595, %v593
  %v762 = vpack.c.b16 %v598, %v596
  %v763 = vpack.c.b16 %v599, %v597
  %v764 = vpack.c.b16 %v602, %v600
  %v765 = vpack.c.b16 %v603, %v601
  %v766 = vpack.c.b16 %v606, %v604
  %v767 = vpack.c.b16 %v607, %v605
  %v768 = vpack.c.b16 %v610, %v608
  %v769 = vpack.c.b16 %v611, %v609
  %v770 = vpack.c.b16 %v614, %v612
  %v771 = vpack.c.b16 %v615, %v613
  %v772 = vpack.c.b16 %v618, %v616
  %v773 = vpack.c.b16 %v619, %v617
  %v774 = vpack.c.b16 %v622, %v620
  %v775 = vpack.c.b16 %v623, %v621
  %v776 = vpack.c.b16 %v626, %v624
  %v777 = vpack.c.b16 %v627, %v625
  %v778 = vpack.c.b16 %v630, %v628
  %v779 = vpack.c.b16 %v631, %v629
  %v780 = vpack.c.b16 %v634, %v632
  %v781 = vpack.c.b16 %v635, %v633
  %v782 = vpack.c.b16 %v638, %v636
  %v783 = vpack.c.b16 %v639, %v637
  %928 = vmatprep.subr.bf16.mxu0 %v655
  %929 = vmatpush1.bf16.msra.mxu0 %v654
  %930 = vmatprep.subr.bf16.mxu0 %v653
  %931 = vmatpush1.bf16.msra.mxu0 %v652
  %932 = vmatprep.subr.bf16.mxu0 %v651
  %933 = vmatpush1.bf16.msra.mxu0 %v650
  %934 = vmatprep.subr.bf16.mxu0 %v649
  %935 = vmatpush1.bf16.msra.mxu0 %v648
  %936 = vmatprep.subr.bf16.mxu0 %v647
  %937 = vmatpush1.bf16.msra.mxu0 %v646
  %938 = vmatprep.subr.bf16.mxu0 %v645
  %939 = vmatpush1.bf16.msra.mxu0 %v644
  %940 = vmatprep.subr.bf16.mxu0 %v643
  %941 = vmatpush1.bf16.msra.mxu0 %v642
  %942 = vmatprep.subr.bf16.mxu0 %v641
  %943 = vmatpush1.bf16.msra.mxu0 %v640
  %944 = vmatprep.subr.bf16.mxu0 %v671
  %945 = vmatpush2.bf16.msra.mxu0 %v670
  %946 = vmatprep.subr.bf16.mxu0 %v669
  %947 = vmatpush2.bf16.msra.mxu0 %v668
  %948 = vmatprep.subr.bf16.mxu0 %v667
  %949 = vmatpush2.bf16.msra.mxu0 %v666
  %950 = vmatprep.subr.bf16.mxu0 %v665
  %951 = vmatpush2.bf16.msra.mxu0 %v664
  %952 = vmatprep.subr.bf16.mxu0 %v663
  %953 = vmatpush2.bf16.msra.mxu0 %v662
  %954 = vmatprep.subr.bf16.mxu0 %v661
  %955 = vmatpush2.bf16.msra.mxu0 %v660
  %956 = vmatprep.subr.bf16.mxu0 %v659
  %957 = vmatpush2.bf16.msra.mxu0 %v658
  %958 = vmatprep.subr.bf16.mxu0 %v657
  %959 = vmatpush2.bf16.msra.mxu0 %v656
  %960 = vmatprep.mubr.bf16.mxu0 %v191
  %961 = vmatmul.mubr.bf16.gmra.mxu0 %v190
  %v962 = vpop.f32.mrf.mxu0
  %v963 = vadd.f32 %v169, %v962
  %v964 = vpop.f32.mrf.mxu0
  %v965 = vadd.f32 %v173, %v964
  %v966 = vpop.f32.mrf.mxu0
  %v967 = vpop.f32.mrf.mxu0
  %968 = vdwg.mxu0
  %969 = vmatprep.subr.bf16.mxu0 %v687
  %970 = vmatpush1.bf16.msra.mxu0 %v686
  %971 = vmatprep.subr.bf16.mxu0 %v685
  %972 = vmatpush1.bf16.msra.mxu0 %v684
  %973 = vmatprep.subr.bf16.mxu0 %v683
  %974 = vmatpush1.bf16.msra.mxu0 %v682
  %975 = vmatprep.subr.bf16.mxu0 %v681
  %976 = vmatpush1.bf16.msra.mxu0 %v680
  %977 = vmatprep.subr.bf16.mxu0 %v679
  %978 = vmatpush1.bf16.msra.mxu0 %v678
  %979 = vmatprep.subr.bf16.mxu0 %v677
  %980 = vmatpush1.bf16.msra.mxu0 %v676
  %981 = vmatprep.subr.bf16.mxu0 %v675
  %982 = vmatpush1.bf16.msra.mxu0 %v674
  %983 = vmatprep.subr.bf16.mxu0 %v673
  %984 = vmatpush1.bf16.msra.mxu0 %v672
  %985 = vmatprep.subr.bf16.mxu0 %v703
  %986 = vmatpush2.bf16.msra.mxu0 %v702
  %987 = vmatprep.subr.bf16.mxu0 %v701
  %988 = vmatpush2.bf16.msra.mxu0 %v700
  %989 = vmatprep.subr.bf16.mxu0 %v699
  %990 = vmatpush2.bf16.msra.mxu0 %v698
  %991 = vmatprep.subr.bf16.mxu0 %v697
  %992 = vmatpush2.bf16.msra.mxu0 %v696
  %993 = vmatprep.subr.bf16.mxu0 %v695
  %994 = vmatpush2.bf16.msra.mxu0 %v694
  %995 = vmatprep.subr.bf16.mxu0 %v693
  %996 = vmatpush2.bf16.msra.mxu0 %v692
  %997 = vmatprep.subr.bf16.mxu0 %v691
  %998 = vmatpush2.bf16.msra.mxu0 %v690
  %999 = vmatprep.subr.bf16.mxu0 %v689
  %1000 = vmatpush2.bf16.msra.mxu0 %v688
  %1001 = vmatprep.mubr.bf16.mxu0 %v193
  %1002 = vmatmul.mubr.bf16.gmra.mxu0 %v192
  %v1003 = vpop.f32.mrf.mxu0
  %v1004 = vadd.f32 %v963, %v1003
  %v1005 = vpop.f32.mrf.mxu0
  %v1006 = vadd.f32 %v965, %v1005
  %v1007 = vpop.f32.mrf.mxu0
  %v1008 = vpop.f32.mrf.mxu0
  %1009 = vdwg.mxu0
  %1010 = vmatprep.subr.bf16.mxu0 %v719
  %1011 = vmatpush1.bf16.msra.mxu0 %v718
  %1012 = vmatprep.subr.bf16.mxu0 %v717
  %1013 = vmatpush1.bf16.msra.mxu0 %v716
  %1014 = vmatprep.subr.bf16.mxu0 %v715
  %1015 = vmatpush1.bf16.msra.mxu0 %v714
  %1016 = vmatprep.subr.bf16.mxu0 %v713
  %1017 = vmatpush1.bf16.msra.mxu0 %v712
  %1018 = vmatprep.subr.bf16.mxu0 %v711
  %1019 = vmatpush1.bf16.msra.mxu0 %v710
  %1020 = vmatprep.subr.bf16.mxu0 %v709
  %1021 = vmatpush1.bf16.msra.mxu0 %v708
  %1022 = vmatprep.subr.bf16.mxu0 %v707
  %1023 = vmatpush1.bf16.msra.mxu0 %v706
  %1024 = vmatprep.subr.bf16.mxu0 %v705
  %1025 = vmatpush1.bf16.msra.mxu0 %v704
  %1026 = vmatprep.subr.bf16.mxu0 %v735
  %1027 = vmatpush2.bf16.msra.mxu0 %v734
  %1028 = vmatprep.subr.bf16.mxu0 %v733
  %1029 = vmatpush2.bf16.msra.mxu0 %v732
  %1030 = vmatprep.subr.bf16.mxu0 %v731
  %1031 = vmatpush2.bf16.msra.mxu0 %v730
  %1032 = vmatprep.subr.bf16.mxu0 %v729
  %1033 = vmatpush2.bf16.msra.mxu0 %v728
  %1034 = vmatprep.subr.bf16.mxu0 %v727
  %1035 = vmatpush2.bf16.msra.mxu0 %v726
  %1036 = vmatprep.subr.bf16.mxu0 %v725
  %1037 = vmatpush2.bf16.msra.mxu0 %v724
  %1038 = vmatprep.subr.bf16.mxu0 %v723
  %1039 = vmatpush2.bf16.msra.mxu0 %v722
  %1040 = vmatprep.subr.bf16.mxu0 %v721
  %1041 = vmatpush2.bf16.msra.mxu0 %v720
  %1042 = vmatprep.mubr.bf16.mxu0 %v195
  %1043 = vmatmul.mubr.bf16.gmra.mxu0 %v194
  %v1044 = vpop.f32.mrf.mxu0
  %v1045 = vadd.f32 %v1004, %v1044
  %v1046 = vpop.f32.mrf.mxu0
  %v1047 = vadd.f32 %v1006, %v1046
  %v1048 = vpop.f32.mrf.mxu0
  %v1049 = vpop.f32.mrf.mxu0
  %1050 = vdwg.mxu0
  %1051 = vmatprep.subr.bf16.mxu0 %v751
  %1052 = vmatpush1.bf16.msra.mxu0 %v750
  %1053 = vmatprep.subr.bf16.mxu0 %v749
  %1054 = vmatpush1.bf16.msra.mxu0 %v748
  %1055 = vmatprep.subr.bf16.mxu0 %v747
  %1056 = vmatpush1.bf16.msra.mxu0 %v746
  %1057 = vmatprep.subr.bf16.mxu0 %v745
  %1058 = vmatpush1.bf16.msra.mxu0 %v744
  %1059 = vmatprep.subr.bf16.mxu0 %v743
  %1060 = vmatpush1.bf16.msra.mxu0 %v742
  %1061 = vmatprep.subr.bf16.mxu0 %v741
  %1062 = vmatpush1.bf16.msra.mxu0 %v740
  %1063 = vmatprep.subr.bf16.mxu0 %v739
  %1064 = vmatpush1.bf16.msra.mxu0 %v738
  %1065 = vmatprep.subr.bf16.mxu0 %v737
  %1066 = vmatpush1.bf16.msra.mxu0 %v736
  %1067 = vmatprep.subr.bf16.mxu0 %v767
  %1068 = vmatpush2.bf16.msra.mxu0 %v766
  %1069 = vmatprep.subr.bf16.mxu0 %v765
  %1070 = vmatpush2.bf16.msra.mxu0 %v764
  %1071 = vmatprep.subr.bf16.mxu0 %v763
  %1072 = vmatpush2.bf16.msra.mxu0 %v762
  %1073 = vmatprep.subr.bf16.mxu0 %v761
  %1074 = vmatpush2.bf16.msra.mxu0 %v760
  %1075 = vmatprep.subr.bf16.mxu0 %v759
  %1076 = vmatpush2.bf16.msra.mxu0 %v758
  %1077 = vmatprep.subr.bf16.mxu0 %v757
  %1078 = vmatpush2.bf16.msra.mxu0 %v756
  %1079 = vmatprep.subr.bf16.mxu0 %v755
  %1080 = vmatpush2.bf16.msra.mxu0 %v754
  %1081 = vmatprep.subr.bf16.mxu0 %v753
  %1082 = vmatpush2.bf16.msra.mxu0 %v752
  %1083 = vmatprep.mubr.bf16.mxu0 %v197
  %1084 = vmatmul.mubr.bf16.gmra.mxu0 %v196
  %v1085 = vpop.f32.mrf.mxu0
  %v1086 = vadd.f32 %v1045, %v1085
  %v1087 = vpop.f32.mrf.mxu0
  %v1088 = vadd.f32 %v1047, %v1087
  %v1089 = vpop.f32.mrf.mxu0
  %v1090 = vpop.f32.mrf.mxu0
  %1091 = vdwg.mxu0
  %1092 = vmatprep.subr.bf16.mxu0 %v783
  %1093 = vmatpush1.bf16.msra.mxu0 %v782
  %1094 = vmatprep.subr.bf16.mxu0 %v781
  %1095 = vmatpush1.bf16.msra.mxu0 %v780
  %1096 = vmatprep.subr.bf16.mxu0 %v779
  %1097 = vmatpush1.bf16.msra.mxu0 %v778
  %1098 = vmatprep.subr.bf16.mxu0 %v777
  %1099 = vmatpush1.bf16.msra.mxu0 %v776
  %1100 = vmatprep.subr.bf16.mxu0 %v775
  %1101 = vmatpush1.bf16.msra.mxu0 %v774
  %1102 = vmatprep.subr.bf16.mxu0 %v773
  %1103 = vmatpush1.bf16.msra.mxu0 %v772
  %1104 = vmatprep.subr.bf16.mxu0 %v771
  %1105 = vmatpush1.bf16.msra.mxu0 %v770
  %1106 = vmatprep.subr.bf16.mxu0 %v769
  %1107 = vmatpush1.bf16.msra.mxu0 %v768
  %1108 = vmatprep.subr.bf16.mxu0 0
  %1109 = vmatpush2.bf16.msra.mxu0 0
  %1110 = vmatprep.subr.bf16.mxu0 0
  %1111 = vmatpush2.bf16.msra.mxu0 0
  %1112 = vmatprep.subr.bf16.mxu0 0
  %1113 = vmatpush2.bf16.msra.mxu0 0
  %1114 = vmatprep.subr.bf16.mxu0 0
  %1115 = vmatpush2.bf16.msra.mxu0 0
  %1116 = vmatprep.subr.bf16.mxu0 0
  %1117 = vmatpush2.bf16.msra.mxu0 0
  %1118 = vmatprep.subr.bf16.mxu0 0
  %1119 = vmatpush2.bf16.msra.mxu0 0
  %1120 = vmatprep.subr.bf16.mxu0 0
  %1121 = vmatpush2.bf16.msra.mxu0 0
  %1122 = vmatprep.subr.bf16.mxu0 0
  %1123 = vmatpush2.bf16.msra.mxu0 0
  %1124 = vmatprep.mubr.bf16.mxu0 0
  %1125 = vmatmul.mubr.bf16.gmra.mxu0 %v198
  %v1126 = vpop.f32.mrf.mxu0
  %v1127 = vadd.f32 %v1086, %v1126
  %v1128 = vpop.f32.mrf.mxu0
  %v1129 = vadd.f32 %v1088, %v1128
  %v1130 = vpop.f32.mrf.mxu0
  %v1131 = vpop.f32.mrf.mxu0
  %1132 = vdwg.mxu0
  %v1133 = vmax.f32 %v1127, 0.0
  %v1134 = vmax.f32 %v1129, 0.0
  %v1135 = vpack.c.bf16 %v1133, %v1133
  %v1136 = vpack.c.bf16 %v1134, %v1134
  %v1139 = vunpack.c.l.b16 %v1135
  %v1140 = vunpack.c.l.b16 %v1136
  %v1141 = vpack.c.b16 %v1140, %v1139
  %1143 = vst [vmem:[%s3] sm:$0xff] %v1141
  // Predicated region
  $region14: #{_lambda_.18} parent=0 // pred_check
    _
  $region15: #{_lambda_.18} parent=0 // pred_check_branch
    %1145 = sbr.rel (0) target = $region17
  $region16: #{_lambda_.18} parent=0 // pred_region
    _
  $region17: #{_lambda_.18} parent=0 // pred_fallthru
    _
  // Predicated region
  $region18: #{_lambda_.18} parent=0 // pred_check
    _
  $region19: #{_lambda_.18} parent=0 // pred_check_branch
    %1147 = sbr.rel (0) target = $region21
  $region20: #{_lambda_.18} parent=0 // pred_region
    _
  $region21: #{_lambda_.18} parent=0 // pred_fallthru
    _

// kernel: _lambda_.19
$region0: #{_lambda_.19}
  #allocation0 [shape = 'u32[]', space=smem, size = 0x4, offset = 0x4, fixed_abs, tag = 'smem constant byte address 0x4 - core index']
  #allocation1 [shape = 'u32[144,128]{1,0:T(1,128)}', space=vmem, size = 0x12000, scoped, tag = 'internal scratch']
  #allocation2 [shape = 'f32[8,256]{1,0:T(8,128)}', space=vmem, size = 0x2000, scoped, tag = 'scratch operand']
  %s0 = inlined_call_operand.vmem [shape: bf16[8,2304], index: 0, kind: input, shape index: {}]
  %s1 = inlined_call_operand.vmem [shape: bf16[2304,256], index: 1, kind: input, shape index: {}]
  %s2 = inlined_call_operand.vmem [shape: f32[1,256], index: 2, kind: input, shape index: {}]
  %s3 = inlined_call_operand.vmem [shape: bf16[8,256], index: 3, kind: input, shape index: {}]
  %s4 = inlined_call_operand.vmem [shape: bf16[8,256], index: 4, kind: output, shape index: {}]
  %s5 = sld [smem:[#allocation0]]
  $region57: #{_lambda_.19} parent=0
    _
  %s7 = ssub.s32 1, %s5
  %s8 = scalar_select 0, %s7, %s5
  loop: start=0, step=1, limit=4
  $region2: #{_lambda_.19} parent=0 // loop_pre_header
    _
  $region3: #{_lambda_.19} parent=0 // loop_header
    %s10 = sphi 0, %s14
    %p11 = scmp.ge.s32.totalorder %s10, 4
    %s17 = sphi 0, %s29
    %s18 = sphi 0, %s25
    %s19 = sphi 0, %s17
    %s20 = sphi 0, %s18
    %s21 = sphi 0, %s19
    %s22 = sphi 0, %s20
    %s34 = sphi 0, %s36
    %s37 = sphi 0, %s34
    %s38 = sphi 0, %s37
    %s54 = sphi 0, %s38
    %s60 = sphi 0, %s62
    %s63 = sphi 0, %s60
    %s64 = sphi 0, %s63
    %s80 = sphi 0, %s64
    %s84 = sphi 0, %s84
    %s86 = sphi 0, %s84
    %s87 = sphi 0, %s86
    %s101 = sphi 0, %s87
    %s107 = sphi 0, %s109
    %s110 = sphi 0, %s107
    %s111 = sphi 0, %s110
    %s127 = sphi 0, %s111
    %s133 = sphi 0, %s135
    %s136 = sphi 0, %s133
    %s137 = sphi 0, %s136
    %s153 = sphi 0, %s137
  $region4: #{_lambda_.19} parent=0 // loop_header_branch
    %13 = sbr.rel (%p11) target = $region8
  $region5: #{_lambda_.19} parent=0 // loop_body
    %s15 = ssub.s32 %s10, 1
    %s16 = ssub.s32 %s10, 2
    %s23 = sadd.s32 1, %s18
    %p24 = scmp.ge.s32.totalorder %s23, 2
    %s25 = scalar_select %p24, 0, %s23
    %s26 = sadd.s32 1, %s17
    %s27 = scalar_select %p24, %s26, %s17
    %p28 = scmp.ge.s32.totalorder %s27, 1
    %s29 = scalar_select %p28, 0, %s27
    %s30 = ssub.s32 %s17, %s29
    %s31 = ssub.s32 %s18, %s25
    %s32 = sor.u32 %s30, %s31
    %p33 = scmp.eq.s32.totalorder %s32, 0
    %s35 = sadd.s32 %s34, 1
    %s36 = scalar_select %p33, %s34, %s35
    %p39 = pneg %p33
    %p40 = scmp.eq.s32.totalorder %s10, 1
    %p41 = por %p39, %p40
    %p42 = scmp.ne.s32.totalorder %s34, %s37
    %p43 = scmp.eq.s32.totalorder %s10, 0
    %p44 = por %p42, %p43
    %p45 = scmp.ne.s32.totalorder %s34, %s37
    %p46 = scmp.eq.s32.totalorder %s15, 1
    %p47 = por %p45, %p46
    %p48 = scmp.ne.s32.totalorder %s37, %s38
    %p49 = scmp.eq.s32.totalorder %s15, 0
    %p50 = por %p48, %p49
    %p51 = scmp.ne.s32.totalorder %s37, %s38
    %p52 = scmp.eq.s32.totalorder %s16, 1
    %p53 = por %p51, %p52
    %p55 = scmp.ne.s32.totalorder %s38, %s54
    %p56 = scmp.eq.s32.totalorder %s16, 0
    %p57 = por %p55, %p56
    %s58 = ssub.s32 %s18, %s25
    %p59 = scmp.eq.s32.totalorder %s58, 0
    %s61 = sadd.s32 %s60, 1
    %s62 = scalar_select %p59, %s60, %s61
    %p65 = pneg %p59
    %p66 = scmp.eq.s32.totalorder %s10, 1
    %p67 = por %p65, %p66
    %p68 = scmp.ne.s32.totalorder %s60, %s63
    %p69 = scmp.eq.s32.totalorder %s10, 0
    %p70 = por %p68, %p69
    %p71 = scmp.ne.s32.totalorder %s60, %s63
    %p72 = scmp.eq.s32.totalorder %s15, 1
    %p73 = por %p71, %p72
    %p74 = scmp.ne.s32.totalorder %s63, %s64
    %p75 = scmp.eq.s32.totalorder %s15, 0
    %p76 = por %p74, %p75
    %p77 = scmp.ne.s32.totalorder %s63, %s64
    %p78 = scmp.eq.s32.totalorder %s16, 1
    %p79 = por %p77, %p78
    %p81 = scmp.ne.s32.totalorder %s64, %s80
    %p82 = scmp.eq.s32.totalorder %s16, 0
    %p83 = por %p81, %p82
    %s85 = sadd.s32 %s84, 1
    %p88 = scmp.eq.s32.totalorder %s10, 1
    %p89 = scmp.ne.s32.totalorder %s84, %s86
    %p90 = scmp.eq.s32.totalorder %s10, 0
    %p91 = por %p89, %p90
    %p92 = scmp.ne.s32.totalorder %s84, %s86
    %p93 = scmp.eq.s32.totalorder %s15, 1
    %p94 = por %p92, %p93
    %p95 = scmp.ne.s32.totalorder %s86, %s87
    %p96 = scmp.eq.s32.totalorder %s15, 0
    %p97 = por %p95, %p96
    %p98 = scmp.ne.s32.totalorder %s86, %s87
    %p99 = scmp.eq.s32.totalorder %s16, 1
    %p100 = por %p98, %p99
    %p102 = scmp.ne.s32.totalorder %s87, %s101
    %p103 = scmp.eq.s32.totalorder %s16, 0
    %p104 = por %p102, %p103
    %s105 = ssub.s32 %s17, %s29
    %p106 = scmp.eq.s32.totalorder %s105, 0
    %s108 = sadd.s32 %s107, 1
    %s109 = scalar_select %p106, %s107, %s108
    %p112 = pneg %p106
    %p113 = scmp.eq.s32.totalorder %s10, 1
    %p114 = por %p112, %p113
    %p115 = scmp.ne.s32.totalorder %s107, %s110
    %p116 = scmp.eq.s32.totalorder %s10, 0
    %p117 = por %p115, %p116
    %p118 = scmp.ne.s32.totalorder %s107, %s110
    %p119 = scmp.eq.s32.totalorder %s15, 1
    %p120 = por %p118, %p119
    %p121 = scmp.ne.s32.totalorder %s110, %s111
    %p122 = scmp.eq.s32.totalorder %s15, 0
    %p123 = por %p121, %p122
    %p124 = scmp.ne.s32.totalorder %s110, %s111
    %p125 = scmp.eq.s32.totalorder %s16, 1
    %p126 = por %p124, %p125
    %p128 = scmp.ne.s32.totalorder %s111, %s127
    %p129 = scmp.eq.s32.totalorder %s16, 0
    %p130 = por %p128, %p129
    %s131 = ssub.s32 %s17, %s29
    %p132 = scmp.eq.s32.totalorder %s131, 0
    %s134 = sadd.s32 %s133, 1
    %s135 = scalar_select %p132, %s133, %s134
    %p138 = pneg %p132
    %p139 = scmp.eq.s32.totalorder %s10, 1
    %p140 = por %p138, %p139
    %p141 = scmp.ne.s32.totalorder %s133, %s136
    %p142 = scmp.eq.s32.totalorder %s10, 0
    %p143 = por %p141, %p142
    %p144 = scmp.ne.s32.totalorder %s133, %s136
    %p145 = scmp.eq.s32.totalorder %s15, 1
    %p146 = por %p144, %p145
    %p147 = scmp.ne.s32.totalorder %s136, %s137
    %p148 = scmp.eq.s32.totalorder %s15, 0
    %p149 = por %p147, %p148
    %p150 = scmp.ne.s32.totalorder %s136, %s137
    %p151 = scmp.eq.s32.totalorder %s16, 1
    %p152 = por %p150, %p151
    %p154 = scmp.ne.s32.totalorder %s137, %s153
    %p155 = scmp.eq.s32.totalorder %s16, 0
    %p156 = por %p154, %p155
    %p157 = scmp.le.s32.totalorder 1, %s10
    %p158 = scmp.lt.s32.totalorder %s10, 3
    %p159 = pnand %p157, %p158
    %p160 = pneg %p159
    // Predicated region
    $region9: #{_lambda_.19} parent=5 // pred_check
      _
    $region10: #{_lambda_.19} parent=5 // pred_check_branch
      %162 = sbr.rel (%p159) target = $region12
    $region11: #{_lambda_.19} parent=5 // pred_region
      %s163 = ssub.s32 %s10, 1
      // Predicated region
      $region13: #{_lambda_.19} parent=11 // pred_check
        %p164 = pneg %p97
      $region14: #{_lambda_.19} parent=11 // pred_check_branch
        %166 = sbr.rel (%p164) target = $region16
      $region15: #{_lambda_.19} parent=11 // pred_region
        _
      $region16: #{_lambda_.19} parent=11 // pred_fallthru
        _
      // Predicated region
      $region17: #{_lambda_.19} parent=11 // pred_check
        %p167 = pneg %p123
      $region18: #{_lambda_.19} parent=11 // pred_check_branch
        %169 = sbr.rel (%p167) target = $region20
      $region19: #{_lambda_.19} parent=11 // pred_region
        %p170 = scmp.lt.s32.totalorder %s19, 0
        %s171 = scalar_select %p170, %s19, 0
        %s172 = smul.addr %s171, 2
        %s173 = smul.addr %s172, 4
        %s174 = scalar_lea.vmem %s3, %s173
      $region20: #{_lambda_.19} parent=11 // pred_fallthru
        _
    $region12: #{_lambda_.19} parent=5 // pred_fallthru
      _
    %p175 = scmp.lt.s32.totalorder %s10, 2
    // Predicated region
    $region21: #{_lambda_.19} parent=5 // pred_check
      %p176 = pneg %p175
    $region22: #{_lambda_.19} parent=5 // pred_check_branch
      %178 = sbr.rel (%p176) target = $region24
    $region23: #{_lambda_.19} parent=5 // pred_region
      // Predicated region
      $region25: #{_lambda_.19} parent=23 // pred_check
        %p179 = pneg %p44
      $region26: #{_lambda_.19} parent=23 // pred_check_branch
        %181 = sbr.rel (%p179) target = $region28
      $region27: #{_lambda_.19} parent=23 // pred_region
        %s182 = smul.u32 9, %s18
        %p183 = scmp.lt.s32.totalorder %s17, 0
        %s184 = scalar_select %p183, %s17, 0
        %p185 = scmp.lt.s32.totalorder %s182, 17
        %s186 = scalar_select %p185, %s182, 17
        %s187 = smul.addr %s184, 18
        %s188 = sadd.s32 %s186, %s187
        %s189 = smul.addr %s188, 4
        %s190 = scalar_lea.vmem %s0, %s189
        %s191 = smul.u32 9, %s18
      $region28: #{_lambda_.19} parent=23 // pred_fallthru
        _
      // Predicated region
      $region29: #{_lambda_.19} parent=23 // pred_check
        %p192 = pneg %p70
      $region30: #{_lambda_.19} parent=23 // pred_check_branch
        %194 = sbr.rel (%p192) target = $region32
      $region31: #{_lambda_.19} parent=23 // pred_region
        %s195 = smul.u32 144, %s18
        %p196 = scmp.lt.s32.totalorder %s195, 287
        %s197 = scalar_select %p196, %s195, 287
        %s198 = smul.addr %s197, 2
        %s199 = smul.addr %s198, 4
        %s200 = scalar_lea.vmem %s1, %s199
        %s201 = smul.u32 144, %s18
      $region32: #{_lambda_.19} parent=23 // pred_fallthru
        _
    $region24: #{_lambda_.19} parent=5 // pred_fallthru
      _
    %p202 = scmp.le.s32.totalorder 1, %s10
    %p203 = scmp.lt.s32.totalorder %s10, 3
    %p204 = pnand %p202, %p203
    %p205 = pneg %p204
    // Predicated region
    $region33: #{_lambda_.19} parent=5 // pred_check
      _
    $region34: #{_lambda_.19} parent=5 // pred_check_branch
      %207 = sbr.rel (%p204) target = $region36
    $region35: #{_lambda_.19} parent=5 // pred_region
      %s208 = ssub.s32 %s10, 1
      %s209 = smul.u32 9, %s20
      %p210 = scmp.lt.s32.totalorder %s19, 0
      %s211 = scalar_select %p210, %s19, 0
      %p212 = scmp.lt.s32.totalorder %s209, 17
      %s213 = scalar_select %p212, %s209, 17
      %s214 = smul.addr %s211, 18
      %s215 = sadd.s32 %s213, %s214
      %s216 = smul.addr %s215, 4
      %s217 = scalar_lea.vmem %s0, %s216
      %p218 = pneg %p50
      %p219 = pneg %p47
      %s220 = smul.u32 144, %s20
      %p221 = scmp.lt.s32.totalorder %s220, 287
      %s222 = scalar_select %p221, %s220, 287
      %s223 = smul.addr %s222, 2
      %s224 = smul.addr %s223, 4
      %s225 = scalar_lea.vmem %s1, %s224
      %p226 = pneg %p76
      %p227 = pneg %p73
      %p228 = pneg %p97
      %p229 = pneg %p94
      %p230 = scmp.lt.s32.totalorder %s19, 0
      %s231 = scalar_select %p230, %s19, 0
      %s232 = smul.addr %s231, 2
      %s233 = smul.addr %s232, 4
      %s234 = scalar_lea.vmem %s3, %s233
      %p235 = pneg %p123
      %p236 = pneg %p120
      %p237 = pneg %p149
      %p238 = pneg %p146
      %p239 = scmp.lt.s32.totalorder %s19, 0
      %s240 = scalar_select %p239, %s19, 0
      %s241 = smul.addr %s240, 2
      %s242 = smul.addr %s241, 4
      %s243 = scalar_lea.vmem %s4, %s242
      %s244 = smul.u32 9, %s20
      %p245 = scmp.lt.s32.totalorder %s19, 0
      %s246 = scalar_select %p245, %s19, 0
      %p247 = scmp.lt.s32.totalorder %s244, 17
      %s248 = scalar_select %p247, %s244, 17
      %s249 = smul.addr %s246, 18
      %s250 = sadd.s32 %s248, %s249
      %s251 = smul.addr %s250, 4
      %s252 = scalar_lea.vmem %s0, %s251
      %s253 = smul.u32 9, %s20
      %s254 = smul.u32 144, %s20
      %p255 = scmp.lt.s32.totalorder %s254, 287
      %s256 = scalar_select %p255, %s254, 287
      %s257 = smul.addr %s256, 2
      %s258 = smul.addr %s257, 4
      %s259 = scalar_lea.vmem %s1, %s258
      %s260 = smul.u32 144, %s20
      %p261 = scmp.lt.s32.totalorder %s19, 0
      %s262 = scalar_select %p261, %s19, 0
      %s263 = smul.addr %s262, 2
      %s264 = smul.addr %s263, 4
      %s265 = scalar_lea.vmem %s3, %s264
      %p266 = scmp.lt.s32.totalorder %s19, 0
      %s267 = scalar_select %p266, %s19, 0
      %s268 = smul.addr %s267, 2
      %s269 = smul.addr %s268, 4
      %s270 = scalar_lea.vmem %s4, %s269
      %p272 = scmp.eq.s32.totalorder %s20, 0
      // Predicated region
      $region37: #{_lambda_.19} parent=35 // pred_check
        %p273 = pneg %p272
      $region38: #{_lambda_.19} parent=35 // pred_check_branch
        %275 = sbr.rel (%p273) target = $region40
      $region39: #{_lambda_.19} parent=35 // pred_region
        %276 = vst [vmem:[#allocation2] sm:$0xff] 0.0
        %277 = vst [vmem:[#allocation2 + $0x8] sm:$0xff] 0.0
      $region40: #{_lambda_.19} parent=35 // pred_fallthru
        _
      %v278 = vld [vmem:[#allocation2] sm:$0xff]
      %v279 = vld [vmem:[#allocation2 + $0x8] sm:$0xff]
      %v280 = vld [vmem:[%s252] sm:$0xff]
      %v281 = vld [vmem:[%s252 + $0x8] sm:$0xff]
      %v282 = vld [vmem:[%s252 + $0x10] sm:$0xff]
      %v283 = vld [vmem:[%s252 + $0x18] sm:$0xff]
      %v284 = vld [vmem:[%s252 + $0x20] sm:$0xf]
      %v285 = vld [vmem:[%s259] sm:$0xff]
      %v286 = vld [vmem:[%s259 + $0x8] sm:$0xff]
      %v287 = vld [vmem:[%s259 + $0x10] sm:$0xff]
      %v288 = vld [vmem:[%s259 + $0x18] sm:$0xff]
      %v289 = vld [vmem:[%s259 + $0x20] sm:$0xff]
      %v290 = vld [vmem:[%s259 + $0x28] sm:$0xff]
      %v291 = vld [vmem:[%s259 + $0x30] sm:$0xff]
      %v292 = vld [vmem:[%s259 + $0x38] sm:$0xff]
      %v293 = vld [vmem:[%s259 + $0x40] sm:$0xff]
      %v294 = vld [vmem:[%s259 + $0x48] sm:$0xff]
      %v295 = vld [vmem:[%s259 + $0x50] sm:$0xff]
      %v296 = vld [vmem:[%s259 + $0x58] sm:$0xff]
      %v297 = vld [vmem:[%s259 + $0x60] sm:$0xff]
      %v298 = vld [vmem:[%s259 + $0x68] sm:$0xff]
      %v299 = vld [vmem:[%s259 + $0x70] sm:$0xff]
      %v300 = vld [vmem:[%s259 + $0x78] sm:$0xff]
      %v301 = vld [vmem:[%s259 + $0x80] sm:$0xff]
      %v302 = vld [vmem:[%s259 + $0x88] sm:$0xff]
      %v303 = vld [vmem:[%s259 + $0x90] sm:$0xff]
      %v304 = vld [vmem:[%s259 + $0x98] sm:$0xff]
      %v305 = vld [vmem:[%s259 + $0xa0] sm:$0xff]
      %v306 = vld [vmem:[%s259 + $0xa8] sm:$0xff]
      %v307 = vld [vmem:[%s259 + $0xb0] sm:$0xff]
      %v308 = vld [vmem:[%s259 + $0xb8] sm:$0xff]
      %v309 = vld [vmem:[%s259 + $0xc0] sm:$0xff]
      %v310 = vld [vmem:[%s259 + $0xc8] sm:$0xff]
      %v311 = vld [vmem:[%s259 + $0xd0] sm:$0xff]
      %v312 = vld [vmem:[%s259 + $0xd8] sm:$0xff]
      %v313 = vld [vmem:[%s259 + $0xe0] sm:$0xff]
      %v314 = vld [vmem:[%s259 + $0xe8] sm:$0xff]
      %v315 = vld [vmem:[%s259 + $0xf0] sm:$0xff]
      %v316 = vld [vmem:[%s259 + $0xf8] sm:$0xff]
      %v317 = vld [vmem:[%s259 + $0x100] sm:$0xff]
      %v318 = vld [vmem:[%s259 + $0x108] sm:$0xff]
      %v319 = vld [vmem:[%s259 + $0x110] sm:$0xff]
      %v320 = vld [vmem:[%s259 + $0x118] sm:$0xff]
      %v321 = vld [vmem:[%s259 + $0x120] sm:$0xff]
      %v322 = vld [vmem:[%s259 + $0x128] sm:$0xff]
      %v323 = vld [vmem:[%s259 + $0x130] sm:$0xff]
      %v324 = vld [vmem:[%s259 + $0x138] sm:$0xff]
      %v325 = vld [vmem:[%s259 + $0x140] sm:$0xff]
      %v326 = vld [vmem:[%s259 + $0x148] sm:$0xff]
      %v327 = vld [vmem:[%s259 + $0x150] sm:$0xff]
      %v328 = vld [vmem:[%s259 + $0x158] sm:$0xff]
      %v329 = vld [vmem:[%s259 + $0x160] sm:$0xff]
      %v330 = vld [vmem:[%s259 + $0x168] sm:$0xff]
      %v331 = vld [vmem:[%s259 + $0x170] sm:$0xff]
      %v332 = vld [vmem:[%s259 + $0x178] sm:$0xff]
      %v333 = vld [vmem:[%s259 + $0x180] sm:$0xff]
      %v334 = vld [vmem:[%s259 + $0x188] sm:$0xff]
      %v335 = vld [vmem:[%s259 + $0x190] sm:$0xff]
      %v336 = vld [vmem:[%s259 + $0x198] sm:$0xff]
      %v337 = vld [vmem:[%s259 + $0x1a0] sm:$0xff]
      %v338 = vld [vmem:[%s259 + $0x1a8] sm:$0xff]
      %v339 = vld [vmem:[%s259 + $0x1b0] sm:$0xff]
      %v340 = vld [vmem:[%s259 + $0x1b8] sm:$0xff]
      %v341 = vld [vmem:[%s259 + $0x1c0] sm:$0xff]
      %v342 = vld [vmem:[%s259 + $0x1c8] sm:$0xff]
      %v343 = vld [vmem:[%s259 + $0x1d0] sm:$0xff]
      %v344 = vld [vmem:[%s259 + $0x1d8] sm:$0xff]
      %v345 = vld [vmem:[%s259 + $0x1e0] sm:$0xff]
      %v346 = vld [vmem:[%s259 + $0x1e8] sm:$0xff]
      %v347 = vld [vmem:[%s259 + $0x1f0] sm:$0xff]
      %v348 = vld [vmem:[%s259 + $0x1f8] sm:$0xff]
      %v349 = vld [vmem:[%s259 + $0x200] sm:$0xff]
      %v350 = vld [vmem:[%s259 + $0x208] sm:$0xff]
      %v351 = vld [vmem:[%s259 + $0x210] sm:$0xff]
      %v352 = vld [vmem:[%s259 + $0x218] sm:$0xff]
      %v353 = vld [vmem:[%s259 + $0x220] sm:$0xff]
      %v354 = vld [vmem:[%s259 + $0x228] sm:$0xff]
      %v355 = vld [vmem:[%s259 + $0x230] sm:$0xff]
      %v356 = vld [vmem:[%s259 + $0x238] sm:$0xff]
      %v357 = vld [vmem:[%s259 + $0x240] sm:$0xff]
      %v358 = vld [vmem:[%s259 + $0x248] sm:$0xff]
      %v359 = vld [vmem:[%s259 + $0x250] sm:$0xff]
      %v360 = vld [vmem:[%s259 + $0x258] sm:$0xff]
      %v361 = vld [vmem:[%s259 + $0x260] sm:$0xff]
      %v362 = vld [vmem:[%s259 + $0x268] sm:$0xff]
      %v363 = vld [vmem:[%s259 + $0x270] sm:$0xff]
      %v364 = vld [vmem:[%s259 + $0x278] sm:$0xff]
      %v365 = vld [vmem:[%s259 + $0x280] sm:$0xff]
      %v366 = vld [vmem:[%s259 + $0x288] sm:$0xff]
      %v367 = vld [vmem:[%s259 + $0x290] sm:$0xff]
      %v368 = vld [vmem:[%s259 + $0x298] sm:$0xff]
      %v369 = vld [vmem:[%s259 + $0x2a0] sm:$0xff]
      %v370 = vld [vmem:[%s259 + $0x2a8] sm:$0xff]
      %v371 = vld [vmem:[%s259 + $0x2b0] sm:$0xff]
      %v372 = vld [vmem:[%s259 + $0x2b8] sm:$0xff]
      %v373 = vld [vmem:[%s259 + $0x2c0] sm:$0xff]
      %v374 = vld [vmem:[%s259 + $0x2c8] sm:$0xff]
      %v375 = vld [vmem:[%s259 + $0x2d0] sm:$0xff]
      %v376 = vld [vmem:[%s259 + $0x2d8] sm:$0xff]
      %v377 = vld [vmem:[%s259 + $0x2e0] sm:$0xff]
      %v378 = vld [vmem:[%s259 + $0x2e8] sm:$0xff]
      %v379 = vld [vmem:[%s259 + $0x2f0] sm:$0xff]
      %v380 = vld [vmem:[%s259 + $0x2f8] sm:$0xff]
      %v381 = vld [vmem:[%s259 + $0x300] sm:$0xff]
      %v382 = vld [vmem:[%s259 + $0x308] sm:$0xff]
      %v383 = vld [vmem:[%s259 + $0x310] sm:$0xff]
      %v384 = vld [vmem:[%s259 + $0x318] sm:$0xff]
      %v385 = vld [vmem:[%s259 + $0x320] sm:$0xff]
      %v386 = vld [vmem:[%s259 + $0x328] sm:$0xff]
      %v387 = vld [vmem:[%s259 + $0x330] sm:$0xff]
      %v388 = vld [vmem:[%s259 + $0x338] sm:$0xff]
      %v389 = vld [vmem:[%s259 + $0x340] sm:$0xff]
      %v390 = vld [vmem:[%s259 + $0x348] sm:$0xff]
      %v391 = vld [vmem:[%s259 + $0x350] sm:$0xff]
      %v392 = vld [vmem:[%s259 + $0x358] sm:$0xff]
      %v393 = vld [vmem:[%s259 + $0x360] sm:$0xff]
      %v394 = vld [vmem:[%s259 + $0x368] sm:$0xff]
      %v395 = vld [vmem:[%s259 + $0x370] sm:$0xff]
      %v396 = vld [vmem:[%s259 + $0x378] sm:$0xff]
      %v397 = vld [vmem:[%s259 + $0x380] sm:$0xff]
      %v398 = vld [vmem:[%s259 + $0x388] sm:$0xff]
      %v399 = vld [vmem:[%s259 + $0x390] sm:$0xff]
      %v400 = vld [vmem:[%s259 + $0x398] sm:$0xff]
      %v401 = vld [vmem:[%s259 + $0x3a0] sm:$0xff]
      %v402 = vld [vmem:[%s259 + $0x3a8] sm:$0xff]
      %v403 = vld [vmem:[%s259 + $0x3b0] sm:$0xff]
      %v404 = vld [vmem:[%s259 + $0x3b8] sm:$0xff]
      %v405 = vld [vmem:[%s259 + $0x3c0] sm:$0xff]
      %v406 = vld [vmem:[%s259 + $0x3c8] sm:$0xff]
      %v407 = vld [vmem:[%s259 + $0x3d0] sm:$0xff]
      %v408 = vld [vmem:[%s259 + $0x3d8] sm:$0xff]
      %v409 = vld [vmem:[%s259 + $0x3e0] sm:$0xff]
      %v410 = vld [vmem:[%s259 + $0x3e8] sm:$0xff]
      %v411 = vld [vmem:[%s259 + $0x3f0] sm:$0xff]
      %v412 = vld [vmem:[%s259 + $0x3f8] sm:$0xff]
      %v413 = vld [vmem:[%s259 + $0x400] sm:$0xff]
      %v414 = vld [vmem:[%s259 + $0x408] sm:$0xff]
      %v415 = vld [vmem:[%s259 + $0x410] sm:$0xff]
      %v416 = vld [vmem:[%s259 + $0x418] sm:$0xff]
      %v417 = vld [vmem:[%s259 + $0x420] sm:$0xff]
      %v418 = vld [vmem:[%s259 + $0x428] sm:$0xff]
      %v419 = vld [vmem:[%s259 + $0x430] sm:$0xff]
      %v420 = vld [vmem:[%s259 + $0x438] sm:$0xff]
      %v421 = vld [vmem:[%s259 + $0x440] sm:$0xff]
      %v422 = vld [vmem:[%s259 + $0x448] sm:$0xff]
      %v423 = vld [vmem:[%s259 + $0x450] sm:$0xff]
      %v424 = vld [vmem:[%s259 + $0x458] sm:$0xff]
      %v425 = vld [vmem:[%s259 + $0x460] sm:$0xff]
      %v426 = vld [vmem:[%s259 + $0x468] sm:$0xff]
      %v427 = vld [vmem:[%s259 + $0x470] sm:$0xff]
      %v428 = vld [vmem:[%s259 + $0x478] sm:$0xff]
      %v434 = vunpack.c.l.b16 %v280
      %v435 = vunpack.c.h.b16 %v280
      %v436 = vunpack.c.l.b16 %v281
      %v437 = vunpack.c.h.b16 %v281
      %v438 = vunpack.c.l.b16 %v282
      %v439 = vunpack.c.h.b16 %v282
      %v440 = vunpack.c.l.b16 %v283
      %v441 = vunpack.c.h.b16 %v283
      %v442 = vunpack.c.l.b16 %v284
      %v443 = vpack.c.b16 %v434, %v434
      %v444 = vpack.c.b16 %v435, %v435
      %v445 = vpack.c.b16 %v436, %v436
      %v446 = vpack.c.b16 %v437, %v437
      %v447 = vpack.c.b16 %v438, %v438
      %v448 = vpack.c.b16 %v439, %v439
      %v449 = vpack.c.b16 %v440, %v440
      %v450 = vpack.c.b16 %v441, %v441
      %v451 = vpack.c.b16 %v442, %v442
      %v605 = vunpack.c.l.b16 %v285
      %v606 = vunpack.c.h.b16 %v285
      %v607 = vunpack.c.l.b16 %v286
      %v608 = vunpack.c.h.b16 %v286
      %v609 = vunpack.c.l.b16 %v287
      %v610 = vunpack.c.h.b16 %v287
      %v611 = vunpack.c.l.b16 %v288
      %v612 = vunpack.c.h.b16 %v288
      %v613 = vunpack.c.l.b16 %v289
      %v614 = vunpack.c.h.b16 %v289
      %v615 = vunpack.c.l.b16 %v290
      %v616 = vunpack.c.h.b16 %v290
      %v617 = vunpack.c.l.b16 %v291
      %v618 = vunpack.c.h.b16 %v291
      %v619 = vunpack.c.l.b16 %v292
      %v620 = vunpack.c.h.b16 %v292
      %v621 = vunpack.c.l.b16 %v293
      %v622 = vunpack.c.h.b16 %v293
      %v623 = vunpack.c.l.b16 %v294
      %v624 = vunpack.c.h.b16 %v294
      %v625 = vunpack.c.l.b16 %v295
      %v626 = vunpack.c.h.b16 %v295
      %v627 = vunpack.c.l.b16 %v296
      %v628 = vunpack.c.h.b16 %v296
      %v629 = vunpack.c.l.b16 %v297
      %v630 = vunpack.c.h.b16 %v297
      %v631 = vunpack.c.l.b16 %v298
      %v632 = vunpack.c.h.b16 %v298
      %v633 = vunpack.c.l.b16 %v299
      %v634 = vunpack.c.h.b16 %v299
      %v635 = vunpack.c.l.b16 %v300
      %v636 = vunpack.c.h.b16 %v300
      %v637 = vunpack.c.l.b16 %v301
      %v638 = vunpack.c.h.b16 %v301
      %v639 = vunpack.c.l.b16 %v302
      %v640 = vunpack.c.h.b16 %v302
      %v641 = vunpack.c.l.b16 %v303
      %v642 = vunpack.c.h.b16 %v303
      %v643 = vunpack.c.l.b16 %v304
      %v644 = vunpack.c.h.b16 %v304
      %v645 = vunpack.c.l.b16 %v305
      %v646 = vunpack.c.h.b16 %v305
      %v647 = vunpack.c.l.b16 %v306
      %v648 = vunpack.c.h.b16 %v306
      %v649 = vunpack.c.l.b16 %v307
      %v650 = vunpack.c.h.b16 %v307
      %v651 = vunpack.c.l.b16 %v308
      %v652 = vunpack.c.h.b16 %v308
      %v653 = vunpack.c.l.b16 %v309
      %v654 = vunpack.c.h.b16 %v309
      %v655 = vunpack.c.l.b16 %v310
      %v656 = vunpack.c.h.b16 %v310
      %v657 = vunpack.c.l.b16 %v311
      %v658 = vunpack.c.h.b16 %v311
      %v659 = vunpack.c.l.b16 %v312
      %v660 = vunpack.c.h.b16 %v312
      %v661 = vunpack.c.l.b16 %v313
      %v662 = vunpack.c.h.b16 %v313
      %v663 = vunpack.c.l.b16 %v314
      %v664 = vunpack.c.h.b16 %v314
      %v665 = vunpack.c.l.b16 %v315
      %v666 = vunpack.c.h.b16 %v315
      %v667 = vunpack.c.l.b16 %v316
      %v668 = vunpack.c.h.b16 %v316
      %v669 = vunpack.c.l.b16 %v317
      %v670 = vunpack.c.h.b16 %v317
      %v671 = vunpack.c.l.b16 %v318
      %v672 = vunpack.c.h.b16 %v318
      %v673 = vunpack.c.l.b16 %v319
      %v674 = vunpack.c.h.b16 %v319
      %v675 = vunpack.c.l.b16 %v320
      %v676 = vunpack.c.h.b16 %v320
      %v677 = vunpack.c.l.b16 %v321
      %v678 = vunpack.c.h.b16 %v321
      %v679 = vunpack.c.l.b16 %v322
      %v680 = vunpack.c.h.b16 %v322
      %v681 = vunpack.c.l.b16 %v323
      %v682 = vunpack.c.h.b16 %v323
      %v683 = vunpack.c.l.b16 %v324
      %v684 = vunpack.c.h.b16 %v324
      %v685 = vunpack.c.l.b16 %v325
      %v686 = vunpack.c.h.b16 %v325
      %v687 = vunpack.c.l.b16 %v326
      %v688 = vunpack.c.h.b16 %v326
      %v689 = vunpack.c.l.b16 %v327
      %v690 = vunpack.c.h.b16 %v327
      %v691 = vunpack.c.l.b16 %v328
      %v692 = vunpack.c.h.b16 %v328
      %v693 = vunpack.c.l.b16 %v329
      %v694 = vunpack.c.h.b16 %v329
      %v695 = vunpack.c.l.b16 %v330
      %v696 = vunpack.c.h.b16 %v330
      %v697 = vunpack.c.l.b16 %v331
      %v698 = vunpack.c.h.b16 %v331
      %v699 = vunpack.c.l.b16 %v332
      %v700 = vunpack.c.h.b16 %v332
      %v701 = vunpack.c.l.b16 %v333
      %v702 = vunpack.c.h.b16 %v333
      %v703 = vunpack.c.l.b16 %v334
      %v704 = vunpack.c.h.b16 %v334
      %v705 = vunpack.c.l.b16 %v335
      %v706 = vunpack.c.h.b16 %v335
      %v707 = vunpack.c.l.b16 %v336
      %v708 = vunpack.c.h.b16 %v336
      %v709 = vunpack.c.l.b16 %v337
      %v710 = vunpack.c.h.b16 %v337
      %v711 = vunpack.c.l.b16 %v338
      %v712 = vunpack.c.h.b16 %v338
      %v713 = vunpack.c.l.b16 %v339
      %v714 = vunpack.c.h.b16 %v339
      %v715 = vunpack.c.l.b16 %v340
      %v716 = vunpack.c.h.b16 %v340
      %v717 = vunpack.c.l.b16 %v341
      %v718 = vunpack.c.h.b16 %v341
      %v719 = vunpack.c.l.b16 %v342
      %v720 = vunpack.c.h.b16 %v342
      %v721 = vunpack.c.l.b16 %v343
      %v722 = vunpack.c.h.b16 %v343
      %v723 = vunpack.c.l.b16 %v344
      %v724 = vunpack.c.h.b16 %v344
      %v725 = vunpack.c.l.b16 %v345
      %v726 = vunpack.c.h.b16 %v345
      %v727 = vunpack.c.l.b16 %v346
      %v728 = vunpack.c.h.b16 %v346
      %v729 = vunpack.c.l.b16 %v347
      %v730 = vunpack.c.h.b16 %v347
      %v731 = vunpack.c.l.b16 %v348
      %v732 = vunpack.c.h.b16 %v348
      %v733 = vunpack.c.l.b16 %v349
      %v734 = vunpack.c.h.b16 %v349
      %v735 = vunpack.c.l.b16 %v350
      %v736 = vunpack.c.h.b16 %v350
      %v737 = vunpack.c.l.b16 %v351
      %v738 = vunpack.c.h.b16 %v351
      %v739 = vunpack.c.l.b16 %v352
      %v740 = vunpack.c.h.b16 %v352
      %v741 = vunpack.c.l.b16 %v353
      %v742 = vunpack.c.h.b16 %v353
      %v743 = vunpack.c.l.b16 %v354
      %v744 = vunpack.c.h.b16 %v354
      %v745 = vunpack.c.l.b16 %v355
      %v746 = vunpack.c.h.b16 %v355
      %v747 = vunpack.c.l.b16 %v356
      %v748 = vunpack.c.h.b16 %v356
      %v749 = vunpack.c.l.b16 %v357
      %v750 = vunpack.c.h.b16 %v357
      %v751 = vunpack.c.l.b16 %v358
      %v752 = vunpack.c.h.b16 %v358
      %v753 = vunpack.c.l.b16 %v359
      %v754 = vunpack.c.h.b16 %v359
      %v755 = vunpack.c.l.b16 %v360
      %v756 = vunpack.c.h.b16 %v360
      %v757 = vunpack.c.l.b16 %v361
      %v758 = vunpack.c.h.b16 %v361
      %v759 = vunpack.c.l.b16 %v362
      %v760 = vunpack.c.h.b16 %v362
      %v761 = vunpack.c.l.b16 %v363
      %v762 = vunpack.c.h.b16 %v363
      %v763 = vunpack.c.l.b16 %v364
      %v764 = vunpack.c.h.b16 %v364
      %v765 = vunpack.c.l.b16 %v365
      %v766 = vunpack.c.h.b16 %v365
      %v767 = vunpack.c.l.b16 %v366
      %v768 = vunpack.c.h.b16 %v366
      %v769 = vunpack.c.l.b16 %v367
      %v770 = vunpack.c.h.b16 %v367
      %v771 = vunpack.c.l.b16 %v368
      %v772 = vunpack.c.h.b16 %v368
      %v773 = vunpack.c.l.b16 %v369
      %v774 = vunpack.c.h.b16 %v369
      %v775 = vunpack.c.l.b16 %v370
      %v776 = vunpack.c.h.b16 %v370
      %v777 = vunpack.c.l.b16 %v371
      %v778 = vunpack.c.h.b16 %v371
      %v779 = vunpack.c.l.b16 %v372
      %v780 = vunpack.c.h.b16 %v372
      %v781 = vunpack.c.l.b16 %v373
      %v782 = vunpack.c.h.b16 %v373
      %v783 = vunpack.c.l.b16 %v374
      %v784 = vunpack.c.h.b16 %v374
      %v785 = vunpack.c.l.b16 %v375
      %v786 = vunpack.c.h.b16 %v375
      %v787 = vunpack.c.l.b16 %v376
      %v788 = vunpack.c.h.b16 %v376
      %v789 = vunpack.c.l.b16 %v377
      %v790 = vunpack.c.h.b16 %v377
      %v791 = vunpack.c.l.b16 %v378
      %v792 = vunpack.c.h.b16 %v378
      %v793 = vunpack.c.l.b16 %v379
      %v794 = vunpack.c.h.b16 %v379
      %v795 = vunpack.c.l.b16 %v380
      %v796 = vunpack.c.h.b16 %v380
      %v797 = vunpack.c.l.b16 %v381
      %v798 = vunpack.c.h.b16 %v381
      %v799 = vunpack.c.l.b16 %v382
      %v800 = vunpack.c.h.b16 %v382
      %v801 = vunpack.c.l.b16 %v383
      %v802 = vunpack.c.h.b16 %v383
      %v803 = vunpack.c.l.b16 %v384
      %v804 = vunpack.c.h.b16 %v384
      %v805 = vunpack.c.l.b16 %v385
      %v806 = vunpack.c.h.b16 %v385
      %v807 = vunpack.c.l.b16 %v386
      %v808 = vunpack.c.h.b16 %v386
      %v809 = vunpack.c.l.b16 %v387
      %v810 = vunpack.c.h.b16 %v387
      %v811 = vunpack.c.l.b16 %v388
      %v812 = vunpack.c.h.b16 %v388
      %v813 = vunpack.c.l.b16 %v389
      %v814 = vunpack.c.h.b16 %v389
      %v815 = vunpack.c.l.b16 %v390
      %v816 = vunpack.c.h.b16 %v390
      %v817 = vunpack.c.l.b16 %v391
      %v818 = vunpack.c.h.b16 %v391
      %v819 = vunpack.c.l.b16 %v392
      %v820 = vunpack.c.h.b16 %v392
      %v821 = vunpack.c.l.b16 %v393
      %v822 = vunpack.c.h.b16 %v393
      %v823 = vunpack.c.l.b16 %v394
      %v824 = vunpack.c.h.b16 %v394
      %v825 = vunpack.c.l.b16 %v395
      %v826 = vunpack.c.h.b16 %v395
      %v827 = vunpack.c.l.b16 %v396
      %v828 = vunpack.c.h.b16 %v396
      %v829 = vunpack.c.l.b16 %v397
      %v830 = vunpack.c.h.b16 %v397
      %v831 = vunpack.c.l.b16 %v398
      %v832 = vunpack.c.h.b16 %v398
      %v833 = vunpack.c.l.b16 %v399
      %v834 = vunpack.c.h.b16 %v399
      %v835 = vunpack.c.l.b16 %v400
      %v836 = vunpack.c.h.b16 %v400
      %v837 = vunpack.c.l.b16 %v401
      %v838 = vunpack.c.h.b16 %v401
      %v839 = vunpack.c.l.b16 %v402
      %v840 = vunpack.c.h.b16 %v402
      %v841 = vunpack.c.l.b16 %v403
      %v842 = vunpack.c.h.b16 %v403
      %v843 = vunpack.c.l.b16 %v404
      %v844 = vunpack.c.h.b16 %v404
      %v845 = vunpack.c.l.b16 %v405
      %v846 = vunpack.c.h.b16 %v405
      %v847 = vunpack.c.l.b16 %v406
      %v848 = vunpack.c.h.b16 %v406
      %v849 = vunpack.c.l.b16 %v407
      %v850 = vunpack.c.h.b16 %v407
      %v851 = vunpack.c.l.b16 %v408
      %v852 = vunpack.c.h.b16 %v408
      %v853 = vunpack.c.l.b16 %v409
      %v854 = vunpack.c.h.b16 %v409
      %v855 = vunpack.c.l.b16 %v410
      %v856 = vunpack.c.h.b16 %v410
      %v857 = vunpack.c.l.b16 %v411
      %v858 = vunpack.c.h.b16 %v411
      %v859 = vunpack.c.l.b16 %v412
      %v860 = vunpack.c.h.b16 %v412
      %v861 = vunpack.c.l.b16 %v413
      %v862 = vunpack.c.h.b16 %v413
      %v863 = vunpack.c.l.b16 %v414
      %v864 = vunpack.c.h.b16 %v414
      %v865 = vunpack.c.l.b16 %v415
      %v866 = vunpack.c.h.b16 %v415
      %v867 = vunpack.c.l.b16 %v416
      %v868 = vunpack.c.h.b16 %v416
      %v869 = vunpack.c.l.b16 %v417
      %v870 = vunpack.c.h.b16 %v417
      %v871 = vunpack.c.l.b16 %v418
      %v872 = vunpack.c.h.b16 %v418
      %v873 = vunpack.c.l.b16 %v419
      %v874 = vunpack.c.h.b16 %v419
      %v875 = vunpack.c.l.b16 %v420
      %v876 = vunpack.c.h.b16 %v420
      %v877 = vunpack.c.l.b16 %v421
      %v878 = vunpack.c.h.b16 %v421
      %v879 = vunpack.c.l.b16 %v422
      %v880 = vunpack.c.h.b16 %v422
      %v881 = vunpack.c.l.b16 %v423
      %v882 = vunpack.c.h.b16 %v423
      %v883 = vunpack.c.l.b16 %v424
      %v884 = vunpack.c.h.b16 %v424
      %v885 = vunpack.c.l.b16 %v425
      %v886 = vunpack.c.h.b16 %v425
      %v887 = vunpack.c.l.b16 %v426
      %v888 = vunpack.c.h.b16 %v426
      %v889 = vunpack.c.l.b16 %v427
      %v890 = vunpack.c.h.b16 %v427
      %v891 = vunpack.c.l.b16 %v428
      %v892 = vunpack.c.h.b16 %v428
      %v893 = vpack.c.b16 %v607, %v605
      %v894 = vpack.c.b16 %v608, %v606
      %v895 = vpack.c.b16 %v611, %v609
      %v896 = vpack.c.b16 %v612, %v610
      %v897 = vpack.c.b16 %v615, %v613
      %v898 = vpack.c.b16 %v616, %v614
      %v899 = vpack.c.b16 %v619, %v617
      %v900 = vpack.c.b16 %v620, %v618
      %v901 = vpack.c.b16 %v623, %v621
      %v902 = vpack.c.b16 %v624, %v622
      %v903 = vpack.c.b16 %v627, %v625
      %v904 = vpack.c.b16 %v628, %v626
      %v905 = vpack.c.b16 %v631, %v629
      %v906 = vpack.c.b16 %v632, %v630
      %v907 = vpack.c.b16 %v635, %v633
      %v908 = vpack.c.b16 %v636, %v634
      %v909 = vpack.c.b16 %v639, %v637
      %v910 = vpack.c.b16 %v640, %v638
      %v911 = vpack.c.b16 %v643, %v641
      %v912 = vpack.c.b16 %v644, %v642
      %v913 = vpack.c.b16 %v647, %v645
      %v914 = vpack.c.b16 %v648, %v646
      %v915 = vpack.c.b16 %v651, %v649
      %v916 = vpack.c.b16 %v652, %v650
      %v917 = vpack.c.b16 %v655, %v653
      %v918 = vpack.c.b16 %v656, %v654
      %v919 = vpack.c.b16 %v659, %v657
      %v920 = vpack.c.b16 %v660, %v658
      %v921 = vpack.c.b16 %v663, %v661
      %v922 = vpack.c.b16 %v664, %v662
      %v923 = vpack.c.b16 %v667, %v665
      %v924 = vpack.c.b16 %v668, %v666
      %v925 = vpack.c.b16 %v671, %v669
      %v926 = vpack.c.b16 %v672, %v670
      %v927 = vpack.c.b16 %v675, %v673
      %v928 = vpack.c.b16 %v676, %v674
      %v929 = vpack.c.b16 %v679, %v677
      %v930 = vpack.c.b16 %v680, %v678
      %v931 = vpack.c.b16 %v683, %v681
      %v932 = vpack.c.b16 %v684, %v682
      %v933 = vpack.c.b16 %v687, %v685
      %v934 = vpack.c.b16 %v688, %v686
      %v935 = vpack.c.b16 %v691, %v689
      %v936 = vpack.c.b16 %v692, %v690
      %v937 = vpack.c.b16 %v695, %v693
      %v938 = vpack.c.b16 %v696, %v694
      %v939 = vpack.c.b16 %v699, %v697
      %v940 = vpack.c.b16 %v700, %v698
      %v941 = vpack.c.b16 %v703, %v701
      %v942 = vpack.c.b16 %v704, %v702
      %v943 = vpack.c.b16 %v707, %v705
      %v944 = vpack.c.b16 %v708, %v706
      %v945 = vpack.c.b16 %v711, %v709
      %v946 = vpack.c.b16 %v712, %v710
      %v947 = vpack.c.b16 %v715, %v713
      %v948 = vpack.c.b16 %v716, %v714
      %v949 = vpack.c.b16 %v719, %v717
      %v950 = vpack.c.b16 %v720, %v718
      %v951 = vpack.c.b16 %v723, %v721
      %v952 = vpack.c.b16 %v724, %v722
      %v953 = vpack.c.b16 %v727, %v725
      %v954 = vpack.c.b16 %v728, %v726
      %v955 = vpack.c.b16 %v731, %v729
      %v956 = vpack.c.b16 %v732, %v730
      %v957 = vpack.c.b16 %v735, %v733
      %v958 = vpack.c.b16 %v736, %v734
      %v959 = vpack.c.b16 %v739, %v737
      %v960 = vpack.c.b16 %v740, %v738
      %v961 = vpack.c.b16 %v743, %v741
      %v962 = vpack.c.b16 %v744, %v742
      %v963 = vpack.c.b16 %v747, %v745
      %v964 = vpack.c.b16 %v748, %v746
      %v965 = vpack.c.b16 %v751, %v749
      %v966 = vpack.c.b16 %v752, %v750
      %v967 = vpack.c.b16 %v755, %v753
      %v968 = vpack.c.b16 %v756, %v754
      %v969 = vpack.c.b16 %v759, %v757
      %v970 = vpack.c.b16 %v760, %v758
      %v971 = vpack.c.b16 %v763, %v761
      %v972 = vpack.c.b16 %v764, %v762
      %v973 = vpack.c.b16 %v767, %v765
      %v974 = vpack.c.b16 %v768, %v766
      %v975 = vpack.c.b16 %v771, %v769
      %v976 = vpack.c.b16 %v772, %v770
      %v977 = vpack.c.b16 %v775, %v773
      %v978 = vpack.c.b16 %v776, %v774
      %v979 = vpack.c.b16 %v779, %v777
      %v980 = vpack.c.b16 %v780, %v778
      %v981 = vpack.c.b16 %v783, %v781
      %v982 = vpack.c.b16 %v784, %v782
      %v983 = vpack.c.b16 %v787, %v785
      %v984 = vpack.c.b16 %v788, %v786
      %v985 = vpack.c.b16 %v791, %v789
      %v986 = vpack.c.b16 %v792, %v790
      %v987 = vpack.c.b16 %v795, %v793
      %v988 = vpack.c.b16 %v796, %v794
      %v989 = vpack.c.b16 %v799, %v797
      %v990 = vpack.c.b16 %v800, %v798
      %v991 = vpack.c.b16 %v803, %v801
      %v992 = vpack.c.b16 %v804, %v802
      %v993 = vpack.c.b16 %v807, %v805
      %v994 = vpack.c.b16 %v808, %v806
      %v995 = vpack.c.b16 %v811, %v809
      %v996 = vpack.c.b16 %v812, %v810
      %v997 = vpack.c.b16 %v815, %v813
      %v998 = vpack.c.b16 %v816, %v814
      %v999 = vpack.c.b16 %v819, %v817
      %v1000 = vpack.c.b16 %v820, %v818
      %v1001 = vpack.c.b16 %v823, %v821
      %v1002 = vpack.c.b16 %v824, %v822
      %v1003 = vpack.c.b16 %v827, %v825
      %v1004 = vpack.c.b16 %v828, %v826
      %v1005 = vpack.c.b16 %v831, %v829
      %v1006 = vpack.c.b16 %v832, %v830
      %v1007 = vpack.c.b16 %v835, %v833
      %v1008 = vpack.c.b16 %v836, %v834
      %v1009 = vpack.c.b16 %v839, %v837
      %v1010 = vpack.c.b16 %v840, %v838
      %v1011 = vpack.c.b16 %v843, %v841
      %v1012 = vpack.c.b16 %v844, %v842
      %v1013 = vpack.c.b16 %v847, %v845
      %v1014 = vpack.c.b16 %v848, %v846
      %v1015 = vpack.c.b16 %v851, %v849
      %v1016 = vpack.c.b16 %v852, %v850
      %v1017 = vpack.c.b16 %v855, %v853
      %v1018 = vpack.c.b16 %v856, %v854
      %v1019 = vpack.c.b16 %v859, %v857
      %v1020 = vpack.c.b16 %v860, %v858
      %v1021 = vpack.c.b16 %v863, %v861
      %v1022 = vpack.c.b16 %v864, %v862
      %v1023 = vpack.c.b16 %v867, %v865
      %v1024 = vpack.c.b16 %v868, %v866
      %v1025 = vpack.c.b16 %v871, %v869
      %v1026 = vpack.c.b16 %v872, %v870
      %v1027 = vpack.c.b16 %v875, %v873
      %v1028 = vpack.c.b16 %v876, %v874
      %v1029 = vpack.c.b16 %v879, %v877
      %v1030 = vpack.c.b16 %v880, %v878
      %v1031 = vpack.c.b16 %v883, %v881
      %v1032 = vpack.c.b16 %v884, %v882
      %v1033 = vpack.c.b16 %v887, %v885
      %v1034 = vpack.c.b16 %v888, %v886
      %v1035 = vpack.c.b16 %v891, %v889
      %v1036 = vpack.c.b16 %v892, %v890
      %1181 = vmatprep.subr.bf16.mxu0 %v908
      %1182 = vmatpush1.bf16.msra.mxu0 %v907
      %1183 = vmatprep.subr.bf16.mxu0 %v906
      %1184 = vmatpush1.bf16.msra.mxu0 %v905
      %1185 = vmatprep.subr.bf16.mxu0 %v904
      %1186 = vmatpush1.bf16.msra.mxu0 %v903
      %1187 = vmatprep.subr.bf16.mxu0 %v902
      %1188 = vmatpush1.bf16.msra.mxu0 %v901
      %1189 = vmatprep.subr.bf16.mxu0 %v900
      %1190 = vmatpush1.bf16.msra.mxu0 %v899
      %1191 = vmatprep.subr.bf16.mxu0 %v898
      %1192 = vmatpush1.bf16.msra.mxu0 %v897
      %1193 = vmatprep.subr.bf16.mxu0 %v896
      %1194 = vmatpush1.bf16.msra.mxu0 %v895
      %1195 = vmatprep.subr.bf16.mxu0 %v894
      %1196 = vmatpush1.bf16.msra.mxu0 %v893
      %1197 = vmatprep.subr.bf16.mxu0 %v924
      %1198 = vmatpush2.bf16.msra.mxu0 %v923
      %1199 = vmatprep.subr.bf16.mxu0 %v922
      %1200 = vmatpush2.bf16.msra.mxu0 %v921
      %1201 = vmatprep.subr.bf16.mxu0 %v920
      %1202 = vmatpush2.bf16.msra.mxu0 %v919
      %1203 = vmatprep.subr.bf16.mxu0 %v918
      %1204 = vmatpush2.bf16.msra.mxu0 %v917
      %1205 = vmatprep.subr.bf16.mxu0 %v916
      %1206 = vmatpush2.bf16.msra.mxu0 %v915
      %1207 = vmatprep.subr.bf16.mxu0 %v914
      %1208 = vmatpush2.bf16.msra.mxu0 %v913
      %1209 = vmatprep.subr.bf16.mxu0 %v912
      %1210 = vmatpush2.bf16.msra.mxu0 %v911
      %1211 = vmatprep.subr.bf16.mxu0 %v910
      %1212 = vmatpush2.bf16.msra.mxu0 %v909
      %1213 = vmatprep.mubr.bf16.mxu0 %v444
      %1214 = vmatmul.mubr.bf16.gmra.mxu0 %v443
      %v1215 = vpop.f32.mrf.mxu0
      %v1216 = vadd.f32 0.0, %v1215
      %v1217 = vpop.f32.mrf.mxu0
      %v1218 = vadd.f32 0.0, %v1217
      %v1219 = vpop.f32.mrf.mxu0
      %v1220 = vpop.f32.mrf.mxu0
      %1221 = vdwg.mxu0
      %1222 = vmatprep.subr.bf16.mxu0 %v940
      %1223 = vmatpush1.bf16.msra.mxu0 %v939
      %1224 = vmatprep.subr.bf16.mxu0 %v938
      %1225 = vmatpush1.bf16.msra.mxu0 %v937
      %1226 = vmatprep.subr.bf16.mxu0 %v936
      %1227 = vmatpush1.bf16.msra.mxu0 %v935
      %1228 = vmatprep.subr.bf16.mxu0 %v934
      %1229 = vmatpush1.bf16.msra.mxu0 %v933
      %1230 = vmatprep.subr.bf16.mxu0 %v932
      %1231 = vmatpush1.bf16.msra.mxu0 %v931
      %1232 = vmatprep.subr.bf16.mxu0 %v930
      %1233 = vmatpush1.bf16.msra.mxu0 %v929
      %1234 = vmatprep.subr.bf16.mxu0 %v928
      %1235 = vmatpush1.bf16.msra.mxu0 %v927
      %1236 = vmatprep.subr.bf16.mxu0 %v926
      %1237 = vmatpush1.bf16.msra.mxu0 %v925
      %1238 = vmatprep.subr.bf16.mxu0 %v956
      %1239 = vmatpush2.bf16.msra.mxu0 %v955
      %1240 = vmatprep.subr.bf16.mxu0 %v954
      %1241 = vmatpush2.bf16.msra.mxu0 %v953
      %1242 = vmatprep.subr.bf16.mxu0 %v952
      %1243 = vmatpush2.bf16.msra.mxu0 %v951
      %1244 = vmatprep.subr.bf16.mxu0 %v950
      %1245 = vmatpush2.bf16.msra.mxu0 %v949
      %1246 = vmatprep.subr.bf16.mxu0 %v948
      %1247 = vmatpush2.bf16.msra.mxu0 %v947
      %1248 = vmatprep.subr.bf16.mxu0 %v946
      %1249 = vmatpush2.bf16.msra.mxu0 %v945
      %1250 = vmatprep.subr.bf16.mxu0 %v944
      %1251 = vmatpush2.bf16.msra.mxu0 %v943
      %1252 = vmatprep.subr.bf16.mxu0 %v942
      %1253 = vmatpush2.bf16.msra.mxu0 %v941
      %1254 = vmatprep.mubr.bf16.mxu0 %v446
      %1255 = vmatmul.mubr.bf16.gmra.mxu0 %v445
      %v1256 = vpop.f32.mrf.mxu0
      %v1257 = vadd.f32 %v1216, %v1256
      %v1258 = vpop.f32.mrf.mxu0
      %v1259 = vadd.f32 %v1218, %v1258
      %v1260 = vpop.f32.mrf.mxu0
      %v1261 = vpop.f32.mrf.mxu0
      %1262 = vdwg.mxu0
      %1263 = vmatprep.subr.bf16.mxu0 %v972
      %1264 = vmatpush1.bf16.msra.mxu0 %v971
      %1265 = vmatprep.subr.bf16.mxu0 %v970
      %1266 = vmatpush1.bf16.msra.mxu0 %v969
      %1267 = vmatprep.subr.bf16.mxu0 %v968
      %1268 = vmatpush1.bf16.msra.mxu0 %v967
      %1269 = vmatprep.subr.bf16.mxu0 %v966
      %1270 = vmatpush1.bf16.msra.mxu0 %v965
      %1271 = vmatprep.subr.bf16.mxu0 %v964
      %1272 = vmatpush1.bf16.msra.mxu0 %v963
      %1273 = vmatprep.subr.bf16.mxu0 %v962
      %1274 = vmatpush1.bf16.msra.mxu0 %v961
      %1275 = vmatprep.subr.bf16.mxu0 %v960
      %1276 = vmatpush1.bf16.msra.mxu0 %v959
      %1277 = vmatprep.subr.bf16.mxu0 %v958
      %1278 = vmatpush1.bf16.msra.mxu0 %v957
      %1279 = vmatprep.subr.bf16.mxu0 %v988
      %1280 = vmatpush2.bf16.msra.mxu0 %v987
      %1281 = vmatprep.subr.bf16.mxu0 %v986
      %1282 = vmatpush2.bf16.msra.mxu0 %v985
      %1283 = vmatprep.subr.bf16.mxu0 %v984
      %1284 = vmatpush2.bf16.msra.mxu0 %v983
      %1285 = vmatprep.subr.bf16.mxu0 %v982
      %1286 = vmatpush2.bf16.msra.mxu0 %v981
      %1287 = vmatprep.subr.bf16.mxu0 %v980
      %1288 = vmatpush2.bf16.msra.mxu0 %v979
      %1289 = vmatprep.subr.bf16.mxu0 %v978
      %1290 = vmatpush2.bf16.msra.mxu0 %v977
      %1291 = vmatprep.subr.bf16.mxu0 %v976
      %1292 = vmatpush2.bf16.msra.mxu0 %v975
      %1293 = vmatprep.subr.bf16.mxu0 %v974
      %1294 = vmatpush2.bf16.msra.mxu0 %v973
      %1295 = vmatprep.mubr.bf16.mxu0 %v448
      %1296 = vmatmul.mubr.bf16.gmra.mxu0 %v447
      %v1297 = vpop.f32.mrf.mxu0
      %v1298 = vadd.f32 %v1257, %v1297
      %v1299 = vpop.f32.mrf.mxu0
      %v1300 = vadd.f32 %v1259, %v1299
      %v1301 = vpop.f32.mrf.mxu0
      %v1302 = vpop.f32.mrf.mxu0
      %1303 = vdwg.mxu0
      %1304 = vmatprep.subr.bf16.mxu0 %v1004
      %1305 = vmatpush1.bf16.msra.mxu0 %v1003
      %1306 = vmatprep.subr.bf16.mxu0 %v1002
      %1307 = vmatpush1.bf16.msra.mxu0 %v1001
      %1308 = vmatprep.subr.bf16.mxu0 %v1000
      %1309 = vmatpush1.bf16.msra.mxu0 %v999
      %1310 = vmatprep.subr.bf16.mxu0 %v998
      %1311 = vmatpush1.bf16.msra.mxu0 %v997
      %1312 = vmatprep.subr.bf16.mxu0 %v996
      %1313 = vmatpush1.bf16.msra.mxu0 %v995
      %1314 = vmatprep.subr.bf16.mxu0 %v994
      %1315 = vmatpush1.bf16.msra.mxu0 %v993
      %1316 = vmatprep.subr.bf16.mxu0 %v992
      %1317 = vmatpush1.bf16.msra.mxu0 %v991
      %1318 = vmatprep.subr.bf16.mxu0 %v990
      %1319 = vmatpush1.bf16.msra.mxu0 %v989
      %1320 = vmatprep.subr.bf16.mxu0 %v1020
      %1321 = vmatpush2.bf16.msra.mxu0 %v1019
      %1322 = vmatprep.subr.bf16.mxu0 %v1018
      %1323 = vmatpush2.bf16.msra.mxu0 %v1017
      %1324 = vmatprep.subr.bf16.mxu0 %v1016
      %1325 = vmatpush2.bf16.msra.mxu0 %v1015
      %1326 = vmatprep.subr.bf16.mxu0 %v1014
      %1327 = vmatpush2.bf16.msra.mxu0 %v1013
      %1328 = vmatprep.subr.bf16.mxu0 %v1012
      %1329 = vmatpush2.bf16.msra.mxu0 %v1011
      %1330 = vmatprep.subr.bf16.mxu0 %v1010
      %1331 = vmatpush2.bf16.msra.mxu0 %v1009
      %1332 = vmatprep.subr.bf16.mxu0 %v1008
      %1333 = vmatpush2.bf16.msra.mxu0 %v1007
      %1334 = vmatprep.subr.bf16.mxu0 %v1006
      %1335 = vmatpush2.bf16.msra.mxu0 %v1005
      %1336 = vmatprep.mubr.bf16.mxu0 %v450
      %1337 = vmatmul.mubr.bf16.gmra.mxu0 %v449
      %v1338 = vpop.f32.mrf.mxu0
      %v1339 = vadd.f32 %v1298, %v1338
      %v1340 = vpop.f32.mrf.mxu0
      %v1341 = vadd.f32 %v1300, %v1340
      %v1342 = vpop.f32.mrf.mxu0
      %v1343 = vpop.f32.mrf.mxu0
      %1344 = vdwg.mxu0
      %1345 = vmatprep.subr.bf16.mxu0 %v1036
      %1346 = vmatpush1.bf16.msra.mxu0 %v1035
      %1347 = vmatprep.subr.bf16.mxu0 %v1034
      %1348 = vmatpush1.bf16.msra.mxu0 %v1033
      %1349 = vmatprep.subr.bf16.mxu0 %v1032
      %1350 = vmatpush1.bf16.msra.mxu0 %v1031
      %1351 = vmatprep.subr.bf16.mxu0 %v1030
      %1352 = vmatpush1.bf16.msra.mxu0 %v1029
      %1353 = vmatprep.subr.bf16.mxu0 %v1028
      %1354 = vmatpush1.bf16.msra.mxu0 %v1027
      %1355 = vmatprep.subr.bf16.mxu0 %v1026
      %1356 = vmatpush1.bf16.msra.mxu0 %v1025
      %1357 = vmatprep.subr.bf16.mxu0 %v1024
      %1358 = vmatpush1.bf16.msra.mxu0 %v1023
      %1359 = vmatprep.subr.bf16.mxu0 %v1022
      %1360 = vmatpush1.bf16.msra.mxu0 %v1021
      %1361 = vmatprep.subr.bf16.mxu0 0
      %1362 = vmatpush2.bf16.msra.mxu0 0
      %1363 = vmatprep.subr.bf16.mxu0 0
      %1364 = vmatpush2.bf16.msra.mxu0 0
      %1365 = vmatprep.subr.bf16.mxu0 0
      %1366 = vmatpush2.bf16.msra.mxu0 0
      %1367 = vmatprep.subr.bf16.mxu0 0
      %1368 = vmatpush2.bf16.msra.mxu0 0
      %1369 = vmatprep.subr.bf16.mxu0 0
      %1370 = vmatpush2.bf16.msra.mxu0 0
      %1371 = vmatprep.subr.bf16.mxu0 0
      %1372 = vmatpush2.bf16.msra.mxu0 0
      %1373 = vmatprep.subr.bf16.mxu0 0
      %1374 = vmatpush2.bf16.msra.mxu0 0
      %1375 = vmatprep.subr.bf16.mxu0 0
      %1376 = vmatpush2.bf16.msra.mxu0 0
      %1377 = vmatprep.mubr.bf16.mxu0 0
      %1378 = vmatmul.mubr.bf16.gmra.mxu0 %v451
      %v1379 = vpop.f32.mrf.mxu0
      %v1380 = vadd.f32 %v1339, %v1379
      %v1381 = vpop.f32.mrf.mxu0
      %v1382 = vadd.f32 %v1341, %v1381
      %v1383 = vpop.f32.mrf.mxu0
      %v1384 = vpop.f32.mrf.mxu0
      %1385 = vdwg.mxu0
      %v1386 = vadd.f32 %v278, %v1380
      %v1387 = vadd.f32 %v279, %v1382
      %1388 = vst [vmem:[#allocation2] sm:$0xff] %v1386
      %1389 = vst [vmem:[#allocation2 + $0x8] sm:$0xff] %v1387
      %p1390 = scmp.eq.s32.totalorder %s20, 1
      // Predicated region
      $region41: #{_lambda_.19} parent=35 // pred_check
        %p1391 = pneg %p1390
      $region42: #{_lambda_.19} parent=35 // pred_check_branch
        %1393 = sbr.rel (%p1391) target = $region44
      $region43: #{_lambda_.19} parent=35 // pred_region
        %v1394 = vld [vmem:[#allocation2] sm:$0xff]
        %v1395 = vld [vmem:[#allocation2 + $0x8] sm:$0xff]
        %v1396 = vld [vmem:[%s2] sm:$0x3]
        %v1398 = vlaneseq
        %v1399 = vshrl.u32 %v1398, 7
        %v1400 = vsub.s32 0, %v1399
        %v1401 = vrot.slane %v1396, %v1400
        %v1402 = vlaneseq
        %v1403 = vshrl.u32 %v1402, 7
        %v1404 = vsub.s32 1, %v1403
        %v1405 = vrot.slane %v1396, %v1404
        %v1408 = vadd.f32 %v1394, %v1401
        %v1409 = vadd.f32 %v1395, %v1405
        %v1410 = vld [vmem:[%s265] sm:$0xff]
        %v1411 = vunpack.c.l.bf16 %v1410
        %v1412 = vunpack.c.h.bf16 %v1410
        %v1413 = vadd.f32 %v1408, %v1411
        %v1414 = vadd.f32 %v1409, %v1412
        %v1415 = vmax.f32 %v1413, 0.0
        %v1416 = vmax.f32 %v1414, 0.0
        %v1417 = vpack.c.bf16 %v1415, %v1415
        %v1418 = vpack.c.bf16 %v1416, %v1416
        %v1421 = vunpack.c.l.b16 %v1417
        %v1422 = vunpack.c.l.b16 %v1418
        %v1423 = vpack.c.b16 %v1422, %v1421
        %1425 = vst [vmem:[%s270] sm:$0xff] %v1423
      $region44: #{_lambda_.19} parent=35 // pred_fallthru
        _
      %p1426 = scmp.lt.s32.totalorder %s19, 0
      %s1427 = scalar_select %p1426, %s19, 0
      %s1428 = smul.addr %s1427, 2
      %s1429 = smul.addr %s1428, 4
      %s1430 = scalar_lea.vmem %s4, %s1429
      // Predicated region
      $region45: #{_lambda_.19} parent=35 // pred_check
        %p1431 = pneg %p146
      $region46: #{_lambda_.19} parent=35 // pred_check_branch
        %1433 = sbr.rel (%p1431) target = $region48
      $region47: #{_lambda_.19} parent=35 // pred_region
        _
      $region48: #{_lambda_.19} parent=35 // pred_fallthru
        _
      // Predicated region
      $region49: #{_lambda_.19} parent=35 // pred_check
        %p1434 = pneg %p146
      $region50: #{_lambda_.19} parent=35 // pred_check_branch
        %1436 = sbr.rel (%p1434) target = $region52
      $region51: #{_lambda_.19} parent=35 // pred_region
        %p1437 = scmp.lt.s32.totalorder %s19, 0
        %s1438 = scalar_select %p1437, %s19, 0
        %s1439 = smul.addr %s1438, 2
        %s1440 = smul.addr %s1439, 4
        %s1441 = scalar_lea.vmem %s4, %s1440
      $region52: #{_lambda_.19} parent=35 // pred_fallthru
        _
    $region36: #{_lambda_.19} parent=5 // pred_fallthru
      _
    %p1442 = scmp.le.s32.totalorder 2, %s10
    // Predicated region
    $region53: #{_lambda_.19} parent=5 // pred_check
      %p1443 = pneg %p1442
    $region54: #{_lambda_.19} parent=5 // pred_check_branch
      %1445 = sbr.rel (%p1443) target = $region56
    $region55: #{_lambda_.19} parent=5 // pred_region
      %s1446 = ssub.s32 %s10, 2
    $region56: #{_lambda_.19} parent=5 // pred_fallthru
      _
  $region6: #{_lambda_.19} parent=0 // loop_footer
    %s14 = sadd.s32 1, %s10
  $region7: #{_lambda_.19} parent=0 // loop_footer_branch
    %9 = sbr.rel target = $region3
  $region8: #{_lambda_.19} parent=0 // loop_exit
    _

</llo_original>
